<compile_context>
chip_gen: v6e
topology: v6e:2x2x1
jax: 0.10.0
libtpu: 0.0.40
codegen_flags: <defaults>
</compile_context>

<pallas_src>
import functools

import jax
import jax.numpy as jnp
from jax.experimental import pallas as pl
from jax.experimental.pallas import tpu as pltpu

F32 = jnp.float32
CDT = jnp.bfloat16          # MXU operand dtype (accumulation is always f32)
BN_EPS = 1e-5


def _mm(lhs, rhs):
    """MXU matmul: bf16 operands, f32 accumulation."""
    return jnp.dot(lhs.astype(CDT), rhs.astype(CDT),
                   preferred_element_type=jnp.float32)


# ----------------------------------------------------------------------------
# Single fused Pallas kernel (whole problem resident in VMEM; no grid needed)
# ----------------------------------------------------------------------------
def fused_gcn_gin_kernel(
    ah_ref, p_ref, x_ref, dinv_ref, rgcn_ref, deg_ref,
    w1m_ref, bc1_ref, bg11_ref,
    wg12_ref, bg12_ref,
    wc2_ref, cc2_ref, bc2_ref,
    wg21_ref, cg2_ref, bg21_ref,
    wg22_ref, bg22_ref,
    wc3_ref, cc3_ref, bc3_ref,
    wg31_ref, cg3_ref, bg31_ref,
    wg32_ref, bg32_ref,
    wf1_ref, f1s_ref,
    wf2_ref, bf2_ref,
    wf3_ref, bf3_ref,
    o_ref,
):
    a_hat = ah_ref[...]                      # bf16 [Np, Np]  A + I (exact small ints)
    dinv = dinv_ref[...]                     # f32  [Np, 1]   deg_hat^-1/2
    rgcn = rgcn_ref[...]                     # f32  [Np, 1]   dinv * (A_hat @ dinv)
    deg = deg_ref[...]                       # f32  [Np, 1]   A_hat @ 1 (row sums)

    # ---- layer 1: merged projection, ONE shared 512-lane aggregation --------
    xw = _mm(x_ref[...], w1m_ref[...])                       # [Np,512] = X @ [Wc1|Wg1_1]
    y = jnp.concatenate([xw[:, :256] * dinv, xw[:, 256:]], axis=1).astype(CDT)
    agg = _mm(a_hat, y)                                      # [Np, 512]
    h = jnp.maximum(agg[:, :256] * dinv + bc1_ref[...], 0.0).astype(CDT)       # GCN
    u = jnp.maximum(agg[:, 256:] + bg11_ref[...], 0.0).astype(CDT)             # GIN hidden
    z = jnp.maximum(_mm(u, wg12_ref[...]) + bg12_ref[...], 0.0).astype(CDT)    # [Np, 256]
    # bn01 / bn21 are folded into wc2 / wg21 (scale) + rank-1 shift corrections.

    # ---- layer 2: shared 256-lane aggregation --------------------------------
    y = jnp.concatenate([_mm(h, wc2_ref[...]) * dinv, _mm(z, wg21_ref[...])],
                        axis=1).astype(CDT)                  # [Np, 256]
    agg = _mm(a_hat, y)
    h = jnp.maximum(agg[:, :128] * dinv + rgcn * cc2_ref[...] + bc2_ref[...],
                    0.0).astype(CDT)
    u = jnp.maximum(agg[:, 128:] + deg * cg2_ref[...] + bg21_ref[...],
                    0.0).astype(CDT)
    z = jnp.maximum(_mm(u, wg22_ref[...]) + bg22_ref[...], 0.0).astype(CDT)    # [Np, 128]

    # ---- layer 3: shared 256-lane aggregation (GIN half zero-padded 64->128) -
    y = jnp.concatenate([_mm(h, wc3_ref[...]) * dinv, _mm(z, wg31_ref[...])],
                        axis=1).astype(CDT)
    agg = _mm(a_hat, y)
    h = jnp.maximum(agg[:, :128] * dinv + rgcn * cc3_ref[...] + bc3_ref[...],
                    0.0).astype(CDT)                          # [Np, 128]
    u = jnp.maximum(agg[:, 128:] + deg * cg3_ref[...] + bg31_ref[...],
                    0.0).astype(CDT)
    z = jnp.maximum(_mm(u, wg32_ref[...]) + bg32_ref[...], 0.0).astype(CDT)    # [Np,128], lanes 64+ == 0

    # ---- pool ONCE over lane-aligned concat, then all-128-lane MLP head ------
    pooled = _mm(p_ref[...], jnp.concatenate([h, z], axis=1))          # [Gp, 256]
    y = jnp.maximum(_mm(pooled, wf1_ref[...]) + f1s_ref[...], 0.0)     # bn03/bn23 folded
    # Dropout(p=0.2) is identity in eval mode.
    y = jnp.maximum(_mm(y, wf2_ref[...]) + bf2_ref[...], 0.0)
    y = jnp.maximum(_mm(y, wf3_ref[...]) + bf3_ref[...], 0.0)          # [Gp, 128]
    o_ref[...] = y


# ----------------------------------------------------------------------------
# Parameter initialization (deterministic, matches the module's layer shapes)
# ----------------------------------------------------------------------------
def _glorot(key, shape):
    fan_in, fan_out = shape
    lim = (6.0 / (fan_in + fan_out)) ** 0.5
    return jax.random.uniform(key, shape, F32, -lim, lim)


def init_params(key):
    ks = iter(jax.random.split(key, 64))
    p = {}

    def lin(fin, fout):
        w = _glorot(next(ks), (fin, fout))            # stored as [in, out]
        bound = 1.0 / (fin ** 0.5)
        b = jax.random.uniform(next(ks), (fout,), F32, -bound, bound)
        return w, b

    p['conv1_w'], p['conv1_b'] = lin(373, 256)
    p['conv2_w'], p['conv2_b'] = lin(256, 128)
    p['conv3_w'], p['conv3_b'] = lin(128, 128)
    p['gin1_w1'], p['gin1_b1'] = lin(373, 256)
    p['gin1_w2'], p['gin1_b2'] = lin(256, 256)
    p['gin2_w1'], p['gin2_b1'] = lin(256, 128)
    p['gin2_w2'], p['gin2_b2'] = lin(128, 128)
    p['gin3_w1'], p['gin3_b1'] = lin(128, 64)
    p['gin3_w2'], p['gin3_b2'] = lin(64, 64)
    for name, f in [('bn01', 256), ('bn02', 128), ('bn03', 128),
                    ('bn21', 256), ('bn22', 128), ('bn23', 64)]:
        p[name + '_g'] = 1.0 + 0.1 * jax.random.normal(next(ks), (f,), F32)
        p[name + '_b'] = 0.1 * jax.random.normal(next(ks), (f,), F32)
        p[name + '_mean'] = jnp.zeros((f,), F32)   # running stats (fresh init)
        p[name + '_var'] = jnp.ones((f,), F32)
    p['fc1_w'], p['fc1_b'] = lin(128 + 64, 64)
    p['fc2_w'], p['fc2_b'] = lin(64, 64)
    p['fc3_w'], p['fc3_b'] = lin(64, 1)
    return p


# ----------------------------------------------------------------------------
# One-time weight preparation: BN folding, zero-padding, bf16 casts
# ----------------------------------------------------------------------------
def prepare_params(params):
    def bn(name):
        inv = jax.lax.rsqrt(params[name + '_var'] + BN_EPS)
        s = params[name + '_g'] * inv
        t = params[name + '_b'] - params[name + '_mean'] * s
        return s, t

    s01, t01 = bn('bn01'); s02, t02 = bn('bn02'); s03, t03 = bn('bn03')
    s21, t21 = bn('bn21'); s22, t22 = bn('bn22'); s23, t23 = bn('bn23')

    def rowpad(v, w):           # [F] -> lane-padded [1, w] f32 row
        return jnp.pad(v, (0, w - v.shape[0])).reshape(1, w).astype(F32)

    f_in = params['conv1_w'].shape[0]
    f_pad = (-f_in) % 128

    p = {}
    # merged layer-1 projection [384, 512] = [conv1_W | gin1_W1] (zero row pad).
    p['w1m'] = jnp.concatenate(
        [jnp.pad(params['conv1_w'], ((0, f_pad), (0, 0))),
         jnp.pad(params['gin1_w1'], ((0, f_pad), (0, 0)))], axis=1).astype(CDT)
    p['bc1'] = rowpad(params['conv1_b'], 256)
    p['bg11'] = rowpad(params['gin1_b1'], 256)
    p['wg12'] = params['gin1_w2'].astype(CDT)
    p['bg12'] = rowpad(params['gin1_b2'], 256)

    # layer 2: bn01/bn21 scale folded into weights, shift -> correction rows.
    p['wc2'] = (s01[:, None] * params['conv2_w']).astype(CDT)
    p['cc2'] = rowpad(t01 @ params['conv2_w'], 128)
    p['bc2'] = rowpad(params['conv2_b'], 128)
    p['wg21'] = (s21[:, None] * params['gin2_w1']).astype(CDT)
    p['cg2'] = rowpad(t21 @ params['gin2_w1'], 128)
    p['bg21'] = rowpad(params['gin2_b1'], 128)
    p['wg22'] = params['gin2_w2'].astype(CDT)
    p['bg22'] = rowpad(params['gin2_b2'], 128)

    # layer 3: bn02/bn22 folded; gin3 zero-padded to 128 output lanes.
    p['wc3'] = (s02[:, None] * params['conv3_w']).astype(CDT)
    p['cc3'] = rowpad(t02 @ params['conv3_w'], 128)
    p['bc3'] = rowpad(params['conv3_b'], 128)
    p['wg31'] = jnp.pad(s22[:, None] * params['gin3_w1'], ((0, 0), (0, 64))).astype(CDT)
    p['cg3'] = rowpad(t22 @ params['gin3_w1'], 128)
    p['bg31'] = rowpad(params['gin3_b1'], 128)
    p['wg32'] = jnp.pad(params['gin3_w2'], ((0, 64), (0, 64))).astype(CDT)
    p['bg32'] = rowpad(params['gin3_b2'], 128)

    # head: bn03/bn23 scale folded into fc1 rows; shift folded per-call via
    # node counts (fc1_shift).  fc1/fc2/fc3 padded to 128 output lanes.
    s_cat = jnp.concatenate([s03, s23])
    t_cat = jnp.concatenate([t03, t23])
    p['wf1'] = jnp.pad(s_cat[:, None] * params['fc1_w'], ((0, 64), (0, 64))).astype(CDT)
    p['cf1'] = jnp.pad(t_cat @ params['fc1_w'], (0, 64)).astype(F32)      # [128]
    p['bf1'] = jnp.pad(params['fc1_b'], (0, 64)).astype(F32)              # [128]
    p['wf2'] = jnp.pad(params['fc2_w'], ((0, 64), (0, 64))).astype(CDT)
    p['bf2'] = rowpad(params['fc2_b'], 128)
    p['wf3'] = jnp.pad(params['fc3_w'], ((0, 64), (0, 127))).astype(CDT)
    p['bf3'] = rowpad(params['fc3_b'], 128)
    return p


# ----------------------------------------------------------------------------
# Full forward pass (per-call glue: adjacency, pooling matrix, padding)
# ----------------------------------------------------------------------------
@functools.partial(jax.jit, static_argnums=(4,))
def gcn_gin_forward(prep, x, edge_index, batch, num_graphs):
    n, f_in = x.shape
    src, dst = edge_index[0], edge_index[1]

    # A[i, j] = #edges j -> i (duplicates counted, as in PyG message passing).
    a_hat = jnp.zeros((n, n), F32).at[dst, src].add(1.0) + jnp.eye(n, dtype=F32)
    # GCN symmetric norm with self-loops factored as dinv * (A_hat @ (dinv * .));
    # GIN (eps=0) aggregation is A_hat @ x -> both branches share ONE A matmul.
    deg = jnp.ones((n,), F32).at[dst].add(1.0)                     # rowsum(A_hat)
    dinv = jax.lax.rsqrt(deg)
    r_gcn = dinv * (dinv + jnp.zeros((n,), F32).at[dst].add(dinv[src]))  # dinv*(A_hat@dinv)

    # global_add_pool as one-hot pooling matrix [G, N]; counts = nodes/graph.
    pool = (batch[None, :] == jnp.arange(num_graphs)[:, None]).astype(F32)
    counts = pool.sum(axis=1)

    # Padding: features 373 -> 384 lanes, nodes -> multiple of 8 sublanes,
    # graphs -> multiple of 8 rows.  Zero pads keep results exact (padded nodes
    # have zero adjacency columns, zero dinv and zero pool weight).
    f_pad = (-f_in) % 128
    n_pad = (-n) % 8
    g_pad = (-num_graphs) % 8
    gp = num_graphs + g_pad

    xp = jnp.pad(x, ((0, n_pad), (0, f_pad))).astype(CDT)
    ah_p = jnp.pad(a_hat, ((0, n_pad), (0, n_pad))).astype(CDT)    # exact small ints in bf16
    pool_p = jnp.pad(pool, ((0, g_pad), (0, n_pad))).astype(CDT)
    dinv_p = jnp.pad(dinv, (0, n_pad)).reshape(-1, 1)
    rgcn_p = jnp.pad(r_gcn, (0, n_pad)).reshape(-1, 1)
    deg_p = jnp.pad(deg, (0, n_pad)).reshape(-1, 1)

    # bn03/bn23 shift folded through the pool:  counts * (t @ Wf1) + fc1 bias.
    f1s = jnp.pad(counts, (0, g_pad))[:, None] * prep['cf1'][None, :] + prep['bf1'][None, :]

    args = (
        ah_p, pool_p, xp, dinv_p, rgcn_p, deg_p,
        prep['w1m'], prep['bc1'], prep['bg11'],
        prep['wg12'], prep['bg12'],
        prep['wc2'], prep['cc2'], prep['bc2'],
        prep['wg21'], prep['cg2'], prep['bg21'],
        prep['wg22'], prep['bg22'],
        prep['wc3'], prep['cc3'], prep['bc3'],
        prep['wg31'], prep['cg3'], prep['bg31'],
        prep['wg32'], prep['bg32'],
        prep['wf1'], f1s,
        prep['wf2'], prep['bf2'],
        prep['wf3'], prep['bf3'],
    )

    vmem = pl.BlockSpec(memory_space=pltpu.MemorySpace.VMEM)
    out = pl.pallas_call(
        fused_gcn_gin_kernel,
        out_shape=jax.ShapeDtypeStruct((gp, 128), F32),
        in_specs=[vmem] * len(args),
        out_specs=vmem,
    )(*args)

    # Per-graph scalar lives in lane 0 of each (real) row;  == .view(-1)
    return out[:num_graphs, 0]


# ----------------------------------------------------------------------------
if __name__ == "__main__":
    key = jax.random.PRNGKey(0)
    k_param, k_x = jax.random.split(key)

    # Small but MXU-friendly problem: 4 graphs x 32 nodes = 128 node rows.
    NUM_GRAPHS = 4
    NODES_PER_GRAPH = 32
    N = NUM_GRAPHS * NODES_PER_GRAPH
    F_IN = 373

    # deterministic node features
    x = jax.random.normal(k_x, (N, F_IN), F32)

    # deterministic edges: a ring inside each graph (both directions)
    src_list, dst_list = [], []
    for g in range(NUM_GRAPHS):
        base = g * NODES_PER_GRAPH
        for i in range(NODES_PER_GRAPH):
            j = (i + 1) % NODES_PER_GRAPH
            src_list += [base + i, base + j]
            dst_list += [base + j, base + i]
    edge_index = jnp.array([src_list, dst_list], dtype=jnp.int32)
    batch = jnp.repeat(jnp.arange(NUM_GRAPHS, dtype=jnp.int32), NODES_PER_GRAPH)

    params = init_params(k_param)
    prep = prepare_params(params)   # one-time BN fold / pad / cast (outside the jit)

    out = gcn_gin_forward(prep, x, edge_index, batch, NUM_GRAPHS)
    jax.block_until_ready(out)
    assert out.shape == (NUM_GRAPHS,)
    print("KERNEL_OK")
</pallas_src>

<mosaic_0001>
module attributes {stable_mosaic.version = 11 : i64} {
  func.func private @main(%arg0: i32) attributes {dimension_semantics = [#tpu.dimension_semantics<core_parallel>], iteration_bounds = array<i64: 2>, tpu.core_type = #tpu.core_type<sc_scalar_subcore>, window_params = []} {
    return
  }
}

module attributes {stable_mosaic.version = 11 : i64} {
  func.func private @main(%arg0: i32) attributes {dimension_semantics = [#tpu.dimension_semantics<core_parallel>], iteration_bounds = array<i64: 2>, tpu.core_type = #tpu.core_type<sc_scalar_subcore>, window_params = []} {
    return
  }
}

module attributes {stable_mosaic.version = 11 : i64} {
  func.func @fused_gcn_gin_kernel(%arg0: memref<128x128xbf16, #tpu.memory_space<vmem>>, %arg1: memref<8x128xbf16, #tpu.memory_space<vmem>>, %arg2: memref<128x384xbf16, #tpu.memory_space<vmem>>, %arg3: memref<128x1xf32, #tpu.memory_space<vmem>>, %arg4: memref<128x1xf32, #tpu.memory_space<vmem>>, %arg5: memref<128x1xf32, #tpu.memory_space<vmem>>, %arg6: memref<384x512xbf16, #tpu.memory_space<vmem>>, %arg7: memref<1x256xf32, #tpu.memory_space<vmem>>, %arg8: memref<1x256xf32, #tpu.memory_space<vmem>>, %arg9: memref<256x256xbf16, #tpu.memory_space<vmem>>, %arg10: memref<1x256xf32, #tpu.memory_space<vmem>>, %arg11: memref<256x128xbf16, #tpu.memory_space<vmem>>, %arg12: memref<1x128xf32, #tpu.memory_space<vmem>>, %arg13: memref<1x128xf32, #tpu.memory_space<vmem>>, %arg14: memref<256x128xbf16, #tpu.memory_space<vmem>>, %arg15: memref<1x128xf32, #tpu.memory_space<vmem>>, %arg16: memref<1x128xf32, #tpu.memory_space<vmem>>, %arg17: memref<128x128xbf16, #tpu.memory_space<vmem>>, %arg18: memref<1x128xf32, #tpu.memory_space<vmem>>, %arg19: memref<128x128xbf16, #tpu.memory_space<vmem>>, %arg20: memref<1x128xf32, #tpu.memory_space<vmem>>, %arg21: memref<1x128xf32, #tpu.memory_space<vmem>>, %arg22: memref<128x128xbf16, #tpu.memory_space<vmem>>, %arg23: memref<1x128xf32, #tpu.memory_space<vmem>>, %arg24: memref<1x128xf32, #tpu.memory_space<vmem>>, %arg25: memref<128x128xbf16, #tpu.memory_space<vmem>>, %arg26: memref<1x128xf32, #tpu.memory_space<vmem>>, %arg27: memref<256x128xbf16, #tpu.memory_space<vmem>>, %arg28: memref<8x128xf32, #tpu.memory_space<vmem>>, %arg29: memref<128x128xbf16, #tpu.memory_space<vmem>>, %arg30: memref<1x128xf32, #tpu.memory_space<vmem>>, %arg31: memref<128x128xbf16, #tpu.memory_space<vmem>>, %arg32: memref<1x128xf32, #tpu.memory_space<vmem>>, %arg33: memref<8x128xf32, #tpu.memory_space<vmem>>) attributes {dimension_semantics = [], scalar_prefetch = 0 : i64, scratch_operands = 0 : i64, tpu.core_type = #tpu.core_type<tc>} {
    %c0 = arith.constant 0 : index
    %c0_0 = arith.constant 0 : index
    %0 = vector.load %arg0[%c0, %c0_0] : memref<128x128xbf16, #tpu.memory_space<vmem>>, vector<128x128xbf16>
    %c0_1 = arith.constant 0 : index
    %c0_2 = arith.constant 0 : index
    %1 = vector.load %arg3[%c0_1, %c0_2] : memref<128x1xf32, #tpu.memory_space<vmem>>, vector<128x1xf32>
    %c0_3 = arith.constant 0 : index
    %c0_4 = arith.constant 0 : index
    %2 = vector.load %arg4[%c0_3, %c0_4] : memref<128x1xf32, #tpu.memory_space<vmem>>, vector<128x1xf32>
    %c0_5 = arith.constant 0 : index
    %c0_6 = arith.constant 0 : index
    %3 = vector.load %arg5[%c0_5, %c0_6] : memref<128x1xf32, #tpu.memory_space<vmem>>, vector<128x1xf32>
    %c0_7 = arith.constant 0 : index
    %c0_8 = arith.constant 0 : index
    %4 = vector.load %arg2[%c0_7, %c0_8] : memref<128x384xbf16, #tpu.memory_space<vmem>>, vector<128x384xbf16>
    %c0_9 = arith.constant 0 : index
    %c0_10 = arith.constant 0 : index
    %5 = vector.load %arg6[%c0_9, %c0_10] : memref<384x512xbf16, #tpu.memory_space<vmem>>, vector<384x512xbf16>
    %cst = arith.constant dense<0.000000e+00> : vector<128x512xf32>
    %6 = tpu.matmul %4, %5, %cst {dimension_numbers = #tpu.dot_dimension_numbers<[1], [0], [0], [1], [0, 0, 1, 1], [], []>} : vector<128x384xbf16>, vector<384x512xbf16>, vector<128x512xf32> -> vector<128x512xf32>
    %7 = vector.extract_strided_slice %6 {offsets = [0, 0], sizes = [128, 256], strides = [1, 1]} : vector<128x512xf32> to vector<128x256xf32>
    %8 = vector.broadcast %1 : vector<128x1xf32> to vector<128x256xf32>
    %9 = arith.mulf %7, %8 : vector<128x256xf32>
    %10 = vector.extract_strided_slice %6 {offsets = [0, 256], sizes = [128, 256], strides = [1, 1]} : vector<128x512xf32> to vector<128x256xf32>
    %11 = tpu.concatenate %9, %10 in 1 : vector<128x256xf32>, vector<128x256xf32> -> vector<128x512xf32>
    %12 = arith.truncf %11 : vector<128x512xf32> to vector<128x512xbf16>
    %cst_11 = arith.constant dense<0.000000e+00> : vector<128x512xf32>
    %13 = tpu.matmul %0, %12, %cst_11 {dimension_numbers = #tpu.dot_dimension_numbers<[1], [0], [0], [1], [0, 0, 1, 1], [], []>} : vector<128x128xbf16>, vector<128x512xbf16>, vector<128x512xf32> -> vector<128x512xf32>
    %14 = vector.extract_strided_slice %13 {offsets = [0, 0], sizes = [128, 256], strides = [1, 1]} : vector<128x512xf32> to vector<128x256xf32>
    %15 = vector.broadcast %1 : vector<128x1xf32> to vector<128x256xf32>
    %16 = arith.mulf %14, %15 : vector<128x256xf32>
    %c0_12 = arith.constant 0 : index
    %c0_13 = arith.constant 0 : index
    %17 = vector.load %arg7[%c0_12, %c0_13] : memref<1x256xf32, #tpu.memory_space<vmem>>, vector<1x256xf32>
    %18 = vector.broadcast %17 : vector<1x256xf32> to vector<128x256xf32>
    %19 = arith.addf %16, %18 : vector<128x256xf32>
    %cst_14 = arith.constant 0.000000e+00 : f32
    %20 = vector.broadcast %cst_14 : f32 to vector<128x256xf32>
    %21 = arith.maximumf %19, %20 : vector<128x256xf32>
    %22 = arith.truncf %21 : vector<128x256xf32> to vector<128x256xbf16>
    %23 = vector.extract_strided_slice %13 {offsets = [0, 256], sizes = [128, 256], strides = [1, 1]} : vector<128x512xf32> to vector<128x256xf32>
    %c0_15 = arith.constant 0 : index
    %c0_16 = arith.constant 0 : index
    %24 = vector.load %arg8[%c0_15, %c0_16] : memref<1x256xf32, #tpu.memory_space<vmem>>, vector<1x256xf32>
    %25 = vector.broadcast %24 : vector<1x256xf32> to vector<128x256xf32>
    %26 = arith.addf %23, %25 : vector<128x256xf32>
    %cst_17 = arith.constant 0.000000e+00 : f32
    %27 = vector.broadcast %cst_17 : f32 to vector<128x256xf32>
    %28 = arith.maximumf %26, %27 : vector<128x256xf32>
    %29 = arith.truncf %28 : vector<128x256xf32> to vector<128x256xbf16>
    %c0_18 = arith.constant 0 : index
    %c0_19 = arith.constant 0 : index
    %30 = vector.load %arg9[%c0_18, %c0_19] : memref<256x256xbf16, #tpu.memory_space<vmem>>, vector<256x256xbf16>
    %cst_20 = arith.constant dense<0.000000e+00> : vector<128x256xf32>
    %31 = tpu.matmul %29, %30, %cst_20 {dimension_numbers = #tpu.dot_dimension_numbers<[1], [0], [0], [1], [0, 0, 1, 1], [], []>} : vector<128x256xbf16>, vector<256x256xbf16>, vector<128x256xf32> -> vector<128x256xf32>
    %c0_21 = arith.constant 0 : index
    %c0_22 = arith.constant 0 : index
    %32 = vector.load %arg10[%c0_21, %c0_22] : memref<1x256xf32, #tpu.memory_space<vmem>>, vector<1x256xf32>
    %33 = vector.broadcast %32 : vector<1x256xf32> to vector<128x256xf32>
    %34 = arith.addf %31, %33 : vector<128x256xf32>
    %cst_23 = arith.constant 0.000000e+00 : f32
    %35 = vector.broadcast %cst_23 : f32 to vector<128x256xf32>
    %36 = arith.maximumf %34, %35 : vector<128x256xf32>
    %37 = arith.truncf %36 : vector<128x256xf32> to vector<128x256xbf16>
    %c0_24 = arith.constant 0 : index
    %c0_25 = arith.constant 0 : index
    %38 = vector.load %arg11[%c0_24, %c0_25] : memref<256x128xbf16, #tpu.memory_space<vmem>>, vector<256x128xbf16>
    %cst_26 = arith.constant dense<0.000000e+00> : vector<128x128xf32>
    %39 = tpu.matmul %22, %38, %cst_26 {dimension_numbers = #tpu.dot_dimension_numbers<[1], [0], [0], [1], [0, 0, 1, 1], [], []>} : vector<128x256xbf16>, vector<256x128xbf16>, vector<128x128xf32> -> vector<128x128xf32>
    %40 = vector.broadcast %1 : vector<128x1xf32> to vector<128x128xf32>
    %41 = arith.mulf %39, %40 : vector<128x128xf32>
    %c0_27 = arith.constant 0 : index
    %c0_28 = arith.constant 0 : index
    %42 = vector.load %arg14[%c0_27, %c0_28] : memref<256x128xbf16, #tpu.memory_space<vmem>>, vector<256x128xbf16>
    %cst_29 = arith.constant dense<0.000000e+00> : vector<128x128xf32>
    %43 = tpu.matmul %37, %42, %cst_29 {dimension_numbers = #tpu.dot_dimension_numbers<[1], [0], [0], [1], [0, 0, 1, 1], [], []>} : vector<128x256xbf16>, vector<256x128xbf16>, vector<128x128xf32> -> vector<128x128xf32>
    %44 = tpu.concatenate %41, %43 in 1 : vector<128x128xf32>, vector<128x128xf32> -> vector<128x256xf32>
    %45 = arith.truncf %44 : vector<128x256xf32> to vector<128x256xbf16>
    %cst_30 = arith.constant dense<0.000000e+00> : vector<128x256xf32>
    %46 = tpu.matmul %0, %45, %cst_30 {dimension_numbers = #tpu.dot_dimension_numbers<[1], [0], [0], [1], [0, 0, 1, 1], [], []>} : vector<128x128xbf16>, vector<128x256xbf16>, vector<128x256xf32> -> vector<128x256xf32>
    %47 = vector.extract_strided_slice %46 {offsets = [0, 0], sizes = [128, 128], strides = [1, 1]} : vector<128x256xf32> to vector<128x128xf32>
    %48 = vector.broadcast %1 : vector<128x1xf32> to vector<128x128xf32>
    %49 = arith.mulf %47, %48 : vector<128x128xf32>
    %c0_31 = arith.constant 0 : index
    %c0_32 = arith.constant 0 : index
    %50 = vector.load %arg12[%c0_31, %c0_32] : memref<1x128xf32, #tpu.memory_space<vmem>>, vector<1x128xf32>
    %51 = vector.broadcast %2 : vector<128x1xf32> to vector<128x128xf32>
    %52 = vector.broadcast %50 : vector<1x128xf32> to vector<128x128xf32>
    %53 = arith.mulf %51, %52 : vector<128x128xf32>
    %54 = arith.addf %49, %53 : vector<128x128xf32>
    %c0_33 = arith.constant 0 : index
    %c0_34 = arith.constant 0 : index
    %55 = vector.load %arg13[%c0_33, %c0_34] : memref<1x128xf32, #tpu.memory_space<vmem>>, vector<1x128xf32>
    %56 = vector.broadcast %55 : vector<1x128xf32> to vector<128x128xf32>
    %57 = arith.addf %54, %56 : vector<128x128xf32>
    %cst_35 = arith.constant 0.000000e+00 : f32
    %58 = vector.broadcast %cst_35 : f32 to vector<128x128xf32>
    %59 = arith.maximumf %57, %58 : vector<128x128xf32>
    %60 = arith.truncf %59 : vector<128x128xf32> to vector<128x128xbf16>
    %61 = vector.extract_strided_slice %46 {offsets = [0, 128], sizes = [128, 128], strides = [1, 1]} : vector<128x256xf32> to vector<128x128xf32>
    %c0_36 = arith.constant 0 : index
    %c0_37 = arith.constant 0 : index
    %62 = vector.load %arg15[%c0_36, %c0_37] : memref<1x128xf32, #tpu.memory_space<vmem>>, vector<1x128xf32>
    %63 = vector.broadcast %3 : vector<128x1xf32> to vector<128x128xf32>
    %64 = vector.broadcast %62 : vector<1x128xf32> to vector<128x128xf32>
    %65 = arith.mulf %63, %64 : vector<128x128xf32>
    %66 = arith.addf %61, %65 : vector<128x128xf32>
    %c0_38 = arith.constant 0 : index
    %c0_39 = arith.constant 0 : index
    %67 = vector.load %arg16[%c0_38, %c0_39] : memref<1x128xf32, #tpu.memory_space<vmem>>, vector<1x128xf32>
    %68 = vector.broadcast %67 : vector<1x128xf32> to vector<128x128xf32>
    %69 = arith.addf %66, %68 : vector<128x128xf32>
    %cst_40 = arith.constant 0.000000e+00 : f32
    %70 = vector.broadcast %cst_40 : f32 to vector<128x128xf32>
    %71 = arith.maximumf %69, %70 : vector<128x128xf32>
    %72 = arith.truncf %71 : vector<128x128xf32> to vector<128x128xbf16>
    %c0_41 = arith.constant 0 : index
    %c0_42 = arith.constant 0 : index
    %73 = vector.load %arg17[%c0_41, %c0_42] : memref<128x128xbf16, #tpu.memory_space<vmem>>, vector<128x128xbf16>
    %cst_43 = arith.constant dense<0.000000e+00> : vector<128x128xf32>
    %74 = tpu.matmul %72, %73, %cst_43 {dimension_numbers = #tpu.dot_dimension_numbers<[1], [0], [0], [1], [0, 0, 1, 1], [], []>} : vector<128x128xbf16>, vector<128x128xbf16>, vector<128x128xf32> -> vector<128x128xf32>
    %c0_44 = arith.constant 0 : index
    %c0_45 = arith.constant 0 : index
    %75 = vector.load %arg18[%c0_44, %c0_45] : memref<1x128xf32, #tpu.memory_space<vmem>>, vector<1x128xf32>
    %76 = vector.broadcast %75 : vector<1x128xf32> to vector<128x128xf32>
    %77 = arith.addf %74, %76 : vector<128x128xf32>
    %cst_46 = arith.constant 0.000000e+00 : f32
    %78 = vector.broadcast %cst_46 : f32 to vector<128x128xf32>
    %79 = arith.maximumf %77, %78 : vector<128x128xf32>
    %80 = arith.truncf %79 : vector<128x128xf32> to vector<128x128xbf16>
    %c0_47 = arith.constant 0 : index
    %c0_48 = arith.constant 0 : index
    %81 = vector.load %arg19[%c0_47, %c0_48] : memref<128x128xbf16, #tpu.memory_space<vmem>>, vector<128x128xbf16>
    %cst_49 = arith.constant dense<0.000000e+00> : vector<128x128xf32>
    %82 = tpu.matmul %60, %81, %cst_49 {dimension_numbers = #tpu.dot_dimension_numbers<[1], [0], [0], [1], [0, 0, 1, 1], [], []>} : vector<128x128xbf16>, vector<128x128xbf16>, vector<128x128xf32> -> vector<128x128xf32>
    %83 = vector.broadcast %1 : vector<128x1xf32> to vector<128x128xf32>
    %84 = arith.mulf %82, %83 : vector<128x128xf32>
    %c0_50 = arith.constant 0 : index
    %c0_51 = arith.constant 0 : index
    %85 = vector.load %arg22[%c0_50, %c0_51] : memref<128x128xbf16, #tpu.memory_space<vmem>>, vector<128x128xbf16>
    %cst_52 = arith.constant dense<0.000000e+00> : vector<128x128xf32>
    %86 = tpu.matmul %80, %85, %cst_52 {dimension_numbers = #tpu.dot_dimension_numbers<[1], [0], [0], [1], [0, 0, 1, 1], [], []>} : vector<128x128xbf16>, vector<128x128xbf16>, vector<128x128xf32> -> vector<128x128xf32>
    %87 = tpu.concatenate %84, %86 in 1 : vector<128x128xf32>, vector<128x128xf32> -> vector<128x256xf32>
    %88 = arith.truncf %87 : vector<128x256xf32> to vector<128x256xbf16>
    %cst_53 = arith.constant dense<0.000000e+00> : vector<128x256xf32>
    %89 = tpu.matmul %0, %88, %cst_53 {dimension_numbers = #tpu.dot_dimension_numbers<[1], [0], [0], [1], [0, 0, 1, 1], [], []>} : vector<128x128xbf16>, vector<128x256xbf16>, vector<128x256xf32> -> vector<128x256xf32>
    %90 = vector.extract_strided_slice %89 {offsets = [0, 0], sizes = [128, 128], strides = [1, 1]} : vector<128x256xf32> to vector<128x128xf32>
    %91 = vector.broadcast %1 : vector<128x1xf32> to vector<128x128xf32>
    %92 = arith.mulf %90, %91 : vector<128x128xf32>
    %c0_54 = arith.constant 0 : index
    %c0_55 = arith.constant 0 : index
    %93 = vector.load %arg20[%c0_54, %c0_55] : memref<1x128xf32, #tpu.memory_space<vmem>>, vector<1x128xf32>
    %94 = vector.broadcast %2 : vector<128x1xf32> to vector<128x128xf32>
    %95 = vector.broadcast %93 : vector<1x128xf32> to vector<128x128xf32>
    %96 = arith.mulf %94, %95 : vector<128x128xf32>
    %97 = arith.addf %92, %96 : vector<128x128xf32>
    %c0_56 = arith.constant 0 : index
    %c0_57 = arith.constant 0 : index
    %98 = vector.load %arg21[%c0_56, %c0_57] : memref<1x128xf32, #tpu.memory_space<vmem>>, vector<1x128xf32>
    %99 = vector.broadcast %98 : vector<1x128xf32> to vector<128x128xf32>
    %100 = arith.addf %97, %99 : vector<128x128xf32>
    %cst_58 = arith.constant 0.000000e+00 : f32
    %101 = vector.broadcast %cst_58 : f32 to vector<128x128xf32>
    %102 = arith.maximumf %100, %101 : vector<128x128xf32>
    %103 = arith.truncf %102 : vector<128x128xf32> to vector<128x128xbf16>
    %104 = vector.extract_strided_slice %89 {offsets = [0, 128], sizes = [128, 128], strides = [1, 1]} : vector<128x256xf32> to vector<128x128xf32>
    %c0_59 = arith.constant 0 : index
    %c0_60 = arith.constant 0 : index
    %105 = vector.load %arg23[%c0_59, %c0_60] : memref<1x128xf32, #tpu.memory_space<vmem>>, vector<1x128xf32>
    %106 = vector.broadcast %3 : vector<128x1xf32> to vector<128x128xf32>
    %107 = vector.broadcast %105 : vector<1x128xf32> to vector<128x128xf32>
    %108 = arith.mulf %106, %107 : vector<128x128xf32>
    %109 = arith.addf %104, %108 : vector<128x128xf32>
    %c0_61 = arith.constant 0 : index
    %c0_62 = arith.constant 0 : index
    %110 = vector.load %arg24[%c0_61, %c0_62] : memref<1x128xf32, #tpu.memory_space<vmem>>, vector<1x128xf32>
    %111 = vector.broadcast %110 : vector<1x128xf32> to vector<128x128xf32>
    %112 = arith.addf %109, %111 : vector<128x128xf32>
    %cst_63 = arith.constant 0.000000e+00 : f32
    %113 = vector.broadcast %cst_63 : f32 to vector<128x128xf32>
    %114 = arith.maximumf %112, %113 : vector<128x128xf32>
    %115 = arith.truncf %114 : vector<128x128xf32> to vector<128x128xbf16>
    %c0_64 = arith.constant 0 : index
    %c0_65 = arith.constant 0 : index
    %116 = vector.load %arg25[%c0_64, %c0_65] : memref<128x128xbf16, #tpu.memory_space<vmem>>, vector<128x128xbf16>
    %cst_66 = arith.constant dense<0.000000e+00> : vector<128x128xf32>
    %117 = tpu.matmul %115, %116, %cst_66 {dimension_numbers = #tpu.dot_dimension_numbers<[1], [0], [0], [1], [0, 0, 1, 1], [], []>} : vector<128x128xbf16>, vector<128x128xbf16>, vector<128x128xf32> -> vector<128x128xf32>
    %c0_67 = arith.constant 0 : index
    %c0_68 = arith.constant 0 : index
    %118 = vector.load %arg26[%c0_67, %c0_68] : memref<1x128xf32, #tpu.memory_space<vmem>>, vector<1x128xf32>
    %119 = vector.broadcast %118 : vector<1x128xf32> to vector<128x128xf32>
    %120 = arith.addf %117, %119 : vector<128x128xf32>
    %cst_69 = arith.constant 0.000000e+00 : f32
    %121 = vector.broadcast %cst_69 : f32 to vector<128x128xf32>
    %122 = arith.maximumf %120, %121 : vector<128x128xf32>
    %123 = arith.truncf %122 : vector<128x128xf32> to vector<128x128xbf16>
    %c0_70 = arith.constant 0 : index
    %c0_71 = arith.constant 0 : index
    %124 = vector.load %arg1[%c0_70, %c0_71] : memref<8x128xbf16, #tpu.memory_space<vmem>>, vector<8x128xbf16>
    %125 = tpu.concatenate %103, %123 in 1 : vector<128x128xbf16>, vector<128x128xbf16> -> vector<128x256xbf16>
    %cst_72 = arith.constant dense<0.000000e+00> : vector<8x256xf32>
    %126 = tpu.matmul %124, %125, %cst_72 {dimension_numbers = #tpu.dot_dimension_numbers<[1], [0], [0], [1], [0, 0, 1, 1], [], []>} : vector<8x128xbf16>, vector<128x256xbf16>, vector<8x256xf32> -> vector<8x256xf32>
    %c0_73 = arith.constant 0 : index
    %c0_74 = arith.constant 0 : index
    %127 = vector.load %arg27[%c0_73, %c0_74] : memref<256x128xbf16, #tpu.memory_space<vmem>>, vector<256x128xbf16>
    %128 = arith.truncf %126 : vector<8x256xf32> to vector<8x256xbf16>
    %cst_75 = arith.constant dense<0.000000e+00> : vector<8x128xf32>
    %129 = tpu.matmul %128, %127, %cst_75 {dimension_numbers = #tpu.dot_dimension_numbers<[1], [0], [0], [1], [0, 0, 1, 1], [], []>} : vector<8x256xbf16>, vector<256x128xbf16>, vector<8x128xf32> -> vector<8x128xf32>
    %c0_76 = arith.constant 0 : index
    %c0_77 = arith.constant 0 : index
    %130 = vector.load %arg28[%c0_76, %c0_77] : memref<8x128xf32, #tpu.memory_space<vmem>>, vector<8x128xf32>
    %131 = arith.addf %129, %130 : vector<8x128xf32>
    %cst_78 = arith.constant 0.000000e+00 : f32
    %132 = vector.broadcast %cst_78 : f32 to vector<8x128xf32>
    %133 = arith.maximumf %131, %132 : vector<8x128xf32>
    %c0_79 = arith.constant 0 : index
    %c0_80 = arith.constant 0 : index
    %134 = vector.load %arg29[%c0_79, %c0_80] : memref<128x128xbf16, #tpu.memory_space<vmem>>, vector<128x128xbf16>
    %135 = arith.truncf %133 : vector<8x128xf32> to vector<8x128xbf16>
    %cst_81 = arith.constant dense<0.000000e+00> : vector<8x128xf32>
    %136 = tpu.matmul %135, %134, %cst_81 {dimension_numbers = #tpu.dot_dimension_numbers<[1], [0], [0], [1], [0, 0, 1, 1], [], []>} : vector<8x128xbf16>, vector<128x128xbf16>, vector<8x128xf32> -> vector<8x128xf32>
    %c0_82 = arith.constant 0 : index
    %c0_83 = arith.constant 0 : index
    %137 = vector.load %arg30[%c0_82, %c0_83] : memref<1x128xf32, #tpu.memory_space<vmem>>, vector<1x128xf32>
    %138 = vector.broadcast %137 : vector<1x128xf32> to vector<8x128xf32>
    %139 = arith.addf %136, %138 : vector<8x128xf32>
    %cst_84 = arith.constant 0.000000e+00 : f32
    %140 = vector.broadcast %cst_84 : f32 to vector<8x128xf32>
    %141 = arith.maximumf %139, %140 : vector<8x128xf32>
    %c0_85 = arith.constant 0 : index
    %c0_86 = arith.constant 0 : index
    %142 = vector.load %arg31[%c0_85, %c0_86] : memref<128x128xbf16, #tpu.memory_space<vmem>>, vector<128x128xbf16>
    %143 = arith.truncf %141 : vector<8x128xf32> to vector<8x128xbf16>
    %cst_87 = arith.constant dense<0.000000e+00> : vector<8x128xf32>
    %144 = tpu.matmul %143, %142, %cst_87 {dimension_numbers = #tpu.dot_dimension_numbers<[1], [0], [0], [1], [0, 0, 1, 1], [], []>} : vector<8x128xbf16>, vector<128x128xbf16>, vector<8x128xf32> -> vector<8x128xf32>
    %c0_88 = arith.constant 0 : index
    %c0_89 = arith.constant 0 : index
    %145 = vector.load %arg32[%c0_88, %c0_89] : memref<1x128xf32, #tpu.memory_space<vmem>>, vector<1x128xf32>
    %146 = vector.broadcast %145 : vector<1x128xf32> to vector<8x128xf32>
    %147 = arith.addf %144, %146 : vector<8x128xf32>
    %cst_90 = arith.constant 0.000000e+00 : f32
    %148 = vector.broadcast %cst_90 : f32 to vector<8x128xf32>
    %149 = arith.maximumf %147, %148 : vector<8x128xf32>
    %c0_91 = arith.constant 0 : index
    %c0_92 = arith.constant 0 : index
    %150 = vector.load %arg33[%c0_91, %c0_92] : memref<8x128xf32, #tpu.memory_space<vmem>>, vector<8x128xf32>
    tpu.vector_store %arg33[%c0_91, %c0_92], %149 {strides = array<i32>} : memref<8x128xf32, #tpu.memory_space<vmem>>, vector<8x128xf32>,
    return
  }
}

</mosaic_0001>

<llo_original>
// kernel: gcn_gin_forward.1
$region0: #{gcn_gin_forward.1}
  #allocation0 [shape = 'u32[]', space=smem, size = 0x4, offset = 0x4, fixed_abs, tag = 'smem constant byte address 0x4 - core index']
  #allocation1 [shape = 'u32[144,128]{1,0:T(1,128)}', space=vmem, size = 0x12000, scoped, tag = 'internal scratch']
  %s0 = inlined_call_operand.smem [shape: u32[34], index: -1, kind: input, shape index: {}]
  %s1 = sld [smem:[%s0]]
  %s2 = scalar_lea.smem %s0, 1
  %s3 = sld [smem:[%s2]]
  %s4 = scalar_lea.smem %s0, 2
  %s5 = sld [smem:[%s4]]
  %s6 = scalar_lea.smem %s0, 3
  %s7 = sld [smem:[%s6]]
  %s8 = scalar_lea.smem %s0, 4
  %s9 = sld [smem:[%s8]]
  %s10 = scalar_lea.smem %s0, 5
  %s11 = sld [smem:[%s10]]
  %s12 = scalar_lea.smem %s0, 6
  %s13 = sld [smem:[%s12]]
  %s14 = scalar_lea.smem %s0, 7
  %s15 = sld [smem:[%s14]]
  %s16 = scalar_lea.smem %s0, 8
  %s17 = sld [smem:[%s16]]
  %s18 = scalar_lea.smem %s0, 9
  %s19 = sld [smem:[%s18]]
  %s20 = scalar_lea.smem %s0, 10
  %s21 = sld [smem:[%s20]]
  %s22 = scalar_lea.smem %s0, 11
  %s23 = sld [smem:[%s22]]
  %s24 = scalar_lea.smem %s0, 12
  %s25 = sld [smem:[%s24]]
  %s26 = scalar_lea.smem %s0, 13
  %s27 = sld [smem:[%s26]]
  %s28 = scalar_lea.smem %s0, 14
  %s29 = sld [smem:[%s28]]
  %s30 = scalar_lea.smem %s0, 15
  %s31 = sld [smem:[%s30]]
  %s32 = scalar_lea.smem %s0, 16
  %s33 = sld [smem:[%s32]]
  %s34 = scalar_lea.smem %s0, 17
  %s35 = sld [smem:[%s34]]
  %s36 = scalar_lea.smem %s0, 18
  %s37 = sld [smem:[%s36]]
  %s38 = scalar_lea.smem %s0, 19
  %s39 = sld [smem:[%s38]]
  %s40 = scalar_lea.smem %s0, 20
  %s41 = sld [smem:[%s40]]
  %s42 = scalar_lea.smem %s0, 21
  %s43 = sld [smem:[%s42]]
  %s44 = scalar_lea.smem %s0, 22
  %s45 = sld [smem:[%s44]]
  %s46 = scalar_lea.smem %s0, 23
  %s47 = sld [smem:[%s46]]
  %s48 = scalar_lea.smem %s0, 24
  %s49 = sld [smem:[%s48]]
  %s50 = scalar_lea.smem %s0, 25
  %s51 = sld [smem:[%s50]]
  %s52 = scalar_lea.smem %s0, 26
  %s53 = sld [smem:[%s52]]
  %s54 = scalar_lea.smem %s0, 27
  %s55 = sld [smem:[%s54]]
  %s56 = scalar_lea.smem %s0, 28
  %s57 = sld [smem:[%s56]]
  %s58 = scalar_lea.smem %s0, 29
  %s59 = sld [smem:[%s58]]
  %s60 = scalar_lea.smem %s0, 30
  %s61 = sld [smem:[%s60]]
  %s62 = scalar_lea.smem %s0, 31
  %s63 = sld [smem:[%s62]]
  %s64 = scalar_lea.smem %s0, 32
  %s65 = sld [smem:[%s64]]
  %s66 = scalar_lea.smem %s0, 33
  %s67 = sld [smem:[%s66]]
  %s68 = sld [smem:[#allocation0]]
  $region142: #{gcn_gin_forward.1} parent=0
    _
  %s70 = ssub.s32 1, %s68
  %s71 = scalar_select 0, %s70, %s68
  // Predicated region
  $region2: #{gcn_gin_forward.1} parent=0 // pred_check
    _
  $region3: #{gcn_gin_forward.1} parent=0 // pred_check_branch
    %73 = sbr.rel (0) target = $region5
  $region4: #{gcn_gin_forward.1} parent=0 // pred_region
    _
  $region5: #{gcn_gin_forward.1} parent=0 // pred_fallthru
    _
  // Predicated region
  $region6: #{gcn_gin_forward.1} parent=0 // pred_check
    _
  $region7: #{gcn_gin_forward.1} parent=0 // pred_check_branch
    %75 = sbr.rel (0) target = $region9
  $region8: #{gcn_gin_forward.1} parent=0 // pred_region
    _
  $region9: #{gcn_gin_forward.1} parent=0 // pred_fallthru
    _
  // Predicated region
  $region10: #{gcn_gin_forward.1} parent=0 // pred_check
    _
  $region11: #{gcn_gin_forward.1} parent=0 // pred_check_branch
    %77 = sbr.rel (0) target = $region13
  $region12: #{gcn_gin_forward.1} parent=0 // pred_region
    _
  $region13: #{gcn_gin_forward.1} parent=0 // pred_fallthru
    _
  // Predicated region
  $region14: #{gcn_gin_forward.1} parent=0 // pred_check
    _
  $region15: #{gcn_gin_forward.1} parent=0 // pred_check_branch
    %79 = sbr.rel (0) target = $region17
  $region16: #{gcn_gin_forward.1} parent=0 // pred_region
    _
  $region17: #{gcn_gin_forward.1} parent=0 // pred_fallthru
    _
  // Predicated region
  $region18: #{gcn_gin_forward.1} parent=0 // pred_check
    _
  $region19: #{gcn_gin_forward.1} parent=0 // pred_check_branch
    %81 = sbr.rel (0) target = $region21
  $region20: #{gcn_gin_forward.1} parent=0 // pred_region
    _
  $region21: #{gcn_gin_forward.1} parent=0 // pred_fallthru
    _
  // Predicated region
  $region22: #{gcn_gin_forward.1} parent=0 // pred_check
    _
  $region23: #{gcn_gin_forward.1} parent=0 // pred_check_branch
    %83 = sbr.rel (0) target = $region25
  $region24: #{gcn_gin_forward.1} parent=0 // pred_region
    _
  $region25: #{gcn_gin_forward.1} parent=0 // pred_fallthru
    _
  // Predicated region
  $region26: #{gcn_gin_forward.1} parent=0 // pred_check
    _
  $region27: #{gcn_gin_forward.1} parent=0 // pred_check_branch
    %85 = sbr.rel (0) target = $region29
  $region28: #{gcn_gin_forward.1} parent=0 // pred_region
    _
  $region29: #{gcn_gin_forward.1} parent=0 // pred_fallthru
    _
  // Predicated region
  $region30: #{gcn_gin_forward.1} parent=0 // pred_check
    _
  $region31: #{gcn_gin_forward.1} parent=0 // pred_check_branch
    %87 = sbr.rel (0) target = $region33
  $region32: #{gcn_gin_forward.1} parent=0 // pred_region
    _
  $region33: #{gcn_gin_forward.1} parent=0 // pred_fallthru
    _
  // Predicated region
  $region34: #{gcn_gin_forward.1} parent=0 // pred_check
    _
  $region35: #{gcn_gin_forward.1} parent=0 // pred_check_branch
    %89 = sbr.rel (0) target = $region37
  $region36: #{gcn_gin_forward.1} parent=0 // pred_region
    _
  $region37: #{gcn_gin_forward.1} parent=0 // pred_fallthru
    _
  // Predicated region
  $region38: #{gcn_gin_forward.1} parent=0 // pred_check
    _
  $region39: #{gcn_gin_forward.1} parent=0 // pred_check_branch
    %91 = sbr.rel (0) target = $region41
  $region40: #{gcn_gin_forward.1} parent=0 // pred_region
    _
  $region41: #{gcn_gin_forward.1} parent=0 // pred_fallthru
    _
  // Predicated region
  $region42: #{gcn_gin_forward.1} parent=0 // pred_check
    _
  $region43: #{gcn_gin_forward.1} parent=0 // pred_check_branch
    %93 = sbr.rel (0) target = $region45
  $region44: #{gcn_gin_forward.1} parent=0 // pred_region
    _
  $region45: #{gcn_gin_forward.1} parent=0 // pred_fallthru
    _
  // Predicated region
  $region46: #{gcn_gin_forward.1} parent=0 // pred_check
    _
  $region47: #{gcn_gin_forward.1} parent=0 // pred_check_branch
    %95 = sbr.rel (0) target = $region49
  $region48: #{gcn_gin_forward.1} parent=0 // pred_region
    _
  $region49: #{gcn_gin_forward.1} parent=0 // pred_fallthru
    _
  // Predicated region
  $region50: #{gcn_gin_forward.1} parent=0 // pred_check
    _
  $region51: #{gcn_gin_forward.1} parent=0 // pred_check_branch
    %97 = sbr.rel (0) target = $region53
  $region52: #{gcn_gin_forward.1} parent=0 // pred_region
    _
  $region53: #{gcn_gin_forward.1} parent=0 // pred_fallthru
    _
  // Predicated region
  $region54: #{gcn_gin_forward.1} parent=0 // pred_check
    _
  $region55: #{gcn_gin_forward.1} parent=0 // pred_check_branch
    %99 = sbr.rel (0) target = $region57
  $region56: #{gcn_gin_forward.1} parent=0 // pred_region
    _
  $region57: #{gcn_gin_forward.1} parent=0 // pred_fallthru
    _
  // Predicated region
  $region58: #{gcn_gin_forward.1} parent=0 // pred_check
    _
  $region59: #{gcn_gin_forward.1} parent=0 // pred_check_branch
    %101 = sbr.rel (0) target = $region61
  $region60: #{gcn_gin_forward.1} parent=0 // pred_region
    _
  $region61: #{gcn_gin_forward.1} parent=0 // pred_fallthru
    _
  // Predicated region
  $region62: #{gcn_gin_forward.1} parent=0 // pred_check
    _
  $region63: #{gcn_gin_forward.1} parent=0 // pred_check_branch
    %103 = sbr.rel (0) target = $region65
  $region64: #{gcn_gin_forward.1} parent=0 // pred_region
    _
  $region65: #{gcn_gin_forward.1} parent=0 // pred_fallthru
    _
  // Predicated region
  $region66: #{gcn_gin_forward.1} parent=0 // pred_check
    _
  $region67: #{gcn_gin_forward.1} parent=0 // pred_check_branch
    %105 = sbr.rel (0) target = $region69
  $region68: #{gcn_gin_forward.1} parent=0 // pred_region
    _
  $region69: #{gcn_gin_forward.1} parent=0 // pred_fallthru
    _
  // Predicated region
  $region70: #{gcn_gin_forward.1} parent=0 // pred_check
    _
  $region71: #{gcn_gin_forward.1} parent=0 // pred_check_branch
    %107 = sbr.rel (0) target = $region73
  $region72: #{gcn_gin_forward.1} parent=0 // pred_region
    _
  $region73: #{gcn_gin_forward.1} parent=0 // pred_fallthru
    _
  // Predicated region
  $region74: #{gcn_gin_forward.1} parent=0 // pred_check
    _
  $region75: #{gcn_gin_forward.1} parent=0 // pred_check_branch
    %109 = sbr.rel (0) target = $region77
  $region76: #{gcn_gin_forward.1} parent=0 // pred_region
    _
  $region77: #{gcn_gin_forward.1} parent=0 // pred_fallthru
    _
  // Predicated region
  $region78: #{gcn_gin_forward.1} parent=0 // pred_check
    _
  $region79: #{gcn_gin_forward.1} parent=0 // pred_check_branch
    %111 = sbr.rel (0) target = $region81
  $region80: #{gcn_gin_forward.1} parent=0 // pred_region
    _
  $region81: #{gcn_gin_forward.1} parent=0 // pred_fallthru
    _
  // Predicated region
  $region82: #{gcn_gin_forward.1} parent=0 // pred_check
    _
  $region83: #{gcn_gin_forward.1} parent=0 // pred_check_branch
    %113 = sbr.rel (0) target = $region85
  $region84: #{gcn_gin_forward.1} parent=0 // pred_region
    _
  $region85: #{gcn_gin_forward.1} parent=0 // pred_fallthru
    _
  // Predicated region
  $region86: #{gcn_gin_forward.1} parent=0 // pred_check
    _
  $region87: #{gcn_gin_forward.1} parent=0 // pred_check_branch
    %115 = sbr.rel (0) target = $region89
  $region88: #{gcn_gin_forward.1} parent=0 // pred_region
    _
  $region89: #{gcn_gin_forward.1} parent=0 // pred_fallthru
    _
  // Predicated region
  $region90: #{gcn_gin_forward.1} parent=0 // pred_check
    _
  $region91: #{gcn_gin_forward.1} parent=0 // pred_check_branch
    %117 = sbr.rel (0) target = $region93
  $region92: #{gcn_gin_forward.1} parent=0 // pred_region
    _
  $region93: #{gcn_gin_forward.1} parent=0 // pred_fallthru
    _
  // Predicated region
  $region94: #{gcn_gin_forward.1} parent=0 // pred_check
    _
  $region95: #{gcn_gin_forward.1} parent=0 // pred_check_branch
    %119 = sbr.rel (0) target = $region97
  $region96: #{gcn_gin_forward.1} parent=0 // pred_region
    _
  $region97: #{gcn_gin_forward.1} parent=0 // pred_fallthru
    _
  // Predicated region
  $region98: #{gcn_gin_forward.1} parent=0 // pred_check
    _
  $region99: #{gcn_gin_forward.1} parent=0 // pred_check_branch
    %121 = sbr.rel (0) target = $region101
  $region100: #{gcn_gin_forward.1} parent=0 // pred_region
    _
  $region101: #{gcn_gin_forward.1} parent=0 // pred_fallthru
    _
  // Predicated region
  $region102: #{gcn_gin_forward.1} parent=0 // pred_check
    _
  $region103: #{gcn_gin_forward.1} parent=0 // pred_check_branch
    %123 = sbr.rel (0) target = $region105
  $region104: #{gcn_gin_forward.1} parent=0 // pred_region
    _
  $region105: #{gcn_gin_forward.1} parent=0 // pred_fallthru
    _
  // Predicated region
  $region106: #{gcn_gin_forward.1} parent=0 // pred_check
    _
  $region107: #{gcn_gin_forward.1} parent=0 // pred_check_branch
    %125 = sbr.rel (0) target = $region109
  $region108: #{gcn_gin_forward.1} parent=0 // pred_region
    _
  $region109: #{gcn_gin_forward.1} parent=0 // pred_fallthru
    _
  // Predicated region
  $region110: #{gcn_gin_forward.1} parent=0 // pred_check
    _
  $region111: #{gcn_gin_forward.1} parent=0 // pred_check_branch
    %127 = sbr.rel (0) target = $region113
  $region112: #{gcn_gin_forward.1} parent=0 // pred_region
    _
  $region113: #{gcn_gin_forward.1} parent=0 // pred_fallthru
    _
  // Predicated region
  $region114: #{gcn_gin_forward.1} parent=0 // pred_check
    _
  $region115: #{gcn_gin_forward.1} parent=0 // pred_check_branch
    %129 = sbr.rel (0) target = $region117
  $region116: #{gcn_gin_forward.1} parent=0 // pred_region
    _
  $region117: #{gcn_gin_forward.1} parent=0 // pred_fallthru
    _
  // Predicated region
  $region118: #{gcn_gin_forward.1} parent=0 // pred_check
    _
  $region119: #{gcn_gin_forward.1} parent=0 // pred_check_branch
    %131 = sbr.rel (0) target = $region121
  $region120: #{gcn_gin_forward.1} parent=0 // pred_region
    _
  $region121: #{gcn_gin_forward.1} parent=0 // pred_fallthru
    _
  // Predicated region
  $region122: #{gcn_gin_forward.1} parent=0 // pred_check
    _
  $region123: #{gcn_gin_forward.1} parent=0 // pred_check_branch
    %133 = sbr.rel (0) target = $region125
  $region124: #{gcn_gin_forward.1} parent=0 // pred_region
    _
  $region125: #{gcn_gin_forward.1} parent=0 // pred_fallthru
    _
  // Predicated region
  $region126: #{gcn_gin_forward.1} parent=0 // pred_check
    _
  $region127: #{gcn_gin_forward.1} parent=0 // pred_check_branch
    %135 = sbr.rel (0) target = $region129
  $region128: #{gcn_gin_forward.1} parent=0 // pred_region
    _
  $region129: #{gcn_gin_forward.1} parent=0 // pred_fallthru
    _
  // Predicated region
  $region130: #{gcn_gin_forward.1} parent=0 // pred_check
    _
  $region131: #{gcn_gin_forward.1} parent=0 // pred_check_branch
    %137 = sbr.rel (0) target = $region133
  $region132: #{gcn_gin_forward.1} parent=0 // pred_region
    _
  $region133: #{gcn_gin_forward.1} parent=0 // pred_fallthru
    _
  %v139 = vld [vmem:[%s1] sm:$0xf]
  %v140 = vld [vmem:[%s1 + $0x4] sm:$0xf]
  %v141 = vld [vmem:[%s1 + $0x8] sm:$0xf]
  %v142 = vld [vmem:[%s1 + $0xc] sm:$0xf]
  %v143 = vld [vmem:[%s1 + $0x10] sm:$0xf]
  %v144 = vld [vmem:[%s1 + $0x14] sm:$0xf]
  %v145 = vld [vmem:[%s1 + $0x18] sm:$0xf]
  %v146 = vld [vmem:[%s1 + $0x1c] sm:$0xf]
  %v147 = vld [vmem:[%s1 + $0x20] sm:$0xf]
  %v148 = vld [vmem:[%s1 + $0x24] sm:$0xf]
  %v149 = vld [vmem:[%s1 + $0x28] sm:$0xf]
  %v150 = vld [vmem:[%s1 + $0x2c] sm:$0xf]
  %v151 = vld [vmem:[%s1 + $0x30] sm:$0xf]
  %v152 = vld [vmem:[%s1 + $0x34] sm:$0xf]
  %v153 = vld [vmem:[%s1 + $0x38] sm:$0xf]
  %v154 = vld [vmem:[%s1 + $0x3c] sm:$0xf]
  %v155 = vld [vmem:[%s7] sm:$0xff]
  %v156 = vld [vmem:[%s7 + $0x8] sm:$0xff]
  %v157 = vld [vmem:[%s7 + $0x10] sm:$0xff]
  %v158 = vld [vmem:[%s7 + $0x18] sm:$0xff]
  %v159 = vld [vmem:[%s7 + $0x20] sm:$0xff]
  %v160 = vld [vmem:[%s7 + $0x28] sm:$0xff]
  %v161 = vld [vmem:[%s7 + $0x30] sm:$0xff]
  %v162 = vld [vmem:[%s7 + $0x38] sm:$0xff]
  %v163 = vld [vmem:[%s7 + $0x40] sm:$0xff]
  %v164 = vld [vmem:[%s7 + $0x48] sm:$0xff]
  %v165 = vld [vmem:[%s7 + $0x50] sm:$0xff]
  %v166 = vld [vmem:[%s7 + $0x58] sm:$0xff]
  %v167 = vld [vmem:[%s7 + $0x60] sm:$0xff]
  %v168 = vld [vmem:[%s7 + $0x68] sm:$0xff]
  %v169 = vld [vmem:[%s7 + $0x70] sm:$0xff]
  %v170 = vld [vmem:[%s7 + $0x78] sm:$0xff]
  %v171 = vld [vmem:[%s9] sm:$0xff]
  %v172 = vld [vmem:[%s9 + $0x8] sm:$0xff]
  %v173 = vld [vmem:[%s9 + $0x10] sm:$0xff]
  %v174 = vld [vmem:[%s9 + $0x18] sm:$0xff]
  %v175 = vld [vmem:[%s9 + $0x20] sm:$0xff]
  %v176 = vld [vmem:[%s9 + $0x28] sm:$0xff]
  %v177 = vld [vmem:[%s9 + $0x30] sm:$0xff]
  %v178 = vld [vmem:[%s9 + $0x38] sm:$0xff]
  %v179 = vld [vmem:[%s9 + $0x40] sm:$0xff]
  %v180 = vld [vmem:[%s9 + $0x48] sm:$0xff]
  %v181 = vld [vmem:[%s9 + $0x50] sm:$0xff]
  %v182 = vld [vmem:[%s9 + $0x58] sm:$0xff]
  %v183 = vld [vmem:[%s9 + $0x60] sm:$0xff]
  %v184 = vld [vmem:[%s9 + $0x68] sm:$0xff]
  %v185 = vld [vmem:[%s9 + $0x70] sm:$0xff]
  %v186 = vld [vmem:[%s9 + $0x78] sm:$0xff]
  %v187 = vld [vmem:[%s11] sm:$0xff]
  %v188 = vld [vmem:[%s11 + $0x8] sm:$0xff]
  %v189 = vld [vmem:[%s11 + $0x10] sm:$0xff]
  %v190 = vld [vmem:[%s11 + $0x18] sm:$0xff]
  %v191 = vld [vmem:[%s11 + $0x20] sm:$0xff]
  %v192 = vld [vmem:[%s11 + $0x28] sm:$0xff]
  %v193 = vld [vmem:[%s11 + $0x30] sm:$0xff]
  %v194 = vld [vmem:[%s11 + $0x38] sm:$0xff]
  %v195 = vld [vmem:[%s11 + $0x40] sm:$0xff]
  %v196 = vld [vmem:[%s11 + $0x48] sm:$0xff]
  %v197 = vld [vmem:[%s11 + $0x50] sm:$0xff]
  %v198 = vld [vmem:[%s11 + $0x58] sm:$0xff]
  %v199 = vld [vmem:[%s11 + $0x60] sm:$0xff]
  %v200 = vld [vmem:[%s11 + $0x68] sm:$0xff]
  %v201 = vld [vmem:[%s11 + $0x70] sm:$0xff]
  %v202 = vld [vmem:[%s11 + $0x78] sm:$0xff]
  %v203 = vld [vmem:[%s5] sm:$0xff]
  %v204 = vld [vmem:[%s5 + $0x8] sm:$0xf]
  %v205 = vld [vmem:[%s5 + $0xc] sm:$0xff]
  %v206 = vld [vmem:[%s5 + $0x14] sm:$0xf]
  %v207 = vld [vmem:[%s5 + $0x18] sm:$0xff]
  %v208 = vld [vmem:[%s5 + $0x20] sm:$0xf]
  %v209 = vld [vmem:[%s5 + $0x24] sm:$0xff]
  %v210 = vld [vmem:[%s5 + $0x2c] sm:$0xf]
  %v211 = vld [vmem:[%s5 + $0x30] sm:$0xff]
  %v212 = vld [vmem:[%s5 + $0x38] sm:$0xf]
  %v213 = vld [vmem:[%s5 + $0x3c] sm:$0xff]
  %v214 = vld [vmem:[%s5 + $0x44] sm:$0xf]
  %v215 = vld [vmem:[%s5 + $0x48] sm:$0xff]
  %v216 = vld [vmem:[%s5 + $0x50] sm:$0xf]
  %v217 = vld [vmem:[%s5 + $0x54] sm:$0xff]
  %v218 = vld [vmem:[%s5 + $0x5c] sm:$0xf]
  %v219 = vld [vmem:[%s5 + $0x60] sm:$0xff]
  %v220 = vld [vmem:[%s5 + $0x68] sm:$0xf]
  %v221 = vld [vmem:[%s5 + $0x6c] sm:$0xff]
  %v222 = vld [vmem:[%s5 + $0x74] sm:$0xf]
  %v223 = vld [vmem:[%s5 + $0x78] sm:$0xff]
  %v224 = vld [vmem:[%s5 + $0x80] sm:$0xf]
  %v225 = vld [vmem:[%s5 + $0x84] sm:$0xff]
  %v226 = vld [vmem:[%s5 + $0x8c] sm:$0xf]
  %v227 = vld [vmem:[%s5 + $0x90] sm:$0xff]
  %v228 = vld [vmem:[%s5 + $0x98] sm:$0xf]
  %v229 = vld [vmem:[%s5 + $0x9c] sm:$0xff]
  %v230 = vld [vmem:[%s5 + $0xa4] sm:$0xf]
  %v231 = vld [vmem:[%s5 + $0xa8] sm:$0xff]
  %v232 = vld [vmem:[%s5 + $0xb0] sm:$0xf]
  %v233 = vld [vmem:[%s5 + $0xb4] sm:$0xff]
  %v234 = vld [vmem:[%s5 + $0xbc] sm:$0xf]
  %v235 = vld [vmem:[%s13] sm:$0xff]
  %v236 = vld [vmem:[%s13 + $0x8] sm:$0xff]
  %v237 = vld [vmem:[%s13 + $0x10] sm:$0xff]
  %v238 = vld [vmem:[%s13 + $0x18] sm:$0xff]
  %v239 = vld [vmem:[%s13 + $0x20] sm:$0xff]
  %v240 = vld [vmem:[%s13 + $0x28] sm:$0xff]
  %v241 = vld [vmem:[%s13 + $0x30] sm:$0xff]
  %v242 = vld [vmem:[%s13 + $0x38] sm:$0xff]
  %v243 = vld [vmem:[%s13 + $0x40] sm:$0xff]
  %v244 = vld [vmem:[%s13 + $0x48] sm:$0xff]
  %v245 = vld [vmem:[%s13 + $0x50] sm:$0xff]
  %v246 = vld [vmem:[%s13 + $0x58] sm:$0xff]
  %v247 = vld [vmem:[%s13 + $0x60] sm:$0xff]
  %v248 = vld [vmem:[%s13 + $0x68] sm:$0xff]
  %v249 = vld [vmem:[%s13 + $0x70] sm:$0xff]
  %v250 = vld [vmem:[%s13 + $0x78] sm:$0xff]
  %v251 = vld [vmem:[%s13 + $0x80] sm:$0xff]
  %v252 = vld [vmem:[%s13 + $0x88] sm:$0xff]
  %v253 = vld [vmem:[%s13 + $0x90] sm:$0xff]
  %v254 = vld [vmem:[%s13 + $0x98] sm:$0xff]
  %v255 = vld [vmem:[%s13 + $0xa0] sm:$0xff]
  %v256 = vld [vmem:[%s13 + $0xa8] sm:$0xff]
  %v257 = vld [vmem:[%s13 + $0xb0] sm:$0xff]
  %v258 = vld [vmem:[%s13 + $0xb8] sm:$0xff]
  %v259 = vld [vmem:[%s13 + $0xc0] sm:$0xff]
  %v260 = vld [vmem:[%s13 + $0xc8] sm:$0xff]
  %v261 = vld [vmem:[%s13 + $0xd0] sm:$0xff]
  %v262 = vld [vmem:[%s13 + $0xd8] sm:$0xff]
  %v263 = vld [vmem:[%s13 + $0xe0] sm:$0xff]
  %v264 = vld [vmem:[%s13 + $0xe8] sm:$0xff]
  %v265 = vld [vmem:[%s13 + $0xf0] sm:$0xff]
  %v266 = vld [vmem:[%s13 + $0xf8] sm:$0xff]
  %v267 = vld [vmem:[%s13 + $0x100] sm:$0xff]
  %v268 = vld [vmem:[%s13 + $0x108] sm:$0xff]
  %v269 = vld [vmem:[%s13 + $0x110] sm:$0xff]
  %v270 = vld [vmem:[%s13 + $0x118] sm:$0xff]
  %v271 = vld [vmem:[%s13 + $0x120] sm:$0xff]
  %v272 = vld [vmem:[%s13 + $0x128] sm:$0xff]
  %v273 = vld [vmem:[%s13 + $0x130] sm:$0xff]
  %v274 = vld [vmem:[%s13 + $0x138] sm:$0xff]
  %v275 = vld [vmem:[%s13 + $0x140] sm:$0xff]
  %v276 = vld [vmem:[%s13 + $0x148] sm:$0xff]
  %v277 = vld [vmem:[%s13 + $0x150] sm:$0xff]
  %v278 = vld [vmem:[%s13 + $0x158] sm:$0xff]
  %v279 = vld [vmem:[%s13 + $0x160] sm:$0xff]
  %v280 = vld [vmem:[%s13 + $0x168] sm:$0xff]
  %v281 = vld [vmem:[%s13 + $0x170] sm:$0xff]
  %v282 = vld [vmem:[%s13 + $0x178] sm:$0xff]
  %v283 = vld [vmem:[%s13 + $0x180] sm:$0xff]
  %v284 = vld [vmem:[%s13 + $0x188] sm:$0xff]
  %v285 = vld [vmem:[%s13 + $0x190] sm:$0xff]
  %v286 = vld [vmem:[%s13 + $0x198] sm:$0xff]
  %v287 = vld [vmem:[%s13 + $0x1a0] sm:$0xff]
  %v288 = vld [vmem:[%s13 + $0x1a8] sm:$0xff]
  %v289 = vld [vmem:[%s13 + $0x1b0] sm:$0xff]
  %v290 = vld [vmem:[%s13 + $0x1b8] sm:$0xff]
  %v291 = vld [vmem:[%s13 + $0x1c0] sm:$0xff]
  %v292 = vld [vmem:[%s13 + $0x1c8] sm:$0xff]
  %v293 = vld [vmem:[%s13 + $0x1d0] sm:$0xff]
  %v294 = vld [vmem:[%s13 + $0x1d8] sm:$0xff]
  %v295 = vld [vmem:[%s13 + $0x1e0] sm:$0xff]
  %v296 = vld [vmem:[%s13 + $0x1e8] sm:$0xff]
  %v297 = vld [vmem:[%s13 + $0x1f0] sm:$0xff]
  %v298 = vld [vmem:[%s13 + $0x1f8] sm:$0xff]
  %v299 = vld [vmem:[%s13 + $0x200] sm:$0xff]
  %v300 = vld [vmem:[%s13 + $0x208] sm:$0xff]
  %v301 = vld [vmem:[%s13 + $0x210] sm:$0xff]
  %v302 = vld [vmem:[%s13 + $0x218] sm:$0xff]
  %v303 = vld [vmem:[%s13 + $0x220] sm:$0xff]
  %v304 = vld [vmem:[%s13 + $0x228] sm:$0xff]
  %v305 = vld [vmem:[%s13 + $0x230] sm:$0xff]
  %v306 = vld [vmem:[%s13 + $0x238] sm:$0xff]
  %v307 = vld [vmem:[%s13 + $0x240] sm:$0xff]
  %v308 = vld [vmem:[%s13 + $0x248] sm:$0xff]
  %v309 = vld [vmem:[%s13 + $0x250] sm:$0xff]
  %v310 = vld [vmem:[%s13 + $0x258] sm:$0xff]
  %v311 = vld [vmem:[%s13 + $0x260] sm:$0xff]
  %v312 = vld [vmem:[%s13 + $0x268] sm:$0xff]
  %v313 = vld [vmem:[%s13 + $0x270] sm:$0xff]
  %v314 = vld [vmem:[%s13 + $0x278] sm:$0xff]
  %v315 = vld [vmem:[%s13 + $0x280] sm:$0xff]
  %v316 = vld [vmem:[%s13 + $0x288] sm:$0xff]
  %v317 = vld [vmem:[%s13 + $0x290] sm:$0xff]
  %v318 = vld [vmem:[%s13 + $0x298] sm:$0xff]
  %v319 = vld [vmem:[%s13 + $0x2a0] sm:$0xff]
  %v320 = vld [vmem:[%s13 + $0x2a8] sm:$0xff]
  %v321 = vld [vmem:[%s13 + $0x2b0] sm:$0xff]
  %v322 = vld [vmem:[%s13 + $0x2b8] sm:$0xff]
  %v323 = vld [vmem:[%s13 + $0x2c0] sm:$0xff]
  %v324 = vld [vmem:[%s13 + $0x2c8] sm:$0xff]
  %v325 = vld [vmem:[%s13 + $0x2d0] sm:$0xff]
  %v326 = vld [vmem:[%s13 + $0x2d8] sm:$0xff]
  %v327 = vld [vmem:[%s13 + $0x2e0] sm:$0xff]
  %v328 = vld [vmem:[%s13 + $0x2e8] sm:$0xff]
  %v329 = vld [vmem:[%s13 + $0x2f0] sm:$0xff]
  %v330 = vld [vmem:[%s13 + $0x2f8] sm:$0xff]
  %v363 = vunpack.c.l.b16 %v203
  %v364 = vunpack.c.h.b16 %v203
  %v365 = vunpack.c.l.b16 %v204
  %v366 = vunpack.c.l.b16 %v205
  %v367 = vunpack.c.h.b16 %v205
  %v368 = vunpack.c.l.b16 %v206
  %v369 = vunpack.c.l.b16 %v207
  %v370 = vunpack.c.h.b16 %v207
  %v371 = vunpack.c.l.b16 %v208
  %v372 = vunpack.c.l.b16 %v209
  %v373 = vunpack.c.h.b16 %v209
  %v374 = vunpack.c.l.b16 %v210
  %v375 = vunpack.c.l.b16 %v211
  %v376 = vunpack.c.h.b16 %v211
  %v377 = vunpack.c.l.b16 %v212
  %v378 = vunpack.c.l.b16 %v213
  %v379 = vunpack.c.h.b16 %v213
  %v380 = vunpack.c.l.b16 %v214
  %v381 = vunpack.c.l.b16 %v215
  %v382 = vunpack.c.h.b16 %v215
  %v383 = vunpack.c.l.b16 %v216
  %v384 = vunpack.c.l.b16 %v217
  %v385 = vunpack.c.h.b16 %v217
  %v386 = vunpack.c.l.b16 %v218
  %v387 = vunpack.c.l.b16 %v219
  %v388 = vunpack.c.h.b16 %v219
  %v389 = vunpack.c.l.b16 %v220
  %v390 = vunpack.c.l.b16 %v221
  %v391 = vunpack.c.h.b16 %v221
  %v392 = vunpack.c.l.b16 %v222
  %v393 = vunpack.c.l.b16 %v223
  %v394 = vunpack.c.h.b16 %v223
  %v395 = vunpack.c.l.b16 %v224
  %v396 = vunpack.c.l.b16 %v225
  %v397 = vunpack.c.h.b16 %v225
  %v398 = vunpack.c.l.b16 %v226
  %v399 = vunpack.c.l.b16 %v227
  %v400 = vunpack.c.h.b16 %v227
  %v401 = vunpack.c.l.b16 %v228
  %v402 = vunpack.c.l.b16 %v229
  %v403 = vunpack.c.h.b16 %v229
  %v404 = vunpack.c.l.b16 %v230
  %v405 = vunpack.c.l.b16 %v231
  %v406 = vunpack.c.h.b16 %v231
  %v407 = vunpack.c.l.b16 %v232
  %v408 = vunpack.c.l.b16 %v233
  %v409 = vunpack.c.h.b16 %v233
  %v410 = vunpack.c.l.b16 %v234
  %v411 = vpack.c.b16 %v366, %v363
  %v412 = vpack.c.b16 %v367, %v364
  %v413 = vpack.c.b16 %v368, %v365
  %v414 = vpack.c.b16 %v372, %v369
  %v415 = vpack.c.b16 %v373, %v370
  %v416 = vpack.c.b16 %v374, %v371
  %v417 = vpack.c.b16 %v378, %v375
  %v418 = vpack.c.b16 %v379, %v376
  %v419 = vpack.c.b16 %v380, %v377
  %v420 = vpack.c.b16 %v384, %v381
  %v421 = vpack.c.b16 %v385, %v382
  %v422 = vpack.c.b16 %v386, %v383
  %v423 = vpack.c.b16 %v390, %v387
  %v424 = vpack.c.b16 %v391, %v388
  %v425 = vpack.c.b16 %v392, %v389
  %v426 = vpack.c.b16 %v396, %v393
  %v427 = vpack.c.b16 %v397, %v394
  %v428 = vpack.c.b16 %v398, %v395
  %v429 = vpack.c.b16 %v402, %v399
  %v430 = vpack.c.b16 %v403, %v400
  %v431 = vpack.c.b16 %v404, %v401
  %v432 = vpack.c.b16 %v408, %v405
  %v433 = vpack.c.b16 %v409, %v406
  %v434 = vpack.c.b16 %v410, %v407
  %v555 = vunpack.c.l.b16 %v235
  %v556 = vunpack.c.h.b16 %v235
  %v557 = vunpack.c.l.b16 %v236
  %v558 = vunpack.c.h.b16 %v236
  %v559 = vunpack.c.l.b16 %v237
  %v560 = vunpack.c.h.b16 %v237
  %v561 = vunpack.c.l.b16 %v238
  %v562 = vunpack.c.h.b16 %v238
  %v563 = vunpack.c.l.b16 %v239
  %v564 = vunpack.c.h.b16 %v239
  %v565 = vunpack.c.l.b16 %v240
  %v566 = vunpack.c.h.b16 %v240
  %v567 = vunpack.c.l.b16 %v241
  %v568 = vunpack.c.h.b16 %v241
  %v569 = vunpack.c.l.b16 %v242
  %v570 = vunpack.c.h.b16 %v242
  %v571 = vunpack.c.l.b16 %v243
  %v572 = vunpack.c.h.b16 %v243
  %v573 = vunpack.c.l.b16 %v244
  %v574 = vunpack.c.h.b16 %v244
  %v575 = vunpack.c.l.b16 %v245
  %v576 = vunpack.c.h.b16 %v245
  %v577 = vunpack.c.l.b16 %v246
  %v578 = vunpack.c.h.b16 %v246
  %v579 = vunpack.c.l.b16 %v247
  %v580 = vunpack.c.h.b16 %v247
  %v581 = vunpack.c.l.b16 %v248
  %v582 = vunpack.c.h.b16 %v248
  %v583 = vunpack.c.l.b16 %v249
  %v584 = vunpack.c.h.b16 %v249
  %v585 = vunpack.c.l.b16 %v250
  %v586 = vunpack.c.h.b16 %v250
  %v587 = vunpack.c.l.b16 %v251
  %v588 = vunpack.c.h.b16 %v251
  %v589 = vunpack.c.l.b16 %v252
  %v590 = vunpack.c.h.b16 %v252
  %v591 = vunpack.c.l.b16 %v253
  %v592 = vunpack.c.h.b16 %v253
  %v593 = vunpack.c.l.b16 %v254
  %v594 = vunpack.c.h.b16 %v254
  %v595 = vunpack.c.l.b16 %v255
  %v596 = vunpack.c.h.b16 %v255
  %v597 = vunpack.c.l.b16 %v256
  %v598 = vunpack.c.h.b16 %v256
  %v599 = vunpack.c.l.b16 %v257
  %v600 = vunpack.c.h.b16 %v257
  %v601 = vunpack.c.l.b16 %v258
  %v602 = vunpack.c.h.b16 %v258
  %v603 = vunpack.c.l.b16 %v259
  %v604 = vunpack.c.h.b16 %v259
  %v605 = vunpack.c.l.b16 %v260
  %v606 = vunpack.c.h.b16 %v260
  %v607 = vunpack.c.l.b16 %v261
  %v608 = vunpack.c.h.b16 %v261
  %v609 = vunpack.c.l.b16 %v262
  %v610 = vunpack.c.h.b16 %v262
  %v611 = vunpack.c.l.b16 %v263
  %v612 = vunpack.c.h.b16 %v263
  %v613 = vunpack.c.l.b16 %v264
  %v614 = vunpack.c.h.b16 %v264
  %v615 = vunpack.c.l.b16 %v265
  %v616 = vunpack.c.h.b16 %v265
  %v617 = vunpack.c.l.b16 %v266
  %v618 = vunpack.c.h.b16 %v266
  %v619 = vunpack.c.l.b16 %v267
  %v620 = vunpack.c.h.b16 %v267
  %v621 = vunpack.c.l.b16 %v268
  %v622 = vunpack.c.h.b16 %v268
  %v623 = vunpack.c.l.b16 %v269
  %v624 = vunpack.c.h.b16 %v269
  %v625 = vunpack.c.l.b16 %v270
  %v626 = vunpack.c.h.b16 %v270
  %v627 = vunpack.c.l.b16 %v271
  %v628 = vunpack.c.h.b16 %v271
  %v629 = vunpack.c.l.b16 %v272
  %v630 = vunpack.c.h.b16 %v272
  %v631 = vunpack.c.l.b16 %v273
  %v632 = vunpack.c.h.b16 %v273
  %v633 = vunpack.c.l.b16 %v274
  %v634 = vunpack.c.h.b16 %v274
  %v635 = vunpack.c.l.b16 %v275
  %v636 = vunpack.c.h.b16 %v275
  %v637 = vunpack.c.l.b16 %v276
  %v638 = vunpack.c.h.b16 %v276
  %v639 = vunpack.c.l.b16 %v277
  %v640 = vunpack.c.h.b16 %v277
  %v641 = vunpack.c.l.b16 %v278
  %v642 = vunpack.c.h.b16 %v278
  %v643 = vunpack.c.l.b16 %v279
  %v644 = vunpack.c.h.b16 %v279
  %v645 = vunpack.c.l.b16 %v280
  %v646 = vunpack.c.h.b16 %v280
  %v647 = vunpack.c.l.b16 %v281
  %v648 = vunpack.c.h.b16 %v281
  %v649 = vunpack.c.l.b16 %v282
  %v650 = vunpack.c.h.b16 %v282
  %v651 = vunpack.c.l.b16 %v283
  %v652 = vunpack.c.h.b16 %v283
  %v653 = vunpack.c.l.b16 %v284
  %v654 = vunpack.c.h.b16 %v284
  %v655 = vunpack.c.l.b16 %v285
  %v656 = vunpack.c.h.b16 %v285
  %v657 = vunpack.c.l.b16 %v286
  %v658 = vunpack.c.h.b16 %v286
  %v659 = vunpack.c.l.b16 %v287
  %v660 = vunpack.c.h.b16 %v287
  %v661 = vunpack.c.l.b16 %v288
  %v662 = vunpack.c.h.b16 %v288
  %v663 = vunpack.c.l.b16 %v289
  %v664 = vunpack.c.h.b16 %v289
  %v665 = vunpack.c.l.b16 %v290
  %v666 = vunpack.c.h.b16 %v290
  %v667 = vunpack.c.l.b16 %v291
  %v668 = vunpack.c.h.b16 %v291
  %v669 = vunpack.c.l.b16 %v292
  %v670 = vunpack.c.h.b16 %v292
  %v671 = vunpack.c.l.b16 %v293
  %v672 = vunpack.c.h.b16 %v293
  %v673 = vunpack.c.l.b16 %v294
  %v674 = vunpack.c.h.b16 %v294
  %v675 = vunpack.c.l.b16 %v295
  %v676 = vunpack.c.h.b16 %v295
  %v677 = vunpack.c.l.b16 %v296
  %v678 = vunpack.c.h.b16 %v296
  %v679 = vunpack.c.l.b16 %v297
  %v680 = vunpack.c.h.b16 %v297
  %v681 = vunpack.c.l.b16 %v298
  %v682 = vunpack.c.h.b16 %v298
  %v683 = vunpack.c.l.b16 %v299
  %v684 = vunpack.c.h.b16 %v299
  %v685 = vunpack.c.l.b16 %v300
  %v686 = vunpack.c.h.b16 %v300
  %v687 = vunpack.c.l.b16 %v301
  %v688 = vunpack.c.h.b16 %v301
  %v689 = vunpack.c.l.b16 %v302
  %v690 = vunpack.c.h.b16 %v302
  %v691 = vunpack.c.l.b16 %v303
  %v692 = vunpack.c.h.b16 %v303
  %v693 = vunpack.c.l.b16 %v304
  %v694 = vunpack.c.h.b16 %v304
  %v695 = vunpack.c.l.b16 %v305
  %v696 = vunpack.c.h.b16 %v305
  %v697 = vunpack.c.l.b16 %v306
  %v698 = vunpack.c.h.b16 %v306
  %v699 = vunpack.c.l.b16 %v307
  %v700 = vunpack.c.h.b16 %v307
  %v701 = vunpack.c.l.b16 %v308
  %v702 = vunpack.c.h.b16 %v308
  %v703 = vunpack.c.l.b16 %v309
  %v704 = vunpack.c.h.b16 %v309
  %v705 = vunpack.c.l.b16 %v310
  %v706 = vunpack.c.h.b16 %v310
  %v707 = vunpack.c.l.b16 %v311
  %v708 = vunpack.c.h.b16 %v311
  %v709 = vunpack.c.l.b16 %v312
  %v710 = vunpack.c.h.b16 %v312
  %v711 = vunpack.c.l.b16 %v313
  %v712 = vunpack.c.h.b16 %v313
  %v713 = vunpack.c.l.b16 %v314
  %v714 = vunpack.c.h.b16 %v314
  %v715 = vunpack.c.l.b16 %v315
  %v716 = vunpack.c.h.b16 %v315
  %v717 = vunpack.c.l.b16 %v316
  %v718 = vunpack.c.h.b16 %v316
  %v719 = vunpack.c.l.b16 %v317
  %v720 = vunpack.c.h.b16 %v317
  %v721 = vunpack.c.l.b16 %v318
  %v722 = vunpack.c.h.b16 %v318
  %v723 = vunpack.c.l.b16 %v319
  %v724 = vunpack.c.h.b16 %v319
  %v725 = vunpack.c.l.b16 %v320
  %v726 = vunpack.c.h.b16 %v320
  %v727 = vunpack.c.l.b16 %v321
  %v728 = vunpack.c.h.b16 %v321
  %v729 = vunpack.c.l.b16 %v322
  %v730 = vunpack.c.h.b16 %v322
  %v731 = vunpack.c.l.b16 %v323
  %v732 = vunpack.c.h.b16 %v323
  %v733 = vunpack.c.l.b16 %v324
  %v734 = vunpack.c.h.b16 %v324
  %v735 = vunpack.c.l.b16 %v325
  %v736 = vunpack.c.h.b16 %v325
  %v737 = vunpack.c.l.b16 %v326
  %v738 = vunpack.c.h.b16 %v326
  %v739 = vunpack.c.l.b16 %v327
  %v740 = vunpack.c.h.b16 %v327
  %v741 = vunpack.c.l.b16 %v328
  %v742 = vunpack.c.h.b16 %v328
  %v743 = vunpack.c.l.b16 %v329
  %v744 = vunpack.c.h.b16 %v329
  %v745 = vunpack.c.l.b16 %v330
  %v746 = vunpack.c.h.b16 %v330
  %v747 = vpack.c.b16 %v559, %v555
  %v748 = vpack.c.b16 %v560, %v556
  %v749 = vpack.c.b16 %v561, %v557
  %v750 = vpack.c.b16 %v562, %v558
  %v751 = vpack.c.b16 %v567, %v563
  %v752 = vpack.c.b16 %v568, %v564
  %v753 = vpack.c.b16 %v569, %v565
  %v754 = vpack.c.b16 %v570, %v566
  %v755 = vpack.c.b16 %v575, %v571
  %v756 = vpack.c.b16 %v576, %v572
  %v757 = vpack.c.b16 %v577, %v573
  %v758 = vpack.c.b16 %v578, %v574
  %v759 = vpack.c.b16 %v583, %v579
  %v760 = vpack.c.b16 %v584, %v580
  %v761 = vpack.c.b16 %v585, %v581
  %v762 = vpack.c.b16 %v586, %v582
  %v763 = vpack.c.b16 %v591, %v587
  %v764 = vpack.c.b16 %v592, %v588
  %v765 = vpack.c.b16 %v593, %v589
  %v766 = vpack.c.b16 %v594, %v590
  %v767 = vpack.c.b16 %v599, %v595
  %v768 = vpack.c.b16 %v600, %v596
  %v769 = vpack.c.b16 %v601, %v597
  %v770 = vpack.c.b16 %v602, %v598
  %v771 = vpack.c.b16 %v607, %v603
  %v772 = vpack.c.b16 %v608, %v604
  %v773 = vpack.c.b16 %v609, %v605
  %v774 = vpack.c.b16 %v610, %v606
  %v775 = vpack.c.b16 %v615, %v611
  %v776 = vpack.c.b16 %v616, %v612
  %v777 = vpack.c.b16 %v617, %v613
  %v778 = vpack.c.b16 %v618, %v614
  %v779 = vpack.c.b16 %v623, %v619
  %v780 = vpack.c.b16 %v624, %v620
  %v781 = vpack.c.b16 %v625, %v621
  %v782 = vpack.c.b16 %v626, %v622
  %v783 = vpack.c.b16 %v631, %v627
  %v784 = vpack.c.b16 %v632, %v628
  %v785 = vpack.c.b16 %v633, %v629
  %v786 = vpack.c.b16 %v634, %v630
  %v787 = vpack.c.b16 %v639, %v635
  %v788 = vpack.c.b16 %v640, %v636
  %v789 = vpack.c.b16 %v641, %v637
  %v790 = vpack.c.b16 %v642, %v638
  %v791 = vpack.c.b16 %v647, %v643
  %v792 = vpack.c.b16 %v648, %v644
  %v793 = vpack.c.b16 %v649, %v645
  %v794 = vpack.c.b16 %v650, %v646
  %v795 = vpack.c.b16 %v655, %v651
  %v796 = vpack.c.b16 %v656, %v652
  %v797 = vpack.c.b16 %v657, %v653
  %v798 = vpack.c.b16 %v658, %v654
  %v799 = vpack.c.b16 %v663, %v659
  %v800 = vpack.c.b16 %v664, %v660
  %v801 = vpack.c.b16 %v665, %v661
  %v802 = vpack.c.b16 %v666, %v662
  %v803 = vpack.c.b16 %v671, %v667
  %v804 = vpack.c.b16 %v672, %v668
  %v805 = vpack.c.b16 %v673, %v669
  %v806 = vpack.c.b16 %v674, %v670
  %v807 = vpack.c.b16 %v679, %v675
  %v808 = vpack.c.b16 %v680, %v676
  %v809 = vpack.c.b16 %v681, %v677
  %v810 = vpack.c.b16 %v682, %v678
  %v811 = vpack.c.b16 %v687, %v683
  %v812 = vpack.c.b16 %v688, %v684
  %v813 = vpack.c.b16 %v689, %v685
  %v814 = vpack.c.b16 %v690, %v686
  %v815 = vpack.c.b16 %v695, %v691
  %v816 = vpack.c.b16 %v696, %v692
  %v817 = vpack.c.b16 %v697, %v693
  %v818 = vpack.c.b16 %v698, %v694
  %v819 = vpack.c.b16 %v703, %v699
  %v820 = vpack.c.b16 %v704, %v700
  %v821 = vpack.c.b16 %v705, %v701
  %v822 = vpack.c.b16 %v706, %v702
  %v823 = vpack.c.b16 %v711, %v707
  %v824 = vpack.c.b16 %v712, %v708
  %v825 = vpack.c.b16 %v713, %v709
  %v826 = vpack.c.b16 %v714, %v710
  %v827 = vpack.c.b16 %v719, %v715
  %v828 = vpack.c.b16 %v720, %v716
  %v829 = vpack.c.b16 %v721, %v717
  %v830 = vpack.c.b16 %v722, %v718
  %v831 = vpack.c.b16 %v727, %v723
  %v832 = vpack.c.b16 %v728, %v724
  %v833 = vpack.c.b16 %v729, %v725
  %v834 = vpack.c.b16 %v730, %v726
  %v835 = vpack.c.b16 %v735, %v731
  %v836 = vpack.c.b16 %v736, %v732
  %v837 = vpack.c.b16 %v737, %v733
  %v838 = vpack.c.b16 %v738, %v734
  %v839 = vpack.c.b16 %v743, %v739
  %v840 = vpack.c.b16 %v744, %v740
  %v841 = vpack.c.b16 %v745, %v741
  %v842 = vpack.c.b16 %v746, %v742
  %939 = vmatprep.subr.bf16.mxu0 %v776
  %940 = vmatpush1.bf16.msra.mxu0 %v775
  %941 = vmatprep.subr.bf16.mxu0 %v772
  %942 = vmatpush1.bf16.msra.mxu0 %v771
  %943 = vmatprep.subr.bf16.mxu0 %v768
  %944 = vmatpush1.bf16.msra.mxu0 %v767
  %945 = vmatprep.subr.bf16.mxu0 %v764
  %946 = vmatpush1.bf16.msra.mxu0 %v763
  %947 = vmatprep.subr.bf16.mxu0 %v760
  %948 = vmatpush1.bf16.msra.mxu0 %v759
  %949 = vmatprep.subr.bf16.mxu0 %v756
  %950 = vmatpush1.bf16.msra.mxu0 %v755
  %951 = vmatprep.subr.bf16.mxu0 %v752
  %952 = vmatpush1.bf16.msra.mxu0 %v751
  %953 = vmatprep.subr.bf16.mxu0 %v748
  %954 = vmatpush1.bf16.msra.mxu0 %v747
  %955 = vmatprep.subr.bf16.mxu0 %v808
  %956 = vmatpush2.bf16.msra.mxu0 %v807
  %957 = vmatprep.subr.bf16.mxu0 %v804
  %958 = vmatpush2.bf16.msra.mxu0 %v803
  %959 = vmatprep.subr.bf16.mxu0 %v800
  %960 = vmatpush2.bf16.msra.mxu0 %v799
  %961 = vmatprep.subr.bf16.mxu0 %v796
  %962 = vmatpush2.bf16.msra.mxu0 %v795
  %963 = vmatprep.subr.bf16.mxu0 %v792
  %964 = vmatpush2.bf16.msra.mxu0 %v791
  %965 = vmatprep.subr.bf16.mxu0 %v788
  %966 = vmatpush2.bf16.msra.mxu0 %v787
  %967 = vmatprep.subr.bf16.mxu0 %v784
  %968 = vmatpush2.bf16.msra.mxu0 %v783
  %969 = vmatprep.subr.bf16.mxu0 %v780
  %970 = vmatpush2.bf16.msra.mxu0 %v779
  %971 = vmatprep.mubr.bf16.mxu0 %v412
  %972 = vmatmul.mubr.bf16.gmra.mxu0 %v411
  %v973 = vpop.f32.mrf.mxu0
  %v974 = vadd.f32 0.0, %v973
  %v975 = vpop.f32.mrf.mxu0
  %v976 = vadd.f32 0.0, %v975
  %v977 = vpop.f32.mrf.mxu0
  %v978 = vadd.f32 0.0, %v977
  %v979 = vpop.f32.mrf.mxu0
  %v980 = vadd.f32 0.0, %v979
  %981 = vmatprep.mubr.bf16.mxu0 %v415
  %982 = vmatmul.mubr.bf16.gmra.mxu0 %v414
  %v983 = vpop.f32.mrf.mxu0
  %v984 = vadd.f32 0.0, %v983
  %v985 = vpop.f32.mrf.mxu0
  %v986 = vadd.f32 0.0, %v985
  %v987 = vpop.f32.mrf.mxu0
  %v988 = vadd.f32 0.0, %v987
  %v989 = vpop.f32.mrf.mxu0
  %v990 = vadd.f32 0.0, %v989
  %991 = vmatprep.mubr.bf16.mxu0 %v418
  %992 = vmatmul.mubr.bf16.gmra.mxu0 %v417
  %v993 = vpop.f32.mrf.mxu0
  %v994 = vadd.f32 0.0, %v993
  %v995 = vpop.f32.mrf.mxu0
  %v996 = vadd.f32 0.0, %v995
  %v997 = vpop.f32.mrf.mxu0
  %v998 = vadd.f32 0.0, %v997
  %v999 = vpop.f32.mrf.mxu0
  %v1000 = vadd.f32 0.0, %v999
  %1001 = vmatprep.mubr.bf16.mxu0 %v421
  %1002 = vmatmul.mubr.bf16.gmra.mxu0 %v420
  %v1003 = vpop.f32.mrf.mxu0
  %v1004 = vadd.f32 0.0, %v1003
  %v1005 = vpop.f32.mrf.mxu0
  %v1006 = vadd.f32 0.0, %v1005
  %v1007 = vpop.f32.mrf.mxu0
  %v1008 = vadd.f32 0.0, %v1007
  %v1009 = vpop.f32.mrf.mxu0
  %v1010 = vadd.f32 0.0, %v1009
  %1011 = vmatprep.mubr.bf16.mxu0 %v424
  %1012 = vmatmul.mubr.bf16.gmra.mxu0 %v423
  %v1013 = vpop.f32.mrf.mxu0
  %v1014 = vadd.f32 0.0, %v1013
  %v1015 = vpop.f32.mrf.mxu0
  %v1016 = vadd.f32 0.0, %v1015
  %v1017 = vpop.f32.mrf.mxu0
  %v1018 = vadd.f32 0.0, %v1017
  %v1019 = vpop.f32.mrf.mxu0
  %v1020 = vadd.f32 0.0, %v1019
  %1021 = vmatprep.mubr.bf16.mxu0 %v427
  %1022 = vmatmul.mubr.bf16.gmra.mxu0 %v426
  %v1023 = vpop.f32.mrf.mxu0
  %v1024 = vadd.f32 0.0, %v1023
  %v1025 = vpop.f32.mrf.mxu0
  %v1026 = vadd.f32 0.0, %v1025
  %v1027 = vpop.f32.mrf.mxu0
  %v1028 = vadd.f32 0.0, %v1027
  %v1029 = vpop.f32.mrf.mxu0
  %v1030 = vadd.f32 0.0, %v1029
  %1031 = vmatprep.mubr.bf16.mxu0 %v430
  %1032 = vmatmul.mubr.bf16.gmra.mxu0 %v429
  %v1033 = vpop.f32.mrf.mxu0
  %v1034 = vadd.f32 0.0, %v1033
  %v1035 = vpop.f32.mrf.mxu0
  %v1036 = vadd.f32 0.0, %v1035
  %v1037 = vpop.f32.mrf.mxu0
  %v1038 = vadd.f32 0.0, %v1037
  %v1039 = vpop.f32.mrf.mxu0
  %v1040 = vadd.f32 0.0, %v1039
  %1041 = vmatprep.mubr.bf16.mxu0 %v433
  %1042 = vmatmul.mubr.bf16.gmra.mxu0 %v432
  %v1043 = vpop.f32.mrf.mxu0
  %v1044 = vadd.f32 0.0, %v1043
  %v1045 = vpop.f32.mrf.mxu0
  %v1046 = vadd.f32 0.0, %v1045
  %v1047 = vpop.f32.mrf.mxu0
  %v1048 = vadd.f32 0.0, %v1047
  %v1049 = vpop.f32.mrf.mxu0
  %v1050 = vadd.f32 0.0, %v1049
  %1051 = vdwg.mxu0
  %1052 = vmatprep.subr.bf16.mxu0 %v840
  %1053 = vmatpush1.bf16.msra.mxu0 %v839
  %1054 = vmatprep.subr.bf16.mxu0 %v836
  %1055 = vmatpush1.bf16.msra.mxu0 %v835
  %1056 = vmatprep.subr.bf16.mxu0 %v832
  %1057 = vmatpush1.bf16.msra.mxu0 %v831
  %1058 = vmatprep.subr.bf16.mxu0 %v828
  %1059 = vmatpush1.bf16.msra.mxu0 %v827
  %1060 = vmatprep.subr.bf16.mxu0 %v824
  %1061 = vmatpush1.bf16.msra.mxu0 %v823
  %1062 = vmatprep.subr.bf16.mxu0 %v820
  %1063 = vmatpush1.bf16.msra.mxu0 %v819
  %1064 = vmatprep.subr.bf16.mxu0 %v816
  %1065 = vmatpush1.bf16.msra.mxu0 %v815
  %1066 = vmatprep.subr.bf16.mxu0 %v812
  %1067 = vmatpush1.bf16.msra.mxu0 %v811
  %1068 = vmatprep.subr.bf16.mxu0 0
  %1069 = vmatpush2.bf16.msra.mxu0 0
  %1070 = vmatprep.subr.bf16.mxu0 0
  %1071 = vmatpush2.bf16.msra.mxu0 0
  %1072 = vmatprep.subr.bf16.mxu0 0
  %1073 = vmatpush2.bf16.msra.mxu0 0
  %1074 = vmatprep.subr.bf16.mxu0 0
  %1075 = vmatpush2.bf16.msra.mxu0 0
  %1076 = vmatprep.subr.bf16.mxu0 0
  %1077 = vmatpush2.bf16.msra.mxu0 0
  %1078 = vmatprep.subr.bf16.mxu0 0
  %1079 = vmatpush2.bf16.msra.mxu0 0
  %1080 = vmatprep.subr.bf16.mxu0 0
  %1081 = vmatpush2.bf16.msra.mxu0 0
  %1082 = vmatprep.subr.bf16.mxu0 0
  %1083 = vmatpush2.bf16.msra.mxu0 0
  %1084 = vmatprep.mubr.bf16.mxu0 0
  %1085 = vmatmul.mubr.bf16.gmra.mxu0 %v413
  %v1086 = vpop.f32.mrf.mxu0
  %v1087 = vadd.f32 %v974, %v1086
  %v1088 = vpop.f32.mrf.mxu0
  %v1089 = vadd.f32 %v976, %v1088
  %v1090 = vpop.f32.mrf.mxu0
  %v1091 = vadd.f32 %v978, %v1090
  %v1092 = vpop.f32.mrf.mxu0
  %v1093 = vadd.f32 %v980, %v1092
  %1094 = vmatprep.mubr.bf16.mxu0 0
  %1095 = vmatmul.mubr.bf16.gmra.mxu0 %v416
  %v1096 = vpop.f32.mrf.mxu0
  %v1097 = vadd.f32 %v984, %v1096
  %v1098 = vpop.f32.mrf.mxu0
  %v1099 = vadd.f32 %v986, %v1098
  %v1100 = vpop.f32.mrf.mxu0
  %v1101 = vadd.f32 %v988, %v1100
  %v1102 = vpop.f32.mrf.mxu0
  %v1103 = vadd.f32 %v990, %v1102
  %1104 = vmatprep.mubr.bf16.mxu0 0
  %1105 = vmatmul.mubr.bf16.gmra.mxu0 %v419
  %v1106 = vpop.f32.mrf.mxu0
  %v1107 = vadd.f32 %v994, %v1106
  %v1108 = vpop.f32.mrf.mxu0
  %v1109 = vadd.f32 %v996, %v1108
  %v1110 = vpop.f32.mrf.mxu0
  %v1111 = vadd.f32 %v998, %v1110
  %v1112 = vpop.f32.mrf.mxu0
  %v1113 = vadd.f32 %v1000, %v1112
  %1114 = vmatprep.mubr.bf16.mxu0 0
  %1115 = vmatmul.mubr.bf16.gmra.mxu0 %v422
  %v1116 = vpop.f32.mrf.mxu0
  %v1117 = vadd.f32 %v1004, %v1116
  %v1118 = vpop.f32.mrf.mxu0
  %v1119 = vadd.f32 %v1006, %v1118
  %v1120 = vpop.f32.mrf.mxu0
  %v1121 = vadd.f32 %v1008, %v1120
  %v1122 = vpop.f32.mrf.mxu0
  %v1123 = vadd.f32 %v1010, %v1122
  %1124 = vmatprep.mubr.bf16.mxu0 0
  %1125 = vmatmul.mubr.bf16.gmra.mxu0 %v425
  %v1126 = vpop.f32.mrf.mxu0
  %v1127 = vadd.f32 %v1014, %v1126
  %v1128 = vpop.f32.mrf.mxu0
  %v1129 = vadd.f32 %v1016, %v1128
  %v1130 = vpop.f32.mrf.mxu0
  %v1131 = vadd.f32 %v1018, %v1130
  %v1132 = vpop.f32.mrf.mxu0
  %v1133 = vadd.f32 %v1020, %v1132
  %1134 = vmatprep.mubr.bf16.mxu0 0
  %1135 = vmatmul.mubr.bf16.gmra.mxu0 %v428
  %v1136 = vpop.f32.mrf.mxu0
  %v1137 = vadd.f32 %v1024, %v1136
  %v1138 = vpop.f32.mrf.mxu0
  %v1139 = vadd.f32 %v1026, %v1138
  %v1140 = vpop.f32.mrf.mxu0
  %v1141 = vadd.f32 %v1028, %v1140
  %v1142 = vpop.f32.mrf.mxu0
  %v1143 = vadd.f32 %v1030, %v1142
  %1144 = vmatprep.mubr.bf16.mxu0 0
  %1145 = vmatmul.mubr.bf16.gmra.mxu0 %v431
  %v1146 = vpop.f32.mrf.mxu0
  %v1147 = vadd.f32 %v1034, %v1146
  %v1148 = vpop.f32.mrf.mxu0
  %v1149 = vadd.f32 %v1036, %v1148
  %v1150 = vpop.f32.mrf.mxu0
  %v1151 = vadd.f32 %v1038, %v1150
  %v1152 = vpop.f32.mrf.mxu0
  %v1153 = vadd.f32 %v1040, %v1152
  %1154 = vmatprep.mubr.bf16.mxu0 0
  %1155 = vmatmul.mubr.bf16.gmra.mxu0 %v434
  %v1156 = vpop.f32.mrf.mxu0
  %v1157 = vadd.f32 %v1044, %v1156
  %v1158 = vpop.f32.mrf.mxu0
  %v1159 = vadd.f32 %v1046, %v1158
  %v1160 = vpop.f32.mrf.mxu0
  %v1161 = vadd.f32 %v1048, %v1160
  %v1162 = vpop.f32.mrf.mxu0
  %v1163 = vadd.f32 %v1050, %v1162
  %1164 = vdwg.mxu0
  %1165 = vmatprep.subr.bf16.mxu0 %v778
  %1166 = vmatpush1.bf16.msra.mxu0 %v777
  %1167 = vmatprep.subr.bf16.mxu0 %v774
  %1168 = vmatpush1.bf16.msra.mxu0 %v773
  %1169 = vmatprep.subr.bf16.mxu0 %v770
  %1170 = vmatpush1.bf16.msra.mxu0 %v769
  %1171 = vmatprep.subr.bf16.mxu0 %v766
  %1172 = vmatpush1.bf16.msra.mxu0 %v765
  %1173 = vmatprep.subr.bf16.mxu0 %v762
  %1174 = vmatpush1.bf16.msra.mxu0 %v761
  %1175 = vmatprep.subr.bf16.mxu0 %v758
  %1176 = vmatpush1.bf16.msra.mxu0 %v757
  %1177 = vmatprep.subr.bf16.mxu0 %v754
  %1178 = vmatpush1.bf16.msra.mxu0 %v753
  %1179 = vmatprep.subr.bf16.mxu0 %v750
  %1180 = vmatpush1.bf16.msra.mxu0 %v749
  %1181 = vmatprep.subr.bf16.mxu0 %v810
  %1182 = vmatpush2.bf16.msra.mxu0 %v809
  %1183 = vmatprep.subr.bf16.mxu0 %v806
  %1184 = vmatpush2.bf16.msra.mxu0 %v805
  %1185 = vmatprep.subr.bf16.mxu0 %v802
  %1186 = vmatpush2.bf16.msra.mxu0 %v801
  %1187 = vmatprep.subr.bf16.mxu0 %v798
  %1188 = vmatpush2.bf16.msra.mxu0 %v797
  %1189 = vmatprep.subr.bf16.mxu0 %v794
  %1190 = vmatpush2.bf16.msra.mxu0 %v793
  %1191 = vmatprep.subr.bf16.mxu0 %v790
  %1192 = vmatpush2.bf16.msra.mxu0 %v789
  %1193 = vmatprep.subr.bf16.mxu0 %v786
  %1194 = vmatpush2.bf16.msra.mxu0 %v785
  %1195 = vmatprep.subr.bf16.mxu0 %v782
  %1196 = vmatpush2.bf16.msra.mxu0 %v781
  %1197 = vmatprep.mubr.bf16.mxu0 %v412
  %1198 = vmatmul.mubr.bf16.gmra.mxu0 %v411
  %v1199 = vpop.f32.mrf.mxu0
  %v1200 = vadd.f32 0.0, %v1199
  %v1201 = vpop.f32.mrf.mxu0
  %v1202 = vadd.f32 0.0, %v1201
  %v1203 = vpop.f32.mrf.mxu0
  %v1204 = vadd.f32 0.0, %v1203
  %v1205 = vpop.f32.mrf.mxu0
  %v1206 = vadd.f32 0.0, %v1205
  %1207 = vmatprep.mubr.bf16.mxu0 %v415
  %1208 = vmatmul.mubr.bf16.gmra.mxu0 %v414
  %v1209 = vpop.f32.mrf.mxu0
  %v1210 = vadd.f32 0.0, %v1209
  %v1211 = vpop.f32.mrf.mxu0
  %v1212 = vadd.f32 0.0, %v1211
  %v1213 = vpop.f32.mrf.mxu0
  %v1214 = vadd.f32 0.0, %v1213
  %v1215 = vpop.f32.mrf.mxu0
  %v1216 = vadd.f32 0.0, %v1215
  %1217 = vmatprep.mubr.bf16.mxu0 %v418
  %1218 = vmatmul.mubr.bf16.gmra.mxu0 %v417
  %v1219 = vpop.f32.mrf.mxu0
  %v1220 = vadd.f32 0.0, %v1219
  %v1221 = vpop.f32.mrf.mxu0
  %v1222 = vadd.f32 0.0, %v1221
  %v1223 = vpop.f32.mrf.mxu0
  %v1224 = vadd.f32 0.0, %v1223
  %v1225 = vpop.f32.mrf.mxu0
  %v1226 = vadd.f32 0.0, %v1225
  %1227 = vmatprep.mubr.bf16.mxu0 %v421
  %1228 = vmatmul.mubr.bf16.gmra.mxu0 %v420
  %v1229 = vpop.f32.mrf.mxu0
  %v1230 = vadd.f32 0.0, %v1229
  %v1231 = vpop.f32.mrf.mxu0
  %v1232 = vadd.f32 0.0, %v1231
  %v1233 = vpop.f32.mrf.mxu0
  %v1234 = vadd.f32 0.0, %v1233
  %v1235 = vpop.f32.mrf.mxu0
  %v1236 = vadd.f32 0.0, %v1235
  %1237 = vmatprep.mubr.bf16.mxu0 %v424
  %1238 = vmatmul.mubr.bf16.gmra.mxu0 %v423
  %v1239 = vpop.f32.mrf.mxu0
  %v1240 = vadd.f32 0.0, %v1239
  %v1241 = vpop.f32.mrf.mxu0
  %v1242 = vadd.f32 0.0, %v1241
  %v1243 = vpop.f32.mrf.mxu0
  %v1244 = vadd.f32 0.0, %v1243
  %v1245 = vpop.f32.mrf.mxu0
  %v1246 = vadd.f32 0.0, %v1245
  %1247 = vmatprep.mubr.bf16.mxu0 %v427
  %1248 = vmatmul.mubr.bf16.gmra.mxu0 %v426
  %v1249 = vpop.f32.mrf.mxu0
  %v1250 = vadd.f32 0.0, %v1249
  %v1251 = vpop.f32.mrf.mxu0
  %v1252 = vadd.f32 0.0, %v1251
  %v1253 = vpop.f32.mrf.mxu0
  %v1254 = vadd.f32 0.0, %v1253
  %v1255 = vpop.f32.mrf.mxu0
  %v1256 = vadd.f32 0.0, %v1255
  %1257 = vmatprep.mubr.bf16.mxu0 %v430
  %1258 = vmatmul.mubr.bf16.gmra.mxu0 %v429
  %v1259 = vpop.f32.mrf.mxu0
  %v1260 = vadd.f32 0.0, %v1259
  %v1261 = vpop.f32.mrf.mxu0
  %v1262 = vadd.f32 0.0, %v1261
  %v1263 = vpop.f32.mrf.mxu0
  %v1264 = vadd.f32 0.0, %v1263
  %v1265 = vpop.f32.mrf.mxu0
  %v1266 = vadd.f32 0.0, %v1265
  %1267 = vmatprep.mubr.bf16.mxu0 %v433
  %1268 = vmatmul.mubr.bf16.gmra.mxu0 %v432
  %v1269 = vpop.f32.mrf.mxu0
  %v1270 = vadd.f32 0.0, %v1269
  %v1271 = vpop.f32.mrf.mxu0
  %v1272 = vadd.f32 0.0, %v1271
  %v1273 = vpop.f32.mrf.mxu0
  %v1274 = vadd.f32 0.0, %v1273
  %v1275 = vpop.f32.mrf.mxu0
  %v1276 = vadd.f32 0.0, %v1275
  %1277 = vdwg.mxu0
  %1278 = vmatprep.subr.bf16.mxu0 %v842
  %1279 = vmatpush1.bf16.msra.mxu0 %v841
  %1280 = vmatprep.subr.bf16.mxu0 %v838
  %1281 = vmatpush1.bf16.msra.mxu0 %v837
  %1282 = vmatprep.subr.bf16.mxu0 %v834
  %1283 = vmatpush1.bf16.msra.mxu0 %v833
  %1284 = vmatprep.subr.bf16.mxu0 %v830
  %1285 = vmatpush1.bf16.msra.mxu0 %v829
  %1286 = vmatprep.subr.bf16.mxu0 %v826
  %1287 = vmatpush1.bf16.msra.mxu0 %v825
  %1288 = vmatprep.subr.bf16.mxu0 %v822
  %1289 = vmatpush1.bf16.msra.mxu0 %v821
  %1290 = vmatprep.subr.bf16.mxu0 %v818
  %1291 = vmatpush1.bf16.msra.mxu0 %v817
  %1292 = vmatprep.subr.bf16.mxu0 %v814
  %1293 = vmatpush1.bf16.msra.mxu0 %v813
  %1294 = vmatprep.subr.bf16.mxu0 0
  %1295 = vmatpush2.bf16.msra.mxu0 0
  %1296 = vmatprep.subr.bf16.mxu0 0
  %1297 = vmatpush2.bf16.msra.mxu0 0
  %1298 = vmatprep.subr.bf16.mxu0 0
  %1299 = vmatpush2.bf16.msra.mxu0 0
  %1300 = vmatprep.subr.bf16.mxu0 0
  %1301 = vmatpush2.bf16.msra.mxu0 0
  %1302 = vmatprep.subr.bf16.mxu0 0
  %1303 = vmatpush2.bf16.msra.mxu0 0
  %1304 = vmatprep.subr.bf16.mxu0 0
  %1305 = vmatpush2.bf16.msra.mxu0 0
  %1306 = vmatprep.subr.bf16.mxu0 0
  %1307 = vmatpush2.bf16.msra.mxu0 0
  %1308 = vmatprep.subr.bf16.mxu0 0
  %1309 = vmatpush2.bf16.msra.mxu0 0
  %1310 = vmatprep.mubr.bf16.mxu0 0
  %1311 = vmatmul.mubr.bf16.gmra.mxu0 %v413
  %v1312 = vpop.f32.mrf.mxu0
  %v1313 = vadd.f32 %v1200, %v1312
  %v1314 = vpop.f32.mrf.mxu0
  %v1315 = vadd.f32 %v1202, %v1314
  %v1316 = vpop.f32.mrf.mxu0
  %v1317 = vadd.f32 %v1204, %v1316
  %v1318 = vpop.f32.mrf.mxu0
  %v1319 = vadd.f32 %v1206, %v1318
  %1320 = vmatprep.mubr.bf16.mxu0 0
  %1321 = vmatmul.mubr.bf16.gmra.mxu0 %v416
  %v1322 = vpop.f32.mrf.mxu0
  %v1323 = vadd.f32 %v1210, %v1322
  %v1324 = vpop.f32.mrf.mxu0
  %v1325 = vadd.f32 %v1212, %v1324
  %v1326 = vpop.f32.mrf.mxu0
  %v1327 = vadd.f32 %v1214, %v1326
  %v1328 = vpop.f32.mrf.mxu0
  %v1329 = vadd.f32 %v1216, %v1328
  %1330 = vmatprep.mubr.bf16.mxu0 0
  %1331 = vmatmul.mubr.bf16.gmra.mxu0 %v419
  %v1332 = vpop.f32.mrf.mxu0
  %v1333 = vadd.f32 %v1220, %v1332
  %v1334 = vpop.f32.mrf.mxu0
  %v1335 = vadd.f32 %v1222, %v1334
  %v1336 = vpop.f32.mrf.mxu0
  %v1337 = vadd.f32 %v1224, %v1336
  %v1338 = vpop.f32.mrf.mxu0
  %v1339 = vadd.f32 %v1226, %v1338
  %1340 = vmatprep.mubr.bf16.mxu0 0
  %1341 = vmatmul.mubr.bf16.gmra.mxu0 %v422
  %v1342 = vpop.f32.mrf.mxu0
  %v1343 = vadd.f32 %v1230, %v1342
  %v1344 = vpop.f32.mrf.mxu0
  %v1345 = vadd.f32 %v1232, %v1344
  %v1346 = vpop.f32.mrf.mxu0
  %v1347 = vadd.f32 %v1234, %v1346
  %v1348 = vpop.f32.mrf.mxu0
  %v1349 = vadd.f32 %v1236, %v1348
  %1350 = vmatprep.mubr.bf16.mxu0 0
  %1351 = vmatmul.mubr.bf16.gmra.mxu0 %v425
  %v1352 = vpop.f32.mrf.mxu0
  %v1353 = vadd.f32 %v1240, %v1352
  %v1354 = vpop.f32.mrf.mxu0
  %v1355 = vadd.f32 %v1242, %v1354
  %v1356 = vpop.f32.mrf.mxu0
  %v1357 = vadd.f32 %v1244, %v1356
  %v1358 = vpop.f32.mrf.mxu0
  %v1359 = vadd.f32 %v1246, %v1358
  %1360 = vmatprep.mubr.bf16.mxu0 0
  %1361 = vmatmul.mubr.bf16.gmra.mxu0 %v428
  %v1362 = vpop.f32.mrf.mxu0
  %v1363 = vadd.f32 %v1250, %v1362
  %v1364 = vpop.f32.mrf.mxu0
  %v1365 = vadd.f32 %v1252, %v1364
  %v1366 = vpop.f32.mrf.mxu0
  %v1367 = vadd.f32 %v1254, %v1366
  %v1368 = vpop.f32.mrf.mxu0
  %v1369 = vadd.f32 %v1256, %v1368
  %1370 = vmatprep.mubr.bf16.mxu0 0
  %1371 = vmatmul.mubr.bf16.gmra.mxu0 %v431
  %v1372 = vpop.f32.mrf.mxu0
  %v1373 = vadd.f32 %v1260, %v1372
  %v1374 = vpop.f32.mrf.mxu0
  %v1375 = vadd.f32 %v1262, %v1374
  %v1376 = vpop.f32.mrf.mxu0
  %v1377 = vadd.f32 %v1264, %v1376
  %v1378 = vpop.f32.mrf.mxu0
  %v1379 = vadd.f32 %v1266, %v1378
  %1380 = vmatprep.mubr.bf16.mxu0 0
  %1381 = vmatmul.mubr.bf16.gmra.mxu0 %v434
  %v1382 = vpop.f32.mrf.mxu0
  %v1383 = vadd.f32 %v1270, %v1382
  %v1384 = vpop.f32.mrf.mxu0
  %v1385 = vadd.f32 %v1272, %v1384
  %v1386 = vpop.f32.mrf.mxu0
  %v1387 = vadd.f32 %v1274, %v1386
  %v1388 = vpop.f32.mrf.mxu0
  %v1389 = vadd.f32 %v1276, %v1388
  %1390 = vdwg.mxu0
  %1392 = vset.pattern.permute.xlu0 0
  %1393 = vperm.xlu0 %1392, %v155
  %v1394 = vpop.permute.xlu0 %1393
  %1397 = vset.pattern.permute.xlu0 0
  %1398 = vperm.xlu0 %1397, %v156
  %v1399 = vpop.permute.xlu0 %1398
  %1402 = vset.pattern.permute.xlu0 0
  %1403 = vperm.xlu0 %1402, %v157
  %v1404 = vpop.permute.xlu0 %1403
  %1407 = vset.pattern.permute.xlu0 0
  %1408 = vperm.xlu0 %1407, %v158
  %v1409 = vpop.permute.xlu0 %1408
  %1412 = vset.pattern.permute.xlu0 0
  %1413 = vperm.xlu0 %1412, %v159
  %v1414 = vpop.permute.xlu0 %1413
  %1417 = vset.pattern.permute.xlu0 0
  %1418 = vperm.xlu0 %1417, %v160
  %v1419 = vpop.permute.xlu0 %1418
  %1422 = vset.pattern.permute.xlu0 0
  %1423 = vperm.xlu0 %1422, %v161
  %v1424 = vpop.permute.xlu0 %1423
  %1427 = vset.pattern.permute.xlu0 0
  %1428 = vperm.xlu0 %1427, %v162
  %v1429 = vpop.permute.xlu0 %1428
  %1432 = vset.pattern.permute.xlu0 0
  %1433 = vperm.xlu0 %1432, %v163
  %v1434 = vpop.permute.xlu0 %1433
  %1437 = vset.pattern.permute.xlu0 0
  %1438 = vperm.xlu0 %1437, %v164
  %v1439 = vpop.permute.xlu0 %1438
  %1442 = vset.pattern.permute.xlu0 0
  %1443 = vperm.xlu0 %1442, %v165
  %v1444 = vpop.permute.xlu0 %1443
  %1447 = vset.pattern.permute.xlu0 0
  %1448 = vperm.xlu0 %1447, %v166
  %v1449 = vpop.permute.xlu0 %1448
  %1452 = vset.pattern.permute.xlu0 0
  %1453 = vperm.xlu0 %1452, %v167
  %v1454 = vpop.permute.xlu0 %1453
  %1457 = vset.pattern.permute.xlu0 0
  %1458 = vperm.xlu0 %1457, %v168
  %v1459 = vpop.permute.xlu0 %1458
  %1462 = vset.pattern.permute.xlu0 0
  %1463 = vperm.xlu0 %1462, %v169
  %v1464 = vpop.permute.xlu0 %1463
  %1467 = vset.pattern.permute.xlu0 0
  %1468 = vperm.xlu0 %1467, %v170
  %v1469 = vpop.permute.xlu0 %1468
  %v1471 = vmul.f32 %v1087, %v1394
  %v1472 = vmul.f32 %v1089, %v1394
  %v1473 = vmul.f32 %v1091, %v1399
  %v1474 = vmul.f32 %v1093, %v1399
  %v1475 = vmul.f32 %v1097, %v1404
  %v1476 = vmul.f32 %v1099, %v1404
  %v1477 = vmul.f32 %v1101, %v1409
  %v1478 = vmul.f32 %v1103, %v1409
  %v1479 = vmul.f32 %v1107, %v1414
  %v1480 = vmul.f32 %v1109, %v1414
  %v1481 = vmul.f32 %v1111, %v1419
  %v1482 = vmul.f32 %v1113, %v1419
  %v1483 = vmul.f32 %v1117, %v1424
  %v1484 = vmul.f32 %v1119, %v1424
  %v1485 = vmul.f32 %v1121, %v1429
  %v1486 = vmul.f32 %v1123, %v1429
  %v1487 = vmul.f32 %v1127, %v1434
  %v1488 = vmul.f32 %v1129, %v1434
  %v1489 = vmul.f32 %v1131, %v1439
  %v1490 = vmul.f32 %v1133, %v1439
  %v1491 = vmul.f32 %v1137, %v1444
  %v1492 = vmul.f32 %v1139, %v1444
  %v1493 = vmul.f32 %v1141, %v1449
  %v1494 = vmul.f32 %v1143, %v1449
  %v1495 = vmul.f32 %v1147, %v1454
  %v1496 = vmul.f32 %v1149, %v1454
  %v1497 = vmul.f32 %v1151, %v1459
  %v1498 = vmul.f32 %v1153, %v1459
  %v1499 = vmul.f32 %v1157, %v1464
  %v1500 = vmul.f32 %v1159, %v1464
  %v1501 = vmul.f32 %v1161, %v1469
  %v1502 = vmul.f32 %v1163, %v1469
  %v1503 = vpack.c.bf16 %v1473, %v1471
  %v1504 = vpack.c.bf16 %v1474, %v1472
  %v1505 = vpack.c.bf16 %v1317, %v1313
  %v1506 = vpack.c.bf16 %v1319, %v1315
  %v1507 = vpack.c.bf16 %v1477, %v1475
  %v1508 = vpack.c.bf16 %v1478, %v1476
  %v1509 = vpack.c.bf16 %v1327, %v1323
  %v1510 = vpack.c.bf16 %v1329, %v1325
  %v1511 = vpack.c.bf16 %v1481, %v1479
  %v1512 = vpack.c.bf16 %v1482, %v1480
  %v1513 = vpack.c.bf16 %v1337, %v1333
  %v1514 = vpack.c.bf16 %v1339, %v1335
  %v1515 = vpack.c.bf16 %v1485, %v1483
  %v1516 = vpack.c.bf16 %v1486, %v1484
  %v1517 = vpack.c.bf16 %v1347, %v1343
  %v1518 = vpack.c.bf16 %v1349, %v1345
  %v1519 = vpack.c.bf16 %v1489, %v1487
  %v1520 = vpack.c.bf16 %v1490, %v1488
  %v1521 = vpack.c.bf16 %v1357, %v1353
  %v1522 = vpack.c.bf16 %v1359, %v1355
  %v1523 = vpack.c.bf16 %v1493, %v1491
  %v1524 = vpack.c.bf16 %v1494, %v1492
  %v1525 = vpack.c.bf16 %v1367, %v1363
  %v1526 = vpack.c.bf16 %v1369, %v1365
  %v1527 = vpack.c.bf16 %v1497, %v1495
  %v1528 = vpack.c.bf16 %v1498, %v1496
  %v1529 = vpack.c.bf16 %v1377, %v1373
  %v1530 = vpack.c.bf16 %v1379, %v1375
  %v1531 = vpack.c.bf16 %v1501, %v1499
  %v1532 = vpack.c.bf16 %v1502, %v1500
  %v1533 = vpack.c.bf16 %v1387, %v1383
  %v1534 = vpack.c.bf16 %v1389, %v1385
  %v1551 = vunpack.c.l.b16 %v139
  %v1552 = vunpack.c.l.b16 %v140
  %v1553 = vunpack.c.l.b16 %v141
  %v1554 = vunpack.c.l.b16 %v142
  %v1555 = vunpack.c.l.b16 %v143
  %v1556 = vunpack.c.l.b16 %v144
  %v1557 = vunpack.c.l.b16 %v145
  %v1558 = vunpack.c.l.b16 %v146
  %v1559 = vunpack.c.l.b16 %v147
  %v1560 = vunpack.c.l.b16 %v148
  %v1561 = vunpack.c.l.b16 %v149
  %v1562 = vunpack.c.l.b16 %v150
  %v1563 = vunpack.c.l.b16 %v151
  %v1564 = vunpack.c.l.b16 %v152
  %v1565 = vunpack.c.l.b16 %v153
  %v1566 = vunpack.c.l.b16 %v154
  %v1567 = vpack.c.b16 %v1552, %v1551
  %v1568 = vpack.c.b16 %v1554, %v1553
  %v1569 = vpack.c.b16 %v1556, %v1555
  %v1570 = vpack.c.b16 %v1558, %v1557
  %v1571 = vpack.c.b16 %v1560, %v1559
  %v1572 = vpack.c.b16 %v1562, %v1561
  %v1573 = vpack.c.b16 %v1564, %v1563
  %v1574 = vpack.c.b16 %v1566, %v1565
  %1583 = vmatprep.subr.bf16.mxu0 %v1532
  %1584 = vmatpush1.bf16.msra.mxu0 %v1531
  %1585 = vmatprep.subr.bf16.mxu0 %v1528
  %1586 = vmatpush1.bf16.msra.mxu0 %v1527
  %1587 = vmatprep.subr.bf16.mxu0 %v1524
  %1588 = vmatpush1.bf16.msra.mxu0 %v1523
  %1589 = vmatprep.subr.bf16.mxu0 %v1520
  %1590 = vmatpush1.bf16.msra.mxu0 %v1519
  %1591 = vmatprep.subr.bf16.mxu0 %v1516
  %1592 = vmatpush1.bf16.msra.mxu0 %v1515
  %1593 = vmatprep.subr.bf16.mxu0 %v1512
  %1594 = vmatpush1.bf16.msra.mxu0 %v1511
  %1595 = vmatprep.subr.bf16.mxu0 %v1508
  %1596 = vmatpush1.bf16.msra.mxu0 %v1507
  %1597 = vmatprep.subr.bf16.mxu0 %v1504
  %1598 = vmatpush1.bf16.msra.mxu0 %v1503
  %1599 = vmatprep.subr.bf16.mxu0 0
  %1600 = vmatpush2.bf16.msra.mxu0 0
  %1601 = vmatprep.subr.bf16.mxu0 0
  %1602 = vmatpush2.bf16.msra.mxu0 0
  %1603 = vmatprep.subr.bf16.mxu0 0
  %1604 = vmatpush2.bf16.msra.mxu0 0
  %1605 = vmatprep.subr.bf16.mxu0 0
  %1606 = vmatpush2.bf16.msra.mxu0 0
  %1607 = vmatprep.subr.bf16.mxu0 0
  %1608 = vmatpush2.bf16.msra.mxu0 0
  %1609 = vmatprep.subr.bf16.mxu0 0
  %1610 = vmatpush2.bf16.msra.mxu0 0
  %1611 = vmatprep.subr.bf16.mxu0 0
  %1612 = vmatpush2.bf16.msra.mxu0 0
  %1613 = vmatprep.subr.bf16.mxu0 0
  %1614 = vmatpush2.bf16.msra.mxu0 0
  %1615 = vmatprep.mubr.bf16.mxu0 0
  %1616 = vmatmul.mubr.bf16.gmra.mxu0 %v1567
  %v1617 = vpop.f32.mrf.mxu0
  %v1618 = vadd.f32 0.0, %v1617
  %v1619 = vpop.f32.mrf.mxu0
  %v1620 = vadd.f32 0.0, %v1619
  %v1621 = vpop.f32.mrf.mxu0
  %v1622 = vadd.f32 0.0, %v1621
  %v1623 = vpop.f32.mrf.mxu0
  %v1624 = vadd.f32 0.0, %v1623
  %1625 = vmatprep.mubr.bf16.mxu0 0
  %1626 = vmatmul.mubr.bf16.gmra.mxu0 %v1568
  %v1627 = vpop.f32.mrf.mxu0
  %v1628 = vadd.f32 0.0, %v1627
  %v1629 = vpop.f32.mrf.mxu0
  %v1630 = vadd.f32 0.0, %v1629
  %v1631 = vpop.f32.mrf.mxu0
  %v1632 = vadd.f32 0.0, %v1631
  %v1633 = vpop.f32.mrf.mxu0
  %v1634 = vadd.f32 0.0, %v1633
  %1635 = vmatprep.mubr.bf16.mxu0 0
  %1636 = vmatmul.mubr.bf16.gmra.mxu0 %v1569
  %v1637 = vpop.f32.mrf.mxu0
  %v1638 = vadd.f32 0.0, %v1637
  %v1639 = vpop.f32.mrf.mxu0
  %v1640 = vadd.f32 0.0, %v1639
  %v1641 = vpop.f32.mrf.mxu0
  %v1642 = vadd.f32 0.0, %v1641
  %v1643 = vpop.f32.mrf.mxu0
  %v1644 = vadd.f32 0.0, %v1643
  %1645 = vmatprep.mubr.bf16.mxu0 0
  %1646 = vmatmul.mubr.bf16.gmra.mxu0 %v1570
  %v1647 = vpop.f32.mrf.mxu0
  %v1648 = vadd.f32 0.0, %v1647
  %v1649 = vpop.f32.mrf.mxu0
  %v1650 = vadd.f32 0.0, %v1649
  %v1651 = vpop.f32.mrf.mxu0
  %v1652 = vadd.f32 0.0, %v1651
  %v1653 = vpop.f32.mrf.mxu0
  %v1654 = vadd.f32 0.0, %v1653
  %1655 = vmatprep.mubr.bf16.mxu0 0
  %1656 = vmatmul.mubr.bf16.gmra.mxu0 %v1571
  %v1657 = vpop.f32.mrf.mxu0
  %v1658 = vadd.f32 0.0, %v1657
  %v1659 = vpop.f32.mrf.mxu0
  %v1660 = vadd.f32 0.0, %v1659
  %v1661 = vpop.f32.mrf.mxu0
  %v1662 = vadd.f32 0.0, %v1661
  %v1663 = vpop.f32.mrf.mxu0
  %v1664 = vadd.f32 0.0, %v1663
  %1665 = vmatprep.mubr.bf16.mxu0 0
  %1666 = vmatmul.mubr.bf16.gmra.mxu0 %v1572
  %v1667 = vpop.f32.mrf.mxu0
  %v1668 = vadd.f32 0.0, %v1667
  %v1669 = vpop.f32.mrf.mxu0
  %v1670 = vadd.f32 0.0, %v1669
  %v1671 = vpop.f32.mrf.mxu0
  %v1672 = vadd.f32 0.0, %v1671
  %v1673 = vpop.f32.mrf.mxu0
  %v1674 = vadd.f32 0.0, %v1673
  %1675 = vmatprep.mubr.bf16.mxu0 0
  %1676 = vmatmul.mubr.bf16.gmra.mxu0 %v1573
  %v1677 = vpop.f32.mrf.mxu0
  %v1678 = vadd.f32 0.0, %v1677
  %v1679 = vpop.f32.mrf.mxu0
  %v1680 = vadd.f32 0.0, %v1679
  %v1681 = vpop.f32.mrf.mxu0
  %v1682 = vadd.f32 0.0, %v1681
  %v1683 = vpop.f32.mrf.mxu0
  %v1684 = vadd.f32 0.0, %v1683
  %1685 = vmatprep.mubr.bf16.mxu0 0
  %1686 = vmatmul.mubr.bf16.gmra.mxu0 %v1574
  %v1687 = vpop.f32.mrf.mxu0
  %v1688 = vadd.f32 0.0, %v1687
  %v1689 = vpop.f32.mrf.mxu0
  %v1690 = vadd.f32 0.0, %v1689
  %v1691 = vpop.f32.mrf.mxu0
  %v1692 = vadd.f32 0.0, %v1691
  %v1693 = vpop.f32.mrf.mxu0
  %v1694 = vadd.f32 0.0, %v1693
  %1695 = vdwg.mxu0
  %1696 = vmatprep.subr.bf16.mxu0 %v1534
  %1697 = vmatpush1.bf16.msra.mxu0 %v1533
  %1698 = vmatprep.subr.bf16.mxu0 %v1530
  %1699 = vmatpush1.bf16.msra.mxu0 %v1529
  %1700 = vmatprep.subr.bf16.mxu0 %v1526
  %1701 = vmatpush1.bf16.msra.mxu0 %v1525
  %1702 = vmatprep.subr.bf16.mxu0 %v1522
  %1703 = vmatpush1.bf16.msra.mxu0 %v1521
  %1704 = vmatprep.subr.bf16.mxu0 %v1518
  %1705 = vmatpush1.bf16.msra.mxu0 %v1517
  %1706 = vmatprep.subr.bf16.mxu0 %v1514
  %1707 = vmatpush1.bf16.msra.mxu0 %v1513
  %1708 = vmatprep.subr.bf16.mxu0 %v1510
  %1709 = vmatpush1.bf16.msra.mxu0 %v1509
  %1710 = vmatprep.subr.bf16.mxu0 %v1506
  %1711 = vmatpush1.bf16.msra.mxu0 %v1505
  %1712 = vmatprep.subr.bf16.mxu0 0
  %1713 = vmatpush2.bf16.msra.mxu0 0
  %1714 = vmatprep.subr.bf16.mxu0 0
  %1715 = vmatpush2.bf16.msra.mxu0 0
  %1716 = vmatprep.subr.bf16.mxu0 0
  %1717 = vmatpush2.bf16.msra.mxu0 0
  %1718 = vmatprep.subr.bf16.mxu0 0
  %1719 = vmatpush2.bf16.msra.mxu0 0
  %1720 = vmatprep.subr.bf16.mxu0 0
  %1721 = vmatpush2.bf16.msra.mxu0 0
  %1722 = vmatprep.subr.bf16.mxu0 0
  %1723 = vmatpush2.bf16.msra.mxu0 0
  %1724 = vmatprep.subr.bf16.mxu0 0
  %1725 = vmatpush2.bf16.msra.mxu0 0
  %1726 = vmatprep.subr.bf16.mxu0 0
  %1727 = vmatpush2.bf16.msra.mxu0 0
  %1728 = vmatprep.mubr.bf16.mxu0 0
  %1729 = vmatmul.mubr.bf16.gmra.mxu0 %v1567
  %v1730 = vpop.f32.mrf.mxu0
  %v1731 = vadd.f32 0.0, %v1730
  %v1732 = vpop.f32.mrf.mxu0
  %v1733 = vadd.f32 0.0, %v1732
  %v1734 = vpop.f32.mrf.mxu0
  %v1735 = vadd.f32 0.0, %v1734
  %v1736 = vpop.f32.mrf.mxu0
  %v1737 = vadd.f32 0.0, %v1736
  %1738 = vmatprep.mubr.bf16.mxu0 0
  %1739 = vmatmul.mubr.bf16.gmra.mxu0 %v1568
  %v1740 = vpop.f32.mrf.mxu0
  %v1741 = vadd.f32 0.0, %v1740
  %v1742 = vpop.f32.mrf.mxu0
  %v1743 = vadd.f32 0.0, %v1742
  %v1744 = vpop.f32.mrf.mxu0
  %v1745 = vadd.f32 0.0, %v1744
  %v1746 = vpop.f32.mrf.mxu0
  %v1747 = vadd.f32 0.0, %v1746
  %1748 = vmatprep.mubr.bf16.mxu0 0
  %1749 = vmatmul.mubr.bf16.gmra.mxu0 %v1569
  %v1750 = vpop.f32.mrf.mxu0
  %v1751 = vadd.f32 0.0, %v1750
  %v1752 = vpop.f32.mrf.mxu0
  %v1753 = vadd.f32 0.0, %v1752
  %v1754 = vpop.f32.mrf.mxu0
  %v1755 = vadd.f32 0.0, %v1754
  %v1756 = vpop.f32.mrf.mxu0
  %v1757 = vadd.f32 0.0, %v1756
  %1758 = vmatprep.mubr.bf16.mxu0 0
  %1759 = vmatmul.mubr.bf16.gmra.mxu0 %v1570
  %v1760 = vpop.f32.mrf.mxu0
  %v1761 = vadd.f32 0.0, %v1760
  %v1762 = vpop.f32.mrf.mxu0
  %v1763 = vadd.f32 0.0, %v1762
  %v1764 = vpop.f32.mrf.mxu0
  %v1765 = vadd.f32 0.0, %v1764
  %v1766 = vpop.f32.mrf.mxu0
  %v1767 = vadd.f32 0.0, %v1766
  %1768 = vmatprep.mubr.bf16.mxu0 0
  %1769 = vmatmul.mubr.bf16.gmra.mxu0 %v1571
  %v1770 = vpop.f32.mrf.mxu0
  %v1771 = vadd.f32 0.0, %v1770
  %v1772 = vpop.f32.mrf.mxu0
  %v1773 = vadd.f32 0.0, %v1772
  %v1774 = vpop.f32.mrf.mxu0
  %v1775 = vadd.f32 0.0, %v1774
  %v1776 = vpop.f32.mrf.mxu0
  %v1777 = vadd.f32 0.0, %v1776
  %1778 = vmatprep.mubr.bf16.mxu0 0
  %1779 = vmatmul.mubr.bf16.gmra.mxu0 %v1572
  %v1780 = vpop.f32.mrf.mxu0
  %v1781 = vadd.f32 0.0, %v1780
  %v1782 = vpop.f32.mrf.mxu0
  %v1783 = vadd.f32 0.0, %v1782
  %v1784 = vpop.f32.mrf.mxu0
  %v1785 = vadd.f32 0.0, %v1784
  %v1786 = vpop.f32.mrf.mxu0
  %v1787 = vadd.f32 0.0, %v1786
  %1788 = vmatprep.mubr.bf16.mxu0 0
  %1789 = vmatmul.mubr.bf16.gmra.mxu0 %v1573
  %v1790 = vpop.f32.mrf.mxu0
  %v1791 = vadd.f32 0.0, %v1790
  %v1792 = vpop.f32.mrf.mxu0
  %v1793 = vadd.f32 0.0, %v1792
  %v1794 = vpop.f32.mrf.mxu0
  %v1795 = vadd.f32 0.0, %v1794
  %v1796 = vpop.f32.mrf.mxu0
  %v1797 = vadd.f32 0.0, %v1796
  %1798 = vmatprep.mubr.bf16.mxu0 0
  %1799 = vmatmul.mubr.bf16.gmra.mxu0 %v1574
  %v1800 = vpop.f32.mrf.mxu0
  %v1801 = vadd.f32 0.0, %v1800
  %v1802 = vpop.f32.mrf.mxu0
  %v1803 = vadd.f32 0.0, %v1802
  %v1804 = vpop.f32.mrf.mxu0
  %v1805 = vadd.f32 0.0, %v1804
  %v1806 = vpop.f32.mrf.mxu0
  %v1807 = vadd.f32 0.0, %v1806
  %1808 = vdwg.mxu0
  %v1809 = vmul.f32 %v1618, %v1394
  %v1810 = vmul.f32 %v1620, %v1394
  %v1811 = vmul.f32 %v1622, %v1399
  %v1812 = vmul.f32 %v1624, %v1399
  %v1813 = vmul.f32 %v1628, %v1404
  %v1814 = vmul.f32 %v1630, %v1404
  %v1815 = vmul.f32 %v1632, %v1409
  %v1816 = vmul.f32 %v1634, %v1409
  %v1817 = vmul.f32 %v1638, %v1414
  %v1818 = vmul.f32 %v1640, %v1414
  %v1819 = vmul.f32 %v1642, %v1419
  %v1820 = vmul.f32 %v1644, %v1419
  %v1821 = vmul.f32 %v1648, %v1424
  %v1822 = vmul.f32 %v1650, %v1424
  %v1823 = vmul.f32 %v1652, %v1429
  %v1824 = vmul.f32 %v1654, %v1429
  %v1825 = vmul.f32 %v1658, %v1434
  %v1826 = vmul.f32 %v1660, %v1434
  %v1827 = vmul.f32 %v1662, %v1439
  %v1828 = vmul.f32 %v1664, %v1439
  %v1829 = vmul.f32 %v1668, %v1444
  %v1830 = vmul.f32 %v1670, %v1444
  %v1831 = vmul.f32 %v1672, %v1449
  %v1832 = vmul.f32 %v1674, %v1449
  %v1833 = vmul.f32 %v1678, %v1454
  %v1834 = vmul.f32 %v1680, %v1454
  %v1835 = vmul.f32 %v1682, %v1459
  %v1836 = vmul.f32 %v1684, %v1459
  %v1837 = vmul.f32 %v1688, %v1464
  %v1838 = vmul.f32 %v1690, %v1464
  %v1839 = vmul.f32 %v1692, %v1469
  %v1840 = vmul.f32 %v1694, %v1469
  %v1841 = vld [vmem:[%s15] sm:$0x3]
  %v1843 = vlaneseq
  %v1844 = vshrl.u32 %v1843, 7
  %v1845 = vsub.s32 0, %v1844
  %v1846 = vrot.slane %v1841, %v1845
  %v1847 = vlaneseq
  %v1848 = vshrl.u32 %v1847, 7
  %v1849 = vsub.s32 1, %v1848
  %v1850 = vrot.slane %v1841, %v1849
  %v1853 = vadd.f32 %v1809, %v1846
  %v1854 = vadd.f32 %v1810, %v1850
  %v1855 = vadd.f32 %v1811, %v1846
  %v1856 = vadd.f32 %v1812, %v1850
  %v1857 = vadd.f32 %v1813, %v1846
  %v1858 = vadd.f32 %v1814, %v1850
  %v1859 = vadd.f32 %v1815, %v1846
  %v1860 = vadd.f32 %v1816, %v1850
  %v1861 = vadd.f32 %v1817, %v1846
  %v1862 = vadd.f32 %v1818, %v1850
  %v1863 = vadd.f32 %v1819, %v1846
  %v1864 = vadd.f32 %v1820, %v1850
  %v1865 = vadd.f32 %v1821, %v1846
  %v1866 = vadd.f32 %v1822, %v1850
  %v1867 = vadd.f32 %v1823, %v1846
  %v1868 = vadd.f32 %v1824, %v1850
  %v1869 = vadd.f32 %v1825, %v1846
  %v1870 = vadd.f32 %v1826, %v1850
  %v1871 = vadd.f32 %v1827, %v1846
  %v1872 = vadd.f32 %v1828, %v1850
  %v1873 = vadd.f32 %v1829, %v1846
  %v1874 = vadd.f32 %v1830, %v1850
  %v1875 = vadd.f32 %v1831, %v1846
  %v1876 = vadd.f32 %v1832, %v1850
  %v1877 = vadd.f32 %v1833, %v1846
  %v1878 = vadd.f32 %v1834, %v1850
  %v1879 = vadd.f32 %v1835, %v1846
  %v1880 = vadd.f32 %v1836, %v1850
  %v1881 = vadd.f32 %v1837, %v1846
  %v1882 = vadd.f32 %v1838, %v1850
  %v1883 = vadd.f32 %v1839, %v1846
  %v1884 = vadd.f32 %v1840, %v1850
  %v1885 = vmax.f32 %v1853, 0.0
  %v1886 = vmax.f32 %v1854, 0.0
  %v1887 = vmax.f32 %v1855, 0.0
  %v1888 = vmax.f32 %v1856, 0.0
  %v1889 = vmax.f32 %v1857, 0.0
  %v1890 = vmax.f32 %v1858, 0.0
  %v1891 = vmax.f32 %v1859, 0.0
  %v1892 = vmax.f32 %v1860, 0.0
  %v1893 = vmax.f32 %v1861, 0.0
  %v1894 = vmax.f32 %v1862, 0.0
  %v1895 = vmax.f32 %v1863, 0.0
  %v1896 = vmax.f32 %v1864, 0.0
  %v1897 = vmax.f32 %v1865, 0.0
  %v1898 = vmax.f32 %v1866, 0.0
  %v1899 = vmax.f32 %v1867, 0.0
  %v1900 = vmax.f32 %v1868, 0.0
  %v1901 = vmax.f32 %v1869, 0.0
  %v1902 = vmax.f32 %v1870, 0.0
  %v1903 = vmax.f32 %v1871, 0.0
  %v1904 = vmax.f32 %v1872, 0.0
  %v1905 = vmax.f32 %v1873, 0.0
  %v1906 = vmax.f32 %v1874, 0.0
  %v1907 = vmax.f32 %v1875, 0.0
  %v1908 = vmax.f32 %v1876, 0.0
  %v1909 = vmax.f32 %v1877, 0.0
  %v1910 = vmax.f32 %v1878, 0.0
  %v1911 = vmax.f32 %v1879, 0.0
  %v1912 = vmax.f32 %v1880, 0.0
  %v1913 = vmax.f32 %v1881, 0.0
  %v1914 = vmax.f32 %v1882, 0.0
  %v1915 = vmax.f32 %v1883, 0.0
  %v1916 = vmax.f32 %v1884, 0.0
  %v1917 = vpack.c.bf16 %v1887, %v1885
  %v1918 = vpack.c.bf16 %v1888, %v1886
  %v1919 = vpack.c.bf16 %v1891, %v1889
  %v1920 = vpack.c.bf16 %v1892, %v1890
  %v1921 = vpack.c.bf16 %v1895, %v1893
  %v1922 = vpack.c.bf16 %v1896, %v1894
  %v1923 = vpack.c.bf16 %v1899, %v1897
  %v1924 = vpack.c.bf16 %v1900, %v1898
  %v1925 = vpack.c.bf16 %v1903, %v1901
  %v1926 = vpack.c.bf16 %v1904, %v1902
  %v1927 = vpack.c.bf16 %v1907, %v1905
  %v1928 = vpack.c.bf16 %v1908, %v1906
  %v1929 = vpack.c.bf16 %v1911, %v1909
  %v1930 = vpack.c.bf16 %v1912, %v1910
  %v1931 = vpack.c.bf16 %v1915, %v1913
  %v1932 = vpack.c.bf16 %v1916, %v1914
  %v1933 = vld [vmem:[%s17] sm:$0x3]
  %v1935 = vlaneseq
  %v1936 = vshrl.u32 %v1935, 7
  %v1937 = vsub.s32 0, %v1936
  %v1938 = vrot.slane %v1933, %v1937
  %v1939 = vlaneseq
  %v1940 = vshrl.u32 %v1939, 7
  %v1941 = vsub.s32 1, %v1940
  %v1942 = vrot.slane %v1933, %v1941
  %v1945 = vadd.f32 %v1731, %v1938
  %v1946 = vadd.f32 %v1733, %v1942
  %v1947 = vadd.f32 %v1735, %v1938
  %v1948 = vadd.f32 %v1737, %v1942
  %v1949 = vadd.f32 %v1741, %v1938
  %v1950 = vadd.f32 %v1743, %v1942
  %v1951 = vadd.f32 %v1745, %v1938
  %v1952 = vadd.f32 %v1747, %v1942
  %v1953 = vadd.f32 %v1751, %v1938
  %v1954 = vadd.f32 %v1753, %v1942
  %v1955 = vadd.f32 %v1755, %v1938
  %v1956 = vadd.f32 %v1757, %v1942
  %v1957 = vadd.f32 %v1761, %v1938
  %v1958 = vadd.f32 %v1763, %v1942
  %v1959 = vadd.f32 %v1765, %v1938
  %v1960 = vadd.f32 %v1767, %v1942
  %v1961 = vadd.f32 %v1771, %v1938
  %v1962 = vadd.f32 %v1773, %v1942
  %v1963 = vadd.f32 %v1775, %v1938
  %v1964 = vadd.f32 %v1777, %v1942
  %v1965 = vadd.f32 %v1781, %v1938
  %v1966 = vadd.f32 %v1783, %v1942
  %v1967 = vadd.f32 %v1785, %v1938
  %v1968 = vadd.f32 %v1787, %v1942
  %v1969 = vadd.f32 %v1791, %v1938
  %v1970 = vadd.f32 %v1793, %v1942
  %v1971 = vadd.f32 %v1795, %v1938
  %v1972 = vadd.f32 %v1797, %v1942
  %v1973 = vadd.f32 %v1801, %v1938
  %v1974 = vadd.f32 %v1803, %v1942
  %v1975 = vadd.f32 %v1805, %v1938
  %v1976 = vadd.f32 %v1807, %v1942
  %v1977 = vmax.f32 %v1945, 0.0
  %v1978 = vmax.f32 %v1946, 0.0
  %v1979 = vmax.f32 %v1947, 0.0
  %v1980 = vmax.f32 %v1948, 0.0
  %v1981 = vmax.f32 %v1949, 0.0
  %v1982 = vmax.f32 %v1950, 0.0
  %v1983 = vmax.f32 %v1951, 0.0
  %v1984 = vmax.f32 %v1952, 0.0
  %v1985 = vmax.f32 %v1953, 0.0
  %v1986 = vmax.f32 %v1954, 0.0
  %v1987 = vmax.f32 %v1955, 0.0
  %v1988 = vmax.f32 %v1956, 0.0
  %v1989 = vmax.f32 %v1957, 0.0
  %v1990 = vmax.f32 %v1958, 0.0
  %v1991 = vmax.f32 %v1959, 0.0
  %v1992 = vmax.f32 %v1960, 0.0
  %v1993 = vmax.f32 %v1961, 0.0
  %v1994 = vmax.f32 %v1962, 0.0
  %v1995 = vmax.f32 %v1963, 0.0
  %v1996 = vmax.f32 %v1964, 0.0
  %v1997 = vmax.f32 %v1965, 0.0
  %v1998 = vmax.f32 %v1966, 0.0
  %v1999 = vmax.f32 %v1967, 0.0
  %v2000 = vmax.f32 %v1968, 0.0
  %v2001 = vmax.f32 %v1969, 0.0
  %v2002 = vmax.f32 %v1970, 0.0
  %v2003 = vmax.f32 %v1971, 0.0
  %v2004 = vmax.f32 %v1972, 0.0
  %v2005 = vmax.f32 %v1973, 0.0
  %v2006 = vmax.f32 %v1974, 0.0
  %v2007 = vmax.f32 %v1975, 0.0
  %v2008 = vmax.f32 %v1976, 0.0
  %v2009 = vpack.c.bf16 %v1979, %v1977
  %v2010 = vpack.c.bf16 %v1980, %v1978
  %v2011 = vpack.c.bf16 %v1983, %v1981
  %v2012 = vpack.c.bf16 %v1984, %v1982
  %v2013 = vpack.c.bf16 %v1987, %v1985
  %v2014 = vpack.c.bf16 %v1988, %v1986
  %v2015 = vpack.c.bf16 %v1991, %v1989
  %v2016 = vpack.c.bf16 %v1992, %v1990
  %v2017 = vpack.c.bf16 %v1995, %v1993
  %v2018 = vpack.c.bf16 %v1996, %v1994
  %v2019 = vpack.c.bf16 %v1999, %v1997
  %v2020 = vpack.c.bf16 %v2000, %v1998
  %v2021 = vpack.c.bf16 %v2003, %v2001
  %v2022 = vpack.c.bf16 %v2004, %v2002
  %v2023 = vpack.c.bf16 %v2007, %v2005
  %v2024 = vpack.c.bf16 %v2008, %v2006
  %v2025 = vld [vmem:[%s19] sm:$0xff]
  %v2026 = vld [vmem:[%s19 + $0x8] sm:$0xff]
  %v2027 = vld [vmem:[%s19 + $0x10] sm:$0xff]
  %v2028 = vld [vmem:[%s19 + $0x18] sm:$0xff]
  %v2029 = vld [vmem:[%s19 + $0x20] sm:$0xff]
  %v2030 = vld [vmem:[%s19 + $0x28] sm:$0xff]
  %v2031 = vld [vmem:[%s19 + $0x30] sm:$0xff]
  %v2032 = vld [vmem:[%s19 + $0x38] sm:$0xff]
  %v2033 = vld [vmem:[%s19 + $0x40] sm:$0xff]
  %v2034 = vld [vmem:[%s19 + $0x48] sm:$0xff]
  %v2035 = vld [vmem:[%s19 + $0x50] sm:$0xff]
  %v2036 = vld [vmem:[%s19 + $0x58] sm:$0xff]
  %v2037 = vld [vmem:[%s19 + $0x60] sm:$0xff]
  %v2038 = vld [vmem:[%s19 + $0x68] sm:$0xff]
  %v2039 = vld [vmem:[%s19 + $0x70] sm:$0xff]
  %v2040 = vld [vmem:[%s19 + $0x78] sm:$0xff]
  %v2041 = vld [vmem:[%s19 + $0x80] sm:$0xff]
  %v2042 = vld [vmem:[%s19 + $0x88] sm:$0xff]
  %v2043 = vld [vmem:[%s19 + $0x90] sm:$0xff]
  %v2044 = vld [vmem:[%s19 + $0x98] sm:$0xff]
  %v2045 = vld [vmem:[%s19 + $0xa0] sm:$0xff]
  %v2046 = vld [vmem:[%s19 + $0xa8] sm:$0xff]
  %v2047 = vld [vmem:[%s19 + $0xb0] sm:$0xff]
  %v2048 = vld [vmem:[%s19 + $0xb8] sm:$0xff]
  %v2049 = vld [vmem:[%s19 + $0xc0] sm:$0xff]
  %v2050 = vld [vmem:[%s19 + $0xc8] sm:$0xff]
  %v2051 = vld [vmem:[%s19 + $0xd0] sm:$0xff]
  %v2052 = vld [vmem:[%s19 + $0xd8] sm:$0xff]
  %v2053 = vld [vmem:[%s19 + $0xe0] sm:$0xff]
  %v2054 = vld [vmem:[%s19 + $0xe8] sm:$0xff]
  %v2055 = vld [vmem:[%s19 + $0xf0] sm:$0xff]
  %v2056 = vld [vmem:[%s19 + $0xf8] sm:$0xff]
  %v2057 = vld [vmem:[%s21] sm:$0x3]
  %v2059 = vlaneseq
  %v2060 = vshrl.u32 %v2059, 7
  %v2061 = vsub.s32 0, %v2060
  %v2062 = vrot.slane %v2057, %v2061
  %v2063 = vlaneseq
  %v2064 = vshrl.u32 %v2063, 7
  %v2065 = vsub.s32 1, %v2064
  %v2066 = vrot.slane %v2057, %v2065
  %v2101 = vunpack.c.l.b16 %v2025
  %v2102 = vunpack.c.h.b16 %v2025
  %v2103 = vunpack.c.l.b16 %v2026
  %v2104 = vunpack.c.h.b16 %v2026
  %v2105 = vunpack.c.l.b16 %v2027
  %v2106 = vunpack.c.h.b16 %v2027
  %v2107 = vunpack.c.l.b16 %v2028
  %v2108 = vunpack.c.h.b16 %v2028
  %v2109 = vunpack.c.l.b16 %v2029
  %v2110 = vunpack.c.h.b16 %v2029
  %v2111 = vunpack.c.l.b16 %v2030
  %v2112 = vunpack.c.h.b16 %v2030
  %v2113 = vunpack.c.l.b16 %v2031
  %v2114 = vunpack.c.h.b16 %v2031
  %v2115 = vunpack.c.l.b16 %v2032
  %v2116 = vunpack.c.h.b16 %v2032
  %v2117 = vunpack.c.l.b16 %v2033
  %v2118 = vunpack.c.h.b16 %v2033
  %v2119 = vunpack.c.l.b16 %v2034
  %v2120 = vunpack.c.h.b16 %v2034
  %v2121 = vunpack.c.l.b16 %v2035
  %v2122 = vunpack.c.h.b16 %v2035
  %v2123 = vunpack.c.l.b16 %v2036
  %v2124 = vunpack.c.h.b16 %v2036
  %v2125 = vunpack.c.l.b16 %v2037
  %v2126 = vunpack.c.h.b16 %v2037
  %v2127 = vunpack.c.l.b16 %v2038
  %v2128 = vunpack.c.h.b16 %v2038
  %v2129 = vunpack.c.l.b16 %v2039
  %v2130 = vunpack.c.h.b16 %v2039
  %v2131 = vunpack.c.l.b16 %v2040
  %v2132 = vunpack.c.h.b16 %v2040
  %v2133 = vunpack.c.l.b16 %v2041
  %v2134 = vunpack.c.h.b16 %v2041
  %v2135 = vunpack.c.l.b16 %v2042
  %v2136 = vunpack.c.h.b16 %v2042
  %v2137 = vunpack.c.l.b16 %v2043
  %v2138 = vunpack.c.h.b16 %v2043
  %v2139 = vunpack.c.l.b16 %v2044
  %v2140 = vunpack.c.h.b16 %v2044
  %v2141 = vunpack.c.l.b16 %v2045
  %v2142 = vunpack.c.h.b16 %v2045
  %v2143 = vunpack.c.l.b16 %v2046
  %v2144 = vunpack.c.h.b16 %v2046
  %v2145 = vunpack.c.l.b16 %v2047
  %v2146 = vunpack.c.h.b16 %v2047
  %v2147 = vunpack.c.l.b16 %v2048
  %v2148 = vunpack.c.h.b16 %v2048
  %v2149 = vunpack.c.l.b16 %v2049
  %v2150 = vunpack.c.h.b16 %v2049
  %v2151 = vunpack.c.l.b16 %v2050
  %v2152 = vunpack.c.h.b16 %v2050
  %v2153 = vunpack.c.l.b16 %v2051
  %v2154 = vunpack.c.h.b16 %v2051
  %v2155 = vunpack.c.l.b16 %v2052
  %v2156 = vunpack.c.h.b16 %v2052
  %v2157 = vunpack.c.l.b16 %v2053
  %v2158 = vunpack.c.h.b16 %v2053
  %v2159 = vunpack.c.l.b16 %v2054
  %v2160 = vunpack.c.h.b16 %v2054
  %v2161 = vunpack.c.l.b16 %v2055
  %v2162 = vunpack.c.h.b16 %v2055
  %v2163 = vunpack.c.l.b16 %v2056
  %v2164 = vunpack.c.h.b16 %v2056
  %v2165 = vpack.c.b16 %v2103, %v2101
  %v2166 = vpack.c.b16 %v2104, %v2102
  %v2167 = vpack.c.b16 %v2107, %v2105
  %v2168 = vpack.c.b16 %v2108, %v2106
  %v2169 = vpack.c.b16 %v2111, %v2109
  %v2170 = vpack.c.b16 %v2112, %v2110
  %v2171 = vpack.c.b16 %v2115, %v2113
  %v2172 = vpack.c.b16 %v2116, %v2114
  %v2173 = vpack.c.b16 %v2119, %v2117
  %v2174 = vpack.c.b16 %v2120, %v2118
  %v2175 = vpack.c.b16 %v2123, %v2121
  %v2176 = vpack.c.b16 %v2124, %v2122
  %v2177 = vpack.c.b16 %v2127, %v2125
  %v2178 = vpack.c.b16 %v2128, %v2126
  %v2179 = vpack.c.b16 %v2131, %v2129
  %v2180 = vpack.c.b16 %v2132, %v2130
  %v2181 = vpack.c.b16 %v2135, %v2133
  %v2182 = vpack.c.b16 %v2136, %v2134
  %v2183 = vpack.c.b16 %v2139, %v2137
  %v2184 = vpack.c.b16 %v2140, %v2138
  %v2185 = vpack.c.b16 %v2143, %v2141
  %v2186 = vpack.c.b16 %v2144, %v2142
  %v2187 = vpack.c.b16 %v2147, %v2145
  %v2188 = vpack.c.b16 %v2148, %v2146
  %v2189 = vpack.c.b16 %v2151, %v2149
  %v2190 = vpack.c.b16 %v2152, %v2150
  %v2191 = vpack.c.b16 %v2155, %v2153
  %v2192 = vpack.c.b16 %v2156, %v2154
  %v2193 = vpack.c.b16 %v2159, %v2157
  %v2194 = vpack.c.b16 %v2160, %v2158
  %v2195 = vpack.c.b16 %v2163, %v2161
  %v2196 = vpack.c.b16 %v2164, %v2162
  %2229 = vmatprep.subr.bf16.mxu0 %v2180
  %2230 = vmatpush1.bf16.msra.mxu0 %v2179
  %2231 = vmatprep.subr.bf16.mxu0 %v2178
  %2232 = vmatpush1.bf16.msra.mxu0 %v2177
  %2233 = vmatprep.subr.bf16.mxu0 %v2176
  %2234 = vmatpush1.bf16.msra.mxu0 %v2175
  %2235 = vmatprep.subr.bf16.mxu0 %v2174
  %2236 = vmatpush1.bf16.msra.mxu0 %v2173
  %2237 = vmatprep.subr.bf16.mxu0 %v2172
  %2238 = vmatpush1.bf16.msra.mxu0 %v2171
  %2239 = vmatprep.subr.bf16.mxu0 %v2170
  %2240 = vmatpush1.bf16.msra.mxu0 %v2169
  %2241 = vmatprep.subr.bf16.mxu0 %v2168
  %2242 = vmatpush1.bf16.msra.mxu0 %v2167
  %2243 = vmatprep.subr.bf16.mxu0 %v2166
  %2244 = vmatpush1.bf16.msra.mxu0 %v2165
  %2245 = vmatprep.subr.bf16.mxu0 %v2196
  %2246 = vmatpush2.bf16.msra.mxu0 %v2195
  %2247 = vmatprep.subr.bf16.mxu0 %v2194
  %2248 = vmatpush2.bf16.msra.mxu0 %v2193
  %2249 = vmatprep.subr.bf16.mxu0 %v2192
  %2250 = vmatpush2.bf16.msra.mxu0 %v2191
  %2251 = vmatprep.subr.bf16.mxu0 %v2190
  %2252 = vmatpush2.bf16.msra.mxu0 %v2189
  %2253 = vmatprep.subr.bf16.mxu0 %v2188
  %2254 = vmatpush2.bf16.msra.mxu0 %v2187
  %2255 = vmatprep.subr.bf16.mxu0 %v2186
  %2256 = vmatpush2.bf16.msra.mxu0 %v2185
  %2257 = vmatprep.subr.bf16.mxu0 %v2184
  %2258 = vmatpush2.bf16.msra.mxu0 %v2183
  %2259 = vmatprep.subr.bf16.mxu0 %v2182
  %2260 = vmatpush2.bf16.msra.mxu0 %v2181
  %2261 = vmatprep.mubr.bf16.mxu0 %v2010
  %2262 = vmatmul.mubr.bf16.gmra.mxu0 %v2009
  %v2263 = vpop.f32.mrf.mxu0
  %v2264 = vadd.f32 %v2062, %v2263
  %v2265 = vpop.f32.mrf.mxu0
  %v2266 = vadd.f32 %v2066, %v2265
  %v2267 = vpop.f32.mrf.mxu0
  %v2268 = vadd.f32 %v2062, %v2267
  %v2269 = vpop.f32.mrf.mxu0
  %v2270 = vadd.f32 %v2066, %v2269
  %2271 = vmatprep.mubr.bf16.mxu0 %v2012
  %2272 = vmatmul.mubr.bf16.gmra.mxu0 %v2011
  %v2273 = vpop.f32.mrf.mxu0
  %v2274 = vadd.f32 %v2062, %v2273
  %v2275 = vpop.f32.mrf.mxu0
  %v2276 = vadd.f32 %v2066, %v2275
  %v2277 = vpop.f32.mrf.mxu0
  %v2278 = vadd.f32 %v2062, %v2277
  %v2279 = vpop.f32.mrf.mxu0
  %v2280 = vadd.f32 %v2066, %v2279
  %2281 = vmatprep.mubr.bf16.mxu0 %v2014
  %2282 = vmatmul.mubr.bf16.gmra.mxu0 %v2013
  %v2283 = vpop.f32.mrf.mxu0
  %v2284 = vadd.f32 %v2062, %v2283
  %v2285 = vpop.f32.mrf.mxu0
  %v2286 = vadd.f32 %v2066, %v2285
  %v2287 = vpop.f32.mrf.mxu0
  %v2288 = vadd.f32 %v2062, %v2287
  %v2289 = vpop.f32.mrf.mxu0
  %v2290 = vadd.f32 %v2066, %v2289
  %2291 = vmatprep.mubr.bf16.mxu0 %v2016
  %2292 = vmatmul.mubr.bf16.gmra.mxu0 %v2015
  %v2293 = vpop.f32.mrf.mxu0
  %v2294 = vadd.f32 %v2062, %v2293
  %v2295 = vpop.f32.mrf.mxu0
  %v2296 = vadd.f32 %v2066, %v2295
  %v2297 = vpop.f32.mrf.mxu0
  %v2298 = vadd.f32 %v2062, %v2297
  %v2299 = vpop.f32.mrf.mxu0
  %v2300 = vadd.f32 %v2066, %v2299
  %2301 = vmatprep.mubr.bf16.mxu0 %v2018
  %2302 = vmatmul.mubr.bf16.gmra.mxu0 %v2017
  %v2303 = vpop.f32.mrf.mxu0
  %v2304 = vadd.f32 %v2062, %v2303
  %v2305 = vpop.f32.mrf.mxu0
  %v2306 = vadd.f32 %v2066, %v2305
  %v2307 = vpop.f32.mrf.mxu0
  %v2308 = vadd.f32 %v2062, %v2307
  %v2309 = vpop.f32.mrf.mxu0
  %v2310 = vadd.f32 %v2066, %v2309
  %2311 = vmatprep.mubr.bf16.mxu0 %v2020
  %2312 = vmatmul.mubr.bf16.gmra.mxu0 %v2019
  %v2313 = vpop.f32.mrf.mxu0
  %v2314 = vadd.f32 %v2062, %v2313
  %v2315 = vpop.f32.mrf.mxu0
  %v2316 = vadd.f32 %v2066, %v2315
  %v2317 = vpop.f32.mrf.mxu0
  %v2318 = vadd.f32 %v2062, %v2317
  %v2319 = vpop.f32.mrf.mxu0
  %v2320 = vadd.f32 %v2066, %v2319
  %2321 = vmatprep.mubr.bf16.mxu0 %v2022
  %2322 = vmatmul.mubr.bf16.gmra.mxu0 %v2021
  %v2323 = vpop.f32.mrf.mxu0
  %v2324 = vadd.f32 %v2062, %v2323
  %v2325 = vpop.f32.mrf.mxu0
  %v2326 = vadd.f32 %v2066, %v2325
  %v2327 = vpop.f32.mrf.mxu0
  %v2328 = vadd.f32 %v2062, %v2327
  %v2329 = vpop.f32.mrf.mxu0
  %v2330 = vadd.f32 %v2066, %v2329
  %2331 = vmatprep.mubr.bf16.mxu0 %v2024
  %2332 = vmatmul.mubr.bf16.gmra.mxu0 %v2023
  %v2333 = vpop.f32.mrf.mxu0
  %v2334 = vadd.f32 %v2062, %v2333
  %v2335 = vpop.f32.mrf.mxu0
  %v2336 = vadd.f32 %v2066, %v2335
  %v2337 = vpop.f32.mrf.mxu0
  %v2338 = vadd.f32 %v2062, %v2337
  %v2339 = vpop.f32.mrf.mxu0
  %v2340 = vadd.f32 %v2066, %v2339
  %2341 = vdwg.mxu0
  %v2342 = vmax.f32 %v2264, 0.0
  %v2343 = vmax.f32 %v2266, 0.0
  %v2344 = vmax.f32 %v2268, 0.0
  %v2345 = vmax.f32 %v2270, 0.0
  %v2346 = vmax.f32 %v2274, 0.0
  %v2347 = vmax.f32 %v2276, 0.0
  %v2348 = vmax.f32 %v2278, 0.0
  %v2349 = vmax.f32 %v2280, 0.0
  %v2350 = vmax.f32 %v2284, 0.0
  %v2351 = vmax.f32 %v2286, 0.0
  %v2352 = vmax.f32 %v2288, 0.0
  %v2353 = vmax.f32 %v2290, 0.0
  %v2354 = vmax.f32 %v2294, 0.0
  %v2355 = vmax.f32 %v2296, 0.0
  %v2356 = vmax.f32 %v2298, 0.0
  %v2357 = vmax.f32 %v2300, 0.0
  %v2358 = vmax.f32 %v2304, 0.0
  %v2359 = vmax.f32 %v2306, 0.0
  %v2360 = vmax.f32 %v2308, 0.0
  %v2361 = vmax.f32 %v2310, 0.0
  %v2362 = vmax.f32 %v2314, 0.0
  %v2363 = vmax.f32 %v2316, 0.0
  %v2364 = vmax.f32 %v2318, 0.0
  %v2365 = vmax.f32 %v2320, 0.0
  %v2366 = vmax.f32 %v2324, 0.0
  %v2367 = vmax.f32 %v2326, 0.0
  %v2368 = vmax.f32 %v2328, 0.0
  %v2369 = vmax.f32 %v2330, 0.0
  %v2370 = vmax.f32 %v2334, 0.0
  %v2371 = vmax.f32 %v2336, 0.0
  %v2372 = vmax.f32 %v2338, 0.0
  %v2373 = vmax.f32 %v2340, 0.0
  %v2374 = vpack.c.bf16 %v2344, %v2342
  %v2375 = vpack.c.bf16 %v2345, %v2343
  %v2376 = vpack.c.bf16 %v2348, %v2346
  %v2377 = vpack.c.bf16 %v2349, %v2347
  %v2378 = vpack.c.bf16 %v2352, %v2350
  %v2379 = vpack.c.bf16 %v2353, %v2351
  %v2380 = vpack.c.bf16 %v2356, %v2354
  %v2381 = vpack.c.bf16 %v2357, %v2355
  %v2382 = vpack.c.bf16 %v2360, %v2358
  %v2383 = vpack.c.bf16 %v2361, %v2359
  %v2384 = vpack.c.bf16 %v2364, %v2362
  %v2385 = vpack.c.bf16 %v2365, %v2363
  %v2386 = vpack.c.bf16 %v2368, %v2366
  %v2387 = vpack.c.bf16 %v2369, %v2367
  %v2388 = vpack.c.bf16 %v2372, %v2370
  %v2389 = vpack.c.bf16 %v2373, %v2371
  %v2390 = vld [vmem:[%s23] sm:$0xf]
  %v2391 = vld [vmem:[%s23 + $0x4] sm:$0xf]
  %v2392 = vld [vmem:[%s23 + $0x8] sm:$0xf]
  %v2393 = vld [vmem:[%s23 + $0xc] sm:$0xf]
  %v2394 = vld [vmem:[%s23 + $0x10] sm:$0xf]
  %v2395 = vld [vmem:[%s23 + $0x14] sm:$0xf]
  %v2396 = vld [vmem:[%s23 + $0x18] sm:$0xf]
  %v2397 = vld [vmem:[%s23 + $0x1c] sm:$0xf]
  %v2398 = vld [vmem:[%s23 + $0x20] sm:$0xf]
  %v2399 = vld [vmem:[%s23 + $0x24] sm:$0xf]
  %v2400 = vld [vmem:[%s23 + $0x28] sm:$0xf]
  %v2401 = vld [vmem:[%s23 + $0x2c] sm:$0xf]
  %v2402 = vld [vmem:[%s23 + $0x30] sm:$0xf]
  %v2403 = vld [vmem:[%s23 + $0x34] sm:$0xf]
  %v2404 = vld [vmem:[%s23 + $0x38] sm:$0xf]
  %v2405 = vld [vmem:[%s23 + $0x3c] sm:$0xf]
  %v2406 = vld [vmem:[%s23 + $0x40] sm:$0xf]
  %v2407 = vld [vmem:[%s23 + $0x44] sm:$0xf]
  %v2408 = vld [vmem:[%s23 + $0x48] sm:$0xf]
  %v2409 = vld [vmem:[%s23 + $0x4c] sm:$0xf]
  %v2410 = vld [vmem:[%s23 + $0x50] sm:$0xf]
  %v2411 = vld [vmem:[%s23 + $0x54] sm:$0xf]
  %v2412 = vld [vmem:[%s23 + $0x58] sm:$0xf]
  %v2413 = vld [vmem:[%s23 + $0x5c] sm:$0xf]
  %v2414 = vld [vmem:[%s23 + $0x60] sm:$0xf]
  %v2415 = vld [vmem:[%s23 + $0x64] sm:$0xf]
  %v2416 = vld [vmem:[%s23 + $0x68] sm:$0xf]
  %v2417 = vld [vmem:[%s23 + $0x6c] sm:$0xf]
  %v2418 = vld [vmem:[%s23 + $0x70] sm:$0xf]
  %v2419 = vld [vmem:[%s23 + $0x74] sm:$0xf]
  %v2420 = vld [vmem:[%s23 + $0x78] sm:$0xf]
  %v2421 = vld [vmem:[%s23 + $0x7c] sm:$0xf]
  %v2454 = vunpack.c.l.b16 %v2390
  %v2455 = vunpack.c.l.b16 %v2391
  %v2456 = vunpack.c.l.b16 %v2392
  %v2457 = vunpack.c.l.b16 %v2393
  %v2458 = vunpack.c.l.b16 %v2394
  %v2459 = vunpack.c.l.b16 %v2395
  %v2460 = vunpack.c.l.b16 %v2396
  %v2461 = vunpack.c.l.b16 %v2397
  %v2462 = vunpack.c.l.b16 %v2398
  %v2463 = vunpack.c.l.b16 %v2399
  %v2464 = vunpack.c.l.b16 %v2400
  %v2465 = vunpack.c.l.b16 %v2401
  %v2466 = vunpack.c.l.b16 %v2402
  %v2467 = vunpack.c.l.b16 %v2403
  %v2468 = vunpack.c.l.b16 %v2404
  %v2469 = vunpack.c.l.b16 %v2405
  %v2470 = vunpack.c.l.b16 %v2406
  %v2471 = vunpack.c.l.b16 %v2407
  %v2472 = vunpack.c.l.b16 %v2408
  %v2473 = vunpack.c.l.b16 %v2409
  %v2474 = vunpack.c.l.b16 %v2410
  %v2475 = vunpack.c.l.b16 %v2411
  %v2476 = vunpack.c.l.b16 %v2412
  %v2477 = vunpack.c.l.b16 %v2413
  %v2478 = vunpack.c.l.b16 %v2414
  %v2479 = vunpack.c.l.b16 %v2415
  %v2480 = vunpack.c.l.b16 %v2416
  %v2481 = vunpack.c.l.b16 %v2417
  %v2482 = vunpack.c.l.b16 %v2418
  %v2483 = vunpack.c.l.b16 %v2419
  %v2484 = vunpack.c.l.b16 %v2420
  %v2485 = vunpack.c.l.b16 %v2421
  %v2486 = vpack.c.b16 %v2455, %v2454
  %v2487 = vpack.c.b16 %v2457, %v2456
  %v2488 = vpack.c.b16 %v2459, %v2458
  %v2489 = vpack.c.b16 %v2461, %v2460
  %v2490 = vpack.c.b16 %v2463, %v2462
  %v2491 = vpack.c.b16 %v2465, %v2464
  %v2492 = vpack.c.b16 %v2467, %v2466
  %v2493 = vpack.c.b16 %v2469, %v2468
  %v2494 = vpack.c.b16 %v2471, %v2470
  %v2495 = vpack.c.b16 %v2473, %v2472
  %v2496 = vpack.c.b16 %v2475, %v2474
  %v2497 = vpack.c.b16 %v2477, %v2476
  %v2498 = vpack.c.b16 %v2479, %v2478
  %v2499 = vpack.c.b16 %v2481, %v2480
  %v2500 = vpack.c.b16 %v2483, %v2482
  %v2501 = vpack.c.b16 %v2485, %v2484
  %2518 = vmatprep.subr.bf16.mxu0 0
  %2519 = vmatpush1.bf16.msra.mxu0 %v2493
  %2520 = vmatprep.subr.bf16.mxu0 0
  %2521 = vmatpush1.bf16.msra.mxu0 %v2492
  %2522 = vmatprep.subr.bf16.mxu0 0
  %2523 = vmatpush1.bf16.msra.mxu0 %v2491
  %2524 = vmatprep.subr.bf16.mxu0 0
  %2525 = vmatpush1.bf16.msra.mxu0 %v2490
  %2526 = vmatprep.subr.bf16.mxu0 0
  %2527 = vmatpush1.bf16.msra.mxu0 %v2489
  %2528 = vmatprep.subr.bf16.mxu0 0
  %2529 = vmatpush1.bf16.msra.mxu0 %v2488
  %2530 = vmatprep.subr.bf16.mxu0 0
  %2531 = vmatpush1.bf16.msra.mxu0 %v2487
  %2532 = vmatprep.subr.bf16.mxu0 0
  %2533 = vmatpush1.bf16.msra.mxu0 %v2486
  %2534 = vmatprep.subr.bf16.mxu0 0
  %2535 = vmatpush2.bf16.msra.mxu0 %v2501
  %2536 = vmatprep.subr.bf16.mxu0 0
  %2537 = vmatpush2.bf16.msra.mxu0 %v2500
  %2538 = vmatprep.subr.bf16.mxu0 0
  %2539 = vmatpush2.bf16.msra.mxu0 %v2499
  %2540 = vmatprep.subr.bf16.mxu0 0
  %2541 = vmatpush2.bf16.msra.mxu0 %v2498
  %2542 = vmatprep.subr.bf16.mxu0 0
  %2543 = vmatpush2.bf16.msra.mxu0 %v2497
  %2544 = vmatprep.subr.bf16.mxu0 0
  %2545 = vmatpush2.bf16.msra.mxu0 %v2496
  %2546 = vmatprep.subr.bf16.mxu0 0
  %2547 = vmatpush2.bf16.msra.mxu0 %v2495
  %2548 = vmatprep.subr.bf16.mxu0 0
  %2549 = vmatpush2.bf16.msra.mxu0 %v2494
  %2550 = vmatprep.mubr.bf16.mxu0 %v1918
  %2551 = vmatmul.mubr.bf16.gmra.mxu0 %v1917
  %v2552 = vpop.f32.mrf.mxu0
  %v2553 = vadd.f32 0.0, %v2552
  %v2554 = vpop.f32.mrf.mxu0
  %v2555 = vpop.f32.mrf.mxu0
  %v2556 = vadd.f32 0.0, %v2555
  %v2557 = vpop.f32.mrf.mxu0
  %2558 = vmatprep.mubr.bf16.mxu0 %v1920
  %2559 = vmatmul.mubr.bf16.gmra.mxu0 %v1919
  %v2560 = vpop.f32.mrf.mxu0
  %v2561 = vadd.f32 0.0, %v2560
  %v2562 = vpop.f32.mrf.mxu0
  %v2563 = vpop.f32.mrf.mxu0
  %v2564 = vadd.f32 0.0, %v2563
  %v2565 = vpop.f32.mrf.mxu0
  %2566 = vmatprep.mubr.bf16.mxu0 %v1922
  %2567 = vmatmul.mubr.bf16.gmra.mxu0 %v1921
  %v2568 = vpop.f32.mrf.mxu0
  %v2569 = vadd.f32 0.0, %v2568
  %v2570 = vpop.f32.mrf.mxu0
  %v2571 = vpop.f32.mrf.mxu0
  %v2572 = vadd.f32 0.0, %v2571
  %v2573 = vpop.f32.mrf.mxu0
  %2574 = vmatprep.mubr.bf16.mxu0 %v1924
  %2575 = vmatmul.mubr.bf16.gmra.mxu0 %v1923
  %v2576 = vpop.f32.mrf.mxu0
  %v2577 = vadd.f32 0.0, %v2576
  %v2578 = vpop.f32.mrf.mxu0
  %v2579 = vpop.f32.mrf.mxu0
  %v2580 = vadd.f32 0.0, %v2579
  %v2581 = vpop.f32.mrf.mxu0
  %2582 = vmatprep.mubr.bf16.mxu0 %v1926
  %2583 = vmatmul.mubr.bf16.gmra.mxu0 %v1925
  %v2584 = vpop.f32.mrf.mxu0
  %v2585 = vadd.f32 0.0, %v2584
  %v2586 = vpop.f32.mrf.mxu0
  %v2587 = vpop.f32.mrf.mxu0
  %v2588 = vadd.f32 0.0, %v2587
  %v2589 = vpop.f32.mrf.mxu0
  %2590 = vmatprep.mubr.bf16.mxu0 %v1928
  %2591 = vmatmul.mubr.bf16.gmra.mxu0 %v1927
  %v2592 = vpop.f32.mrf.mxu0
  %v2593 = vadd.f32 0.0, %v2592
  %v2594 = vpop.f32.mrf.mxu0
  %v2595 = vpop.f32.mrf.mxu0
  %v2596 = vadd.f32 0.0, %v2595
  %v2597 = vpop.f32.mrf.mxu0
  %2598 = vmatprep.mubr.bf16.mxu0 %v1930
  %2599 = vmatmul.mubr.bf16.gmra.mxu0 %v1929
  %v2600 = vpop.f32.mrf.mxu0
  %v2601 = vadd.f32 0.0, %v2600
  %v2602 = vpop.f32.mrf.mxu0
  %v2603 = vpop.f32.mrf.mxu0
  %v2604 = vadd.f32 0.0, %v2603
  %v2605 = vpop.f32.mrf.mxu0
  %2606 = vmatprep.mubr.bf16.mxu0 %v1932
  %2607 = vmatmul.mubr.bf16.gmra.mxu0 %v1931
  %v2608 = vpop.f32.mrf.mxu0
  %v2609 = vadd.f32 0.0, %v2608
  %v2610 = vpop.f32.mrf.mxu0
  %v2611 = vpop.f32.mrf.mxu0
  %v2612 = vadd.f32 0.0, %v2611
  %v2613 = vpop.f32.mrf.mxu0
  %2614 = vdwg.mxu0
  %v2615 = vmul.f32 %v2553, %v1394
  %v2616 = vmul.f32 %v2556, %v1399
  %v2617 = vmul.f32 %v2561, %v1404
  %v2618 = vmul.f32 %v2564, %v1409
  %v2619 = vmul.f32 %v2569, %v1414
  %v2620 = vmul.f32 %v2572, %v1419
  %v2621 = vmul.f32 %v2577, %v1424
  %v2622 = vmul.f32 %v2580, %v1429
  %v2623 = vmul.f32 %v2585, %v1434
  %v2624 = vmul.f32 %v2588, %v1439
  %v2625 = vmul.f32 %v2593, %v1444
  %v2626 = vmul.f32 %v2596, %v1449
  %v2627 = vmul.f32 %v2601, %v1454
  %v2628 = vmul.f32 %v2604, %v1459
  %v2629 = vmul.f32 %v2609, %v1464
  %v2630 = vmul.f32 %v2612, %v1469
  %v2631 = vld [vmem:[%s29] sm:$0xf]
  %v2632 = vld [vmem:[%s29 + $0x4] sm:$0xf]
  %v2633 = vld [vmem:[%s29 + $0x8] sm:$0xf]
  %v2634 = vld [vmem:[%s29 + $0xc] sm:$0xf]
  %v2635 = vld [vmem:[%s29 + $0x10] sm:$0xf]
  %v2636 = vld [vmem:[%s29 + $0x14] sm:$0xf]
  %v2637 = vld [vmem:[%s29 + $0x18] sm:$0xf]
  %v2638 = vld [vmem:[%s29 + $0x1c] sm:$0xf]
  %v2639 = vld [vmem:[%s29 + $0x20] sm:$0xf]
  %v2640 = vld [vmem:[%s29 + $0x24] sm:$0xf]
  %v2641 = vld [vmem:[%s29 + $0x28] sm:$0xf]
  %v2642 = vld [vmem:[%s29 + $0x2c] sm:$0xf]
  %v2643 = vld [vmem:[%s29 + $0x30] sm:$0xf]
  %v2644 = vld [vmem:[%s29 + $0x34] sm:$0xf]
  %v2645 = vld [vmem:[%s29 + $0x38] sm:$0xf]
  %v2646 = vld [vmem:[%s29 + $0x3c] sm:$0xf]
  %v2647 = vld [vmem:[%s29 + $0x40] sm:$0xf]
  %v2648 = vld [vmem:[%s29 + $0x44] sm:$0xf]
  %v2649 = vld [vmem:[%s29 + $0x48] sm:$0xf]
  %v2650 = vld [vmem:[%s29 + $0x4c] sm:$0xf]
  %v2651 = vld [vmem:[%s29 + $0x50] sm:$0xf]
  %v2652 = vld [vmem:[%s29 + $0x54] sm:$0xf]
  %v2653 = vld [vmem:[%s29 + $0x58] sm:$0xf]
  %v2654 = vld [vmem:[%s29 + $0x5c] sm:$0xf]
  %v2655 = vld [vmem:[%s29 + $0x60] sm:$0xf]
  %v2656 = vld [vmem:[%s29 + $0x64] sm:$0xf]
  %v2657 = vld [vmem:[%s29 + $0x68] sm:$0xf]
  %v2658 = vld [vmem:[%s29 + $0x6c] sm:$0xf]
  %v2659 = vld [vmem:[%s29 + $0x70] sm:$0xf]
  %v2660 = vld [vmem:[%s29 + $0x74] sm:$0xf]
  %v2661 = vld [vmem:[%s29 + $0x78] sm:$0xf]
  %v2662 = vld [vmem:[%s29 + $0x7c] sm:$0xf]
  %v2695 = vunpack.c.l.b16 %v2631
  %v2696 = vunpack.c.l.b16 %v2632
  %v2697 = vunpack.c.l.b16 %v2633
  %v2698 = vunpack.c.l.b16 %v2634
  %v2699 = vunpack.c.l.b16 %v2635
  %v2700 = vunpack.c.l.b16 %v2636
  %v2701 = vunpack.c.l.b16 %v2637
  %v2702 = vunpack.c.l.b16 %v2638
  %v2703 = vunpack.c.l.b16 %v2639
  %v2704 = vunpack.c.l.b16 %v2640
  %v2705 = vunpack.c.l.b16 %v2641
  %v2706 = vunpack.c.l.b16 %v2642
  %v2707 = vunpack.c.l.b16 %v2643
  %v2708 = vunpack.c.l.b16 %v2644
  %v2709 = vunpack.c.l.b16 %v2645
  %v2710 = vunpack.c.l.b16 %v2646
  %v2711 = vunpack.c.l.b16 %v2647
  %v2712 = vunpack.c.l.b16 %v2648
  %v2713 = vunpack.c.l.b16 %v2649
  %v2714 = vunpack.c.l.b16 %v2650
  %v2715 = vunpack.c.l.b16 %v2651
  %v2716 = vunpack.c.l.b16 %v2652
  %v2717 = vunpack.c.l.b16 %v2653
  %v2718 = vunpack.c.l.b16 %v2654
  %v2719 = vunpack.c.l.b16 %v2655
  %v2720 = vunpack.c.l.b16 %v2656
  %v2721 = vunpack.c.l.b16 %v2657
  %v2722 = vunpack.c.l.b16 %v2658
  %v2723 = vunpack.c.l.b16 %v2659
  %v2724 = vunpack.c.l.b16 %v2660
  %v2725 = vunpack.c.l.b16 %v2661
  %v2726 = vunpack.c.l.b16 %v2662
  %v2727 = vpack.c.b16 %v2696, %v2695
  %v2728 = vpack.c.b16 %v2698, %v2697
  %v2729 = vpack.c.b16 %v2700, %v2699
  %v2730 = vpack.c.b16 %v2702, %v2701
  %v2731 = vpack.c.b16 %v2704, %v2703
  %v2732 = vpack.c.b16 %v2706, %v2705
  %v2733 = vpack.c.b16 %v2708, %v2707
  %v2734 = vpack.c.b16 %v2710, %v2709
  %v2735 = vpack.c.b16 %v2712, %v2711
  %v2736 = vpack.c.b16 %v2714, %v2713
  %v2737 = vpack.c.b16 %v2716, %v2715
  %v2738 = vpack.c.b16 %v2718, %v2717
  %v2739 = vpack.c.b16 %v2720, %v2719
  %v2740 = vpack.c.b16 %v2722, %v2721
  %v2741 = vpack.c.b16 %v2724, %v2723
  %v2742 = vpack.c.b16 %v2726, %v2725
  %2759 = vmatprep.subr.bf16.mxu0 0
  %2760 = vmatpush1.bf16.msra.mxu0 %v2734
  %2761 = vmatprep.subr.bf16.mxu0 0
  %2762 = vmatpush1.bf16.msra.mxu0 %v2733
  %2763 = vmatprep.subr.bf16.mxu0 0
  %2764 = vmatpush1.bf16.msra.mxu0 %v2732
  %2765 = vmatprep.subr.bf16.mxu0 0
  %2766 = vmatpush1.bf16.msra.mxu0 %v2731
  %2767 = vmatprep.subr.bf16.mxu0 0
  %2768 = vmatpush1.bf16.msra.mxu0 %v2730
  %2769 = vmatprep.subr.bf16.mxu0 0
  %2770 = vmatpush1.bf16.msra.mxu0 %v2729
  %2771 = vmatprep.subr.bf16.mxu0 0
  %2772 = vmatpush1.bf16.msra.mxu0 %v2728
  %2773 = vmatprep.subr.bf16.mxu0 0
  %2774 = vmatpush1.bf16.msra.mxu0 %v2727
  %2775 = vmatprep.subr.bf16.mxu0 0
  %2776 = vmatpush2.bf16.msra.mxu0 %v2742
  %2777 = vmatprep.subr.bf16.mxu0 0
  %2778 = vmatpush2.bf16.msra.mxu0 %v2741
  %2779 = vmatprep.subr.bf16.mxu0 0
  %2780 = vmatpush2.bf16.msra.mxu0 %v2740
  %2781 = vmatprep.subr.bf16.mxu0 0
  %2782 = vmatpush2.bf16.msra.mxu0 %v2739
  %2783 = vmatprep.subr.bf16.mxu0 0
  %2784 = vmatpush2.bf16.msra.mxu0 %v2738
  %2785 = vmatprep.subr.bf16.mxu0 0
  %2786 = vmatpush2.bf16.msra.mxu0 %v2737
  %2787 = vmatprep.subr.bf16.mxu0 0
  %2788 = vmatpush2.bf16.msra.mxu0 %v2736
  %2789 = vmatprep.subr.bf16.mxu0 0
  %2790 = vmatpush2.bf16.msra.mxu0 %v2735
  %2791 = vmatprep.mubr.bf16.mxu0 %v2375
  %2792 = vmatmul.mubr.bf16.gmra.mxu0 %v2374
  %v2793 = vpop.f32.mrf.mxu0
  %v2794 = vadd.f32 0.0, %v2793
  %v2795 = vpop.f32.mrf.mxu0
  %v2796 = vpop.f32.mrf.mxu0
  %v2797 = vadd.f32 0.0, %v2796
  %v2798 = vpop.f32.mrf.mxu0
  %2799 = vmatprep.mubr.bf16.mxu0 %v2377
  %2800 = vmatmul.mubr.bf16.gmra.mxu0 %v2376
  %v2801 = vpop.f32.mrf.mxu0
  %v2802 = vadd.f32 0.0, %v2801
  %v2803 = vpop.f32.mrf.mxu0
  %v2804 = vpop.f32.mrf.mxu0
  %v2805 = vadd.f32 0.0, %v2804
  %v2806 = vpop.f32.mrf.mxu0
  %2807 = vmatprep.mubr.bf16.mxu0 %v2379
  %2808 = vmatmul.mubr.bf16.gmra.mxu0 %v2378
  %v2809 = vpop.f32.mrf.mxu0
  %v2810 = vadd.f32 0.0, %v2809
  %v2811 = vpop.f32.mrf.mxu0
  %v2812 = vpop.f32.mrf.mxu0
  %v2813 = vadd.f32 0.0, %v2812
  %v2814 = vpop.f32.mrf.mxu0
  %2815 = vmatprep.mubr.bf16.mxu0 %v2381
  %2816 = vmatmul.mubr.bf16.gmra.mxu0 %v2380
  %v2817 = vpop.f32.mrf.mxu0
  %v2818 = vadd.f32 0.0, %v2817
  %v2819 = vpop.f32.mrf.mxu0
  %v2820 = vpop.f32.mrf.mxu0
  %v2821 = vadd.f32 0.0, %v2820
  %v2822 = vpop.f32.mrf.mxu0
  %2823 = vmatprep.mubr.bf16.mxu0 %v2383
  %2824 = vmatmul.mubr.bf16.gmra.mxu0 %v2382
  %v2825 = vpop.f32.mrf.mxu0
  %v2826 = vadd.f32 0.0, %v2825
  %v2827 = vpop.f32.mrf.mxu0
  %v2828 = vpop.f32.mrf.mxu0
  %v2829 = vadd.f32 0.0, %v2828
  %v2830 = vpop.f32.mrf.mxu0
  %2831 = vmatprep.mubr.bf16.mxu0 %v2385
  %2832 = vmatmul.mubr.bf16.gmra.mxu0 %v2384
  %v2833 = vpop.f32.mrf.mxu0
  %v2834 = vadd.f32 0.0, %v2833
  %v2835 = vpop.f32.mrf.mxu0
  %v2836 = vpop.f32.mrf.mxu0
  %v2837 = vadd.f32 0.0, %v2836
  %v2838 = vpop.f32.mrf.mxu0
  %2839 = vmatprep.mubr.bf16.mxu0 %v2387
  %2840 = vmatmul.mubr.bf16.gmra.mxu0 %v2386
  %v2841 = vpop.f32.mrf.mxu0
  %v2842 = vadd.f32 0.0, %v2841
  %v2843 = vpop.f32.mrf.mxu0
  %v2844 = vpop.f32.mrf.mxu0
  %v2845 = vadd.f32 0.0, %v2844
  %v2846 = vpop.f32.mrf.mxu0
  %2847 = vmatprep.mubr.bf16.mxu0 %v2389
  %2848 = vmatmul.mubr.bf16.gmra.mxu0 %v2388
  %v2849 = vpop.f32.mrf.mxu0
  %v2850 = vadd.f32 0.0, %v2849
  %v2851 = vpop.f32.mrf.mxu0
  %v2852 = vpop.f32.mrf.mxu0
  %v2853 = vadd.f32 0.0, %v2852
  %v2854 = vpop.f32.mrf.mxu0
  %2855 = vdwg.mxu0
  %v2856 = vpack.c.bf16 %v2616, %v2615
  %v2857 = vpack.c.bf16 %v2797, %v2794
  %v2858 = vpack.c.bf16 %v2618, %v2617
  %v2859 = vpack.c.bf16 %v2805, %v2802
  %v2860 = vpack.c.bf16 %v2620, %v2619
  %v2861 = vpack.c.bf16 %v2813, %v2810
  %v2862 = vpack.c.bf16 %v2622, %v2621
  %v2863 = vpack.c.bf16 %v2821, %v2818
  %v2864 = vpack.c.bf16 %v2624, %v2623
  %v2865 = vpack.c.bf16 %v2829, %v2826
  %v2866 = vpack.c.bf16 %v2626, %v2625
  %v2867 = vpack.c.bf16 %v2837, %v2834
  %v2868 = vpack.c.bf16 %v2628, %v2627
  %v2869 = vpack.c.bf16 %v2845, %v2842
  %v2870 = vpack.c.bf16 %v2630, %v2629
  %v2871 = vpack.c.bf16 %v2853, %v2850
  %2872 = vmatprep.subr.bf16.mxu0 %v2871
  %2873 = vmatpush1.bf16.msra.mxu0 %v2870
  %2874 = vmatprep.subr.bf16.mxu0 %v2869
  %2875 = vmatpush1.bf16.msra.mxu0 %v2868
  %2876 = vmatprep.subr.bf16.mxu0 %v2867
  %2877 = vmatpush1.bf16.msra.mxu0 %v2866
  %2878 = vmatprep.subr.bf16.mxu0 %v2865
  %2879 = vmatpush1.bf16.msra.mxu0 %v2864
  %2880 = vmatprep.subr.bf16.mxu0 %v2863
  %2881 = vmatpush1.bf16.msra.mxu0 %v2862
  %2882 = vmatprep.subr.bf16.mxu0 %v2861
  %2883 = vmatpush1.bf16.msra.mxu0 %v2860
  %2884 = vmatprep.subr.bf16.mxu0 %v2859
  %2885 = vmatpush1.bf16.msra.mxu0 %v2858
  %2886 = vmatprep.subr.bf16.mxu0 %v2857
  %2887 = vmatpush1.bf16.msra.mxu0 %v2856
  %2888 = vmatprep.subr.bf16.mxu0 0
  %2889 = vmatpush2.bf16.msra.mxu0 0
  %2890 = vmatprep.subr.bf16.mxu0 0
  %2891 = vmatpush2.bf16.msra.mxu0 0
  %2892 = vmatprep.subr.bf16.mxu0 0
  %2893 = vmatpush2.bf16.msra.mxu0 0
  %2894 = vmatprep.subr.bf16.mxu0 0
  %2895 = vmatpush2.bf16.msra.mxu0 0
  %2896 = vmatprep.subr.bf16.mxu0 0
  %2897 = vmatpush2.bf16.msra.mxu0 0
  %2898 = vmatprep.subr.bf16.mxu0 0
  %2899 = vmatpush2.bf16.msra.mxu0 0
  %2900 = vmatprep.subr.bf16.mxu0 0
  %2901 = vmatpush2.bf16.msra.mxu0 0
  %2902 = vmatprep.subr.bf16.mxu0 0
  %2903 = vmatpush2.bf16.msra.mxu0 0
  %2904 = vmatprep.mubr.bf16.mxu0 0
  %2905 = vmatmul.mubr.bf16.gmra.mxu0 %v1567
  %v2906 = vpop.f32.mrf.mxu0
  %v2907 = vadd.f32 0.0, %v2906
  %v2908 = vpop.f32.mrf.mxu0
  %v2909 = vadd.f32 0.0, %v2908
  %v2910 = vpop.f32.mrf.mxu0
  %v2911 = vadd.f32 0.0, %v2910
  %v2912 = vpop.f32.mrf.mxu0
  %v2913 = vadd.f32 0.0, %v2912
  %2914 = vmatprep.mubr.bf16.mxu0 0
  %2915 = vmatmul.mubr.bf16.gmra.mxu0 %v1568
  %v2916 = vpop.f32.mrf.mxu0
  %v2917 = vadd.f32 0.0, %v2916
  %v2918 = vpop.f32.mrf.mxu0
  %v2919 = vadd.f32 0.0, %v2918
  %v2920 = vpop.f32.mrf.mxu0
  %v2921 = vadd.f32 0.0, %v2920
  %v2922 = vpop.f32.mrf.mxu0
  %v2923 = vadd.f32 0.0, %v2922
  %2924 = vmatprep.mubr.bf16.mxu0 0
  %2925 = vmatmul.mubr.bf16.gmra.mxu0 %v1569
  %v2926 = vpop.f32.mrf.mxu0
  %v2927 = vadd.f32 0.0, %v2926
  %v2928 = vpop.f32.mrf.mxu0
  %v2929 = vadd.f32 0.0, %v2928
  %v2930 = vpop.f32.mrf.mxu0
  %v2931 = vadd.f32 0.0, %v2930
  %v2932 = vpop.f32.mrf.mxu0
  %v2933 = vadd.f32 0.0, %v2932
  %2934 = vmatprep.mubr.bf16.mxu0 0
  %2935 = vmatmul.mubr.bf16.gmra.mxu0 %v1570
  %v2936 = vpop.f32.mrf.mxu0
  %v2937 = vadd.f32 0.0, %v2936
  %v2938 = vpop.f32.mrf.mxu0
  %v2939 = vadd.f32 0.0, %v2938
  %v2940 = vpop.f32.mrf.mxu0
  %v2941 = vadd.f32 0.0, %v2940
  %v2942 = vpop.f32.mrf.mxu0
  %v2943 = vadd.f32 0.0, %v2942
  %2944 = vmatprep.mubr.bf16.mxu0 0
  %2945 = vmatmul.mubr.bf16.gmra.mxu0 %v1571
  %v2946 = vpop.f32.mrf.mxu0
  %v2947 = vadd.f32 0.0, %v2946
  %v2948 = vpop.f32.mrf.mxu0
  %v2949 = vadd.f32 0.0, %v2948
  %v2950 = vpop.f32.mrf.mxu0
  %v2951 = vadd.f32 0.0, %v2950
  %v2952 = vpop.f32.mrf.mxu0
  %v2953 = vadd.f32 0.0, %v2952
  %2954 = vmatprep.mubr.bf16.mxu0 0
  %2955 = vmatmul.mubr.bf16.gmra.mxu0 %v1572
  %v2956 = vpop.f32.mrf.mxu0
  %v2957 = vadd.f32 0.0, %v2956
  %v2958 = vpop.f32.mrf.mxu0
  %v2959 = vadd.f32 0.0, %v2958
  %v2960 = vpop.f32.mrf.mxu0
  %v2961 = vadd.f32 0.0, %v2960
  %v2962 = vpop.f32.mrf.mxu0
  %v2963 = vadd.f32 0.0, %v2962
  %2964 = vmatprep.mubr.bf16.mxu0 0
  %2965 = vmatmul.mubr.bf16.gmra.mxu0 %v1573
  %v2966 = vpop.f32.mrf.mxu0
  %v2967 = vadd.f32 0.0, %v2966
  %v2968 = vpop.f32.mrf.mxu0
  %v2969 = vadd.f32 0.0, %v2968
  %v2970 = vpop.f32.mrf.mxu0
  %v2971 = vadd.f32 0.0, %v2970
  %v2972 = vpop.f32.mrf.mxu0
  %v2973 = vadd.f32 0.0, %v2972
  %2974 = vmatprep.mubr.bf16.mxu0 0
  %2975 = vmatmul.mubr.bf16.gmra.mxu0 %v1574
  %v2976 = vpop.f32.mrf.mxu0
  %v2977 = vadd.f32 0.0, %v2976
  %v2978 = vpop.f32.mrf.mxu0
  %v2979 = vadd.f32 0.0, %v2978
  %v2980 = vpop.f32.mrf.mxu0
  %v2981 = vadd.f32 0.0, %v2980
  %v2982 = vpop.f32.mrf.mxu0
  %v2983 = vadd.f32 0.0, %v2982
  %2984 = vdwg.mxu0
  %v2985 = vmul.f32 %v2907, %v1394
  %v2986 = vmul.f32 %v2911, %v1399
  %v2987 = vmul.f32 %v2917, %v1404
  %v2988 = vmul.f32 %v2921, %v1409
  %v2989 = vmul.f32 %v2927, %v1414
  %v2990 = vmul.f32 %v2931, %v1419
  %v2991 = vmul.f32 %v2937, %v1424
  %v2992 = vmul.f32 %v2941, %v1429
  %v2993 = vmul.f32 %v2947, %v1434
  %v2994 = vmul.f32 %v2951, %v1439
  %v2995 = vmul.f32 %v2957, %v1444
  %v2996 = vmul.f32 %v2961, %v1449
  %v2997 = vmul.f32 %v2967, %v1454
  %v2998 = vmul.f32 %v2971, %v1459
  %v2999 = vmul.f32 %v2977, %v1464
  %v3000 = vmul.f32 %v2981, %v1469
  %v3001 = vld [vmem:[%s25] sm:$0x1]
  %3003 = vset.pattern.permute.xlu0 0
  %3004 = vperm.xlu0 %3003, %v171
  %v3005 = vpop.permute.xlu0 %3004
  %3008 = vset.pattern.permute.xlu0 0
  %3009 = vperm.xlu0 %3008, %v172
  %v3010 = vpop.permute.xlu0 %3009
  %3013 = vset.pattern.permute.xlu0 0
  %3014 = vperm.xlu0 %3013, %v173
  %v3015 = vpop.permute.xlu0 %3014
  %3018 = vset.pattern.permute.xlu0 0
  %3019 = vperm.xlu0 %3018, %v174
  %v3020 = vpop.permute.xlu0 %3019
  %3023 = vset.pattern.permute.xlu0 0
  %3024 = vperm.xlu0 %3023, %v175
  %v3025 = vpop.permute.xlu0 %3024
  %3028 = vset.pattern.permute.xlu0 0
  %3029 = vperm.xlu0 %3028, %v176
  %v3030 = vpop.permute.xlu0 %3029
  %3033 = vset.pattern.permute.xlu0 0
  %3034 = vperm.xlu0 %3033, %v177
  %v3035 = vpop.permute.xlu0 %3034
  %3038 = vset.pattern.permute.xlu0 0
  %3039 = vperm.xlu0 %3038, %v178
  %v3040 = vpop.permute.xlu0 %3039
  %3043 = vset.pattern.permute.xlu0 0
  %3044 = vperm.xlu0 %3043, %v179
  %v3045 = vpop.permute.xlu0 %3044
  %3048 = vset.pattern.permute.xlu0 0
  %3049 = vperm.xlu0 %3048, %v180
  %v3050 = vpop.permute.xlu0 %3049
  %3053 = vset.pattern.permute.xlu0 0
  %3054 = vperm.xlu0 %3053, %v181
  %v3055 = vpop.permute.xlu0 %3054
  %3058 = vset.pattern.permute.xlu0 0
  %3059 = vperm.xlu0 %3058, %v182
  %v3060 = vpop.permute.xlu0 %3059
  %3063 = vset.pattern.permute.xlu0 0
  %3064 = vperm.xlu0 %3063, %v183
  %v3065 = vpop.permute.xlu0 %3064
  %3068 = vset.pattern.permute.xlu0 0
  %3069 = vperm.xlu0 %3068, %v184
  %v3070 = vpop.permute.xlu0 %3069
  %3073 = vset.pattern.permute.xlu0 0
  %3074 = vperm.xlu0 %3073, %v185
  %v3075 = vpop.permute.xlu0 %3074
  %3078 = vset.pattern.permute.xlu0 0
  %3079 = vperm.xlu0 %3078, %v186
  %v3080 = vpop.permute.xlu0 %3079
  %v3083 = vlaneseq
  %v3084 = vshrl.u32 %v3083, 7
  %v3085 = vsub.s32 0, %v3084
  %v3086 = vrot.slane %v3001, %v3085
  %v3088 = vmul.f32 %v3005, %v3086
  %v3089 = vmul.f32 %v3010, %v3086
  %v3090 = vmul.f32 %v3015, %v3086
  %v3091 = vmul.f32 %v3020, %v3086
  %v3092 = vmul.f32 %v3025, %v3086
  %v3093 = vmul.f32 %v3030, %v3086
  %v3094 = vmul.f32 %v3035, %v3086
  %v3095 = vmul.f32 %v3040, %v3086
  %v3096 = vmul.f32 %v3045, %v3086
  %v3097 = vmul.f32 %v3050, %v3086
  %v3098 = vmul.f32 %v3055, %v3086
  %v3099 = vmul.f32 %v3060, %v3086
  %v3100 = vmul.f32 %v3065, %v3086
  %v3101 = vmul.f32 %v3070, %v3086
  %v3102 = vmul.f32 %v3075, %v3086
  %v3103 = vmul.f32 %v3080, %v3086
  %v3104 = vadd.f32 %v2985, %v3088
  %v3105 = vadd.f32 %v2986, %v3089
  %v3106 = vadd.f32 %v2987, %v3090
  %v3107 = vadd.f32 %v2988, %v3091
  %v3108 = vadd.f32 %v2989, %v3092
  %v3109 = vadd.f32 %v2990, %v3093
  %v3110 = vadd.f32 %v2991, %v3094
  %v3111 = vadd.f32 %v2992, %v3095
  %v3112 = vadd.f32 %v2993, %v3096
  %v3113 = vadd.f32 %v2994, %v3097
  %v3114 = vadd.f32 %v2995, %v3098
  %v3115 = vadd.f32 %v2996, %v3099
  %v3116 = vadd.f32 %v2997, %v3100
  %v3117 = vadd.f32 %v2998, %v3101
  %v3118 = vadd.f32 %v2999, %v3102
  %v3119 = vadd.f32 %v3000, %v3103
  %v3120 = vld [vmem:[%s27] sm:$0x1]
  %v3122 = vlaneseq
  %v3123 = vshrl.u32 %v3122, 7
  %v3124 = vsub.s32 0, %v3123
  %v3125 = vrot.slane %v3120, %v3124
  %v3127 = vadd.f32 %v3104, %v3125
  %v3128 = vadd.f32 %v3105, %v3125
  %v3129 = vadd.f32 %v3106, %v3125
  %v3130 = vadd.f32 %v3107, %v3125
  %v3131 = vadd.f32 %v3108, %v3125
  %v3132 = vadd.f32 %v3109, %v3125
  %v3133 = vadd.f32 %v3110, %v3125
  %v3134 = vadd.f32 %v3111, %v3125
  %v3135 = vadd.f32 %v3112, %v3125
  %v3136 = vadd.f32 %v3113, %v3125
  %v3137 = vadd.f32 %v3114, %v3125
  %v3138 = vadd.f32 %v3115, %v3125
  %v3139 = vadd.f32 %v3116, %v3125
  %v3140 = vadd.f32 %v3117, %v3125
  %v3141 = vadd.f32 %v3118, %v3125
  %v3142 = vadd.f32 %v3119, %v3125
  %v3143 = vmax.f32 %v3127, 0.0
  %v3144 = vmax.f32 %v3128, 0.0
  %v3145 = vmax.f32 %v3129, 0.0
  %v3146 = vmax.f32 %v3130, 0.0
  %v3147 = vmax.f32 %v3131, 0.0
  %v3148 = vmax.f32 %v3132, 0.0
  %v3149 = vmax.f32 %v3133, 0.0
  %v3150 = vmax.f32 %v3134, 0.0
  %v3151 = vmax.f32 %v3135, 0.0
  %v3152 = vmax.f32 %v3136, 0.0
  %v3153 = vmax.f32 %v3137, 0.0
  %v3154 = vmax.f32 %v3138, 0.0
  %v3155 = vmax.f32 %v3139, 0.0
  %v3156 = vmax.f32 %v3140, 0.0
  %v3157 = vmax.f32 %v3141, 0.0
  %v3158 = vmax.f32 %v3142, 0.0
  %v3159 = vpack.c.bf16 %v3144, %v3143
  %v3160 = vpack.c.bf16 %v3146, %v3145
  %v3161 = vpack.c.bf16 %v3148, %v3147
  %v3162 = vpack.c.bf16 %v3150, %v3149
  %v3163 = vpack.c.bf16 %v3152, %v3151
  %v3164 = vpack.c.bf16 %v3154, %v3153
  %v3165 = vpack.c.bf16 %v3156, %v3155
  %v3166 = vpack.c.bf16 %v3158, %v3157
  %v3167 = vld [vmem:[%s31] sm:$0x1]
  %3169 = vset.pattern.permute.xlu0 0
  %3170 = vperm.xlu0 %3169, %v187
  %v3171 = vpop.permute.xlu0 %3170
  %3174 = vset.pattern.permute.xlu0 0
  %3175 = vperm.xlu0 %3174, %v188
  %v3176 = vpop.permute.xlu0 %3175
  %3179 = vset.pattern.permute.xlu0 0
  %3180 = vperm.xlu0 %3179, %v189
  %v3181 = vpop.permute.xlu0 %3180
  %3184 = vset.pattern.permute.xlu0 0
  %3185 = vperm.xlu0 %3184, %v190
  %v3186 = vpop.permute.xlu0 %3185
  %3189 = vset.pattern.permute.xlu0 0
  %3190 = vperm.xlu0 %3189, %v191
  %v3191 = vpop.permute.xlu0 %3190
  %3194 = vset.pattern.permute.xlu0 0
  %3195 = vperm.xlu0 %3194, %v192
  %v3196 = vpop.permute.xlu0 %3195
  %3199 = vset.pattern.permute.xlu0 0
  %3200 = vperm.xlu0 %3199, %v193
  %v3201 = vpop.permute.xlu0 %3200
  %3204 = vset.pattern.permute.xlu0 0
  %3205 = vperm.xlu0 %3204, %v194
  %v3206 = vpop.permute.xlu0 %3205
  %3209 = vset.pattern.permute.xlu0 0
  %3210 = vperm.xlu0 %3209, %v195
  %v3211 = vpop.permute.xlu0 %3210
  %3214 = vset.pattern.permute.xlu0 0
  %3215 = vperm.xlu0 %3214, %v196
  %v3216 = vpop.permute.xlu0 %3215
  %3219 = vset.pattern.permute.xlu0 0
  %3220 = vperm.xlu0 %3219, %v197
  %v3221 = vpop.permute.xlu0 %3220
  %3224 = vset.pattern.permute.xlu0 0
  %3225 = vperm.xlu0 %3224, %v198
  %v3226 = vpop.permute.xlu0 %3225
  %3229 = vset.pattern.permute.xlu0 0
  %3230 = vperm.xlu0 %3229, %v199
  %v3231 = vpop.permute.xlu0 %3230
  %3234 = vset.pattern.permute.xlu0 0
  %3235 = vperm.xlu0 %3234, %v200
  %v3236 = vpop.permute.xlu0 %3235
  %3239 = vset.pattern.permute.xlu0 0
  %3240 = vperm.xlu0 %3239, %v201
  %v3241 = vpop.permute.xlu0 %3240
  %3244 = vset.pattern.permute.xlu0 0
  %3245 = vperm.xlu0 %3244, %v202
  %v3246 = vpop.permute.xlu0 %3245
  %v3249 = vlaneseq
  %v3250 = vshrl.u32 %v3249, 7
  %v3251 = vsub.s32 0, %v3250
  %v3252 = vrot.slane %v3167, %v3251
  %v3254 = vmul.f32 %v3171, %v3252
  %v3255 = vmul.f32 %v3176, %v3252
  %v3256 = vmul.f32 %v3181, %v3252
  %v3257 = vmul.f32 %v3186, %v3252
  %v3258 = vmul.f32 %v3191, %v3252
  %v3259 = vmul.f32 %v3196, %v3252
  %v3260 = vmul.f32 %v3201, %v3252
  %v3261 = vmul.f32 %v3206, %v3252
  %v3262 = vmul.f32 %v3211, %v3252
  %v3263 = vmul.f32 %v3216, %v3252
  %v3264 = vmul.f32 %v3221, %v3252
  %v3265 = vmul.f32 %v3226, %v3252
  %v3266 = vmul.f32 %v3231, %v3252
  %v3267 = vmul.f32 %v3236, %v3252
  %v3268 = vmul.f32 %v3241, %v3252
  %v3269 = vmul.f32 %v3246, %v3252
  %v3270 = vadd.f32 %v2909, %v3254
  %v3271 = vadd.f32 %v2913, %v3255
  %v3272 = vadd.f32 %v2919, %v3256
  %v3273 = vadd.f32 %v2923, %v3257
  %v3274 = vadd.f32 %v2929, %v3258
  %v3275 = vadd.f32 %v2933, %v3259
  %v3276 = vadd.f32 %v2939, %v3260
  %v3277 = vadd.f32 %v2943, %v3261
  %v3278 = vadd.f32 %v2949, %v3262
  %v3279 = vadd.f32 %v2953, %v3263
  %v3280 = vadd.f32 %v2959, %v3264
  %v3281 = vadd.f32 %v2963, %v3265
  %v3282 = vadd.f32 %v2969, %v3266
  %v3283 = vadd.f32 %v2973, %v3267
  %v3284 = vadd.f32 %v2979, %v3268
  %v3285 = vadd.f32 %v2983, %v3269
  %v3286 = vld [vmem:[%s33] sm:$0x1]
  %v3288 = vlaneseq
  %v3289 = vshrl.u32 %v3288, 7
  %v3290 = vsub.s32 0, %v3289
  %v3291 = vrot.slane %v3286, %v3290
  %v3293 = vadd.f32 %v3270, %v3291
  %v3294 = vadd.f32 %v3271, %v3291
  %v3295 = vadd.f32 %v3272, %v3291
  %v3296 = vadd.f32 %v3273, %v3291
  %v3297 = vadd.f32 %v3274, %v3291
  %v3298 = vadd.f32 %v3275, %v3291
  %v3299 = vadd.f32 %v3276, %v3291
  %v3300 = vadd.f32 %v3277, %v3291
  %v3301 = vadd.f32 %v3278, %v3291
  %v3302 = vadd.f32 %v3279, %v3291
  %v3303 = vadd.f32 %v3280, %v3291
  %v3304 = vadd.f32 %v3281, %v3291
  %v3305 = vadd.f32 %v3282, %v3291
  %v3306 = vadd.f32 %v3283, %v3291
  %v3307 = vadd.f32 %v3284, %v3291
  %v3308 = vadd.f32 %v3285, %v3291
  %v3309 = vmax.f32 %v3293, 0.0
  %v3310 = vmax.f32 %v3294, 0.0
  %v3311 = vmax.f32 %v3295, 0.0
  %v3312 = vmax.f32 %v3296, 0.0
  %v3313 = vmax.f32 %v3297, 0.0
  %v3314 = vmax.f32 %v3298, 0.0
  %v3315 = vmax.f32 %v3299, 0.0
  %v3316 = vmax.f32 %v3300, 0.0
  %v3317 = vmax.f32 %v3301, 0.0
  %v3318 = vmax.f32 %v3302, 0.0
  %v3319 = vmax.f32 %v3303, 0.0
  %v3320 = vmax.f32 %v3304, 0.0
  %v3321 = vmax.f32 %v3305, 0.0
  %v3322 = vmax.f32 %v3306, 0.0
  %v3323 = vmax.f32 %v3307, 0.0
  %v3324 = vmax.f32 %v3308, 0.0
  %v3325 = vpack.c.bf16 %v3310, %v3309
  %v3326 = vpack.c.bf16 %v3312, %v3311
  %v3327 = vpack.c.bf16 %v3314, %v3313
  %v3328 = vpack.c.bf16 %v3316, %v3315
  %v3329 = vpack.c.bf16 %v3318, %v3317
  %v3330 = vpack.c.bf16 %v3320, %v3319
  %v3331 = vpack.c.bf16 %v3322, %v3321
  %v3332 = vpack.c.bf16 %v3324, %v3323
  %v3333 = vld [vmem:[%s35] sm:$0xf]
  %v3334 = vld [vmem:[%s35 + $0x4] sm:$0xf]
  %v3335 = vld [vmem:[%s35 + $0x8] sm:$0xf]
  %v3336 = vld [vmem:[%s35 + $0xc] sm:$0xf]
  %v3337 = vld [vmem:[%s35 + $0x10] sm:$0xf]
  %v3338 = vld [vmem:[%s35 + $0x14] sm:$0xf]
  %v3339 = vld [vmem:[%s35 + $0x18] sm:$0xf]
  %v3340 = vld [vmem:[%s35 + $0x1c] sm:$0xf]
  %v3341 = vld [vmem:[%s35 + $0x20] sm:$0xf]
  %v3342 = vld [vmem:[%s35 + $0x24] sm:$0xf]
  %v3343 = vld [vmem:[%s35 + $0x28] sm:$0xf]
  %v3344 = vld [vmem:[%s35 + $0x2c] sm:$0xf]
  %v3345 = vld [vmem:[%s35 + $0x30] sm:$0xf]
  %v3346 = vld [vmem:[%s35 + $0x34] sm:$0xf]
  %v3347 = vld [vmem:[%s35 + $0x38] sm:$0xf]
  %v3348 = vld [vmem:[%s35 + $0x3c] sm:$0xf]
  %v3349 = vld [vmem:[%s37] sm:$0x1]
  %v3351 = vlaneseq
  %v3352 = vshrl.u32 %v3351, 7
  %v3353 = vsub.s32 0, %v3352
  %v3354 = vrot.slane %v3349, %v3353
  %v3372 = vunpack.c.l.b16 %v3333
  %v3373 = vunpack.c.l.b16 %v3334
  %v3374 = vunpack.c.l.b16 %v3335
  %v3375 = vunpack.c.l.b16 %v3336
  %v3376 = vunpack.c.l.b16 %v3337
  %v3377 = vunpack.c.l.b16 %v3338
  %v3378 = vunpack.c.l.b16 %v3339
  %v3379 = vunpack.c.l.b16 %v3340
  %v3380 = vunpack.c.l.b16 %v3341
  %v3381 = vunpack.c.l.b16 %v3342
  %v3382 = vunpack.c.l.b16 %v3343
  %v3383 = vunpack.c.l.b16 %v3344
  %v3384 = vunpack.c.l.b16 %v3345
  %v3385 = vunpack.c.l.b16 %v3346
  %v3386 = vunpack.c.l.b16 %v3347
  %v3387 = vunpack.c.l.b16 %v3348
  %v3388 = vpack.c.b16 %v3373, %v3372
  %v3389 = vpack.c.b16 %v3375, %v3374
  %v3390 = vpack.c.b16 %v3377, %v3376
  %v3391 = vpack.c.b16 %v3379, %v3378
  %v3392 = vpack.c.b16 %v3381, %v3380
  %v3393 = vpack.c.b16 %v3383, %v3382
  %v3394 = vpack.c.b16 %v3385, %v3384
  %v3395 = vpack.c.b16 %v3387, %v3386
  %3404 = vmatprep.subr.bf16.mxu0 0
  %3405 = vmatpush1.bf16.msra.mxu0 %v3395
  %3406 = vmatprep.subr.bf16.mxu0 0
  %3407 = vmatpush1.bf16.msra.mxu0 %v3394
  %3408 = vmatprep.subr.bf16.mxu0 0
  %3409 = vmatpush1.bf16.msra.mxu0 %v3393
  %3410 = vmatprep.subr.bf16.mxu0 0
  %3411 = vmatpush1.bf16.msra.mxu0 %v3392
  %3412 = vmatprep.subr.bf16.mxu0 0
  %3413 = vmatpush1.bf16.msra.mxu0 %v3391
  %3414 = vmatprep.subr.bf16.mxu0 0
  %3415 = vmatpush1.bf16.msra.mxu0 %v3390
  %3416 = vmatprep.subr.bf16.mxu0 0
  %3417 = vmatpush1.bf16.msra.mxu0 %v3389
  %3418 = vmatprep.subr.bf16.mxu0 0
  %3419 = vmatpush1.bf16.msra.mxu0 %v3388
  %3420 = vmatprep.subr.bf16.mxu0 0
  %3421 = vmatpush2.bf16.msra.mxu0 0
  %3422 = vmatprep.subr.bf16.mxu0 0
  %3423 = vmatpush2.bf16.msra.mxu0 0
  %3424 = vmatprep.subr.bf16.mxu0 0
  %3425 = vmatpush2.bf16.msra.mxu0 0
  %3426 = vmatprep.subr.bf16.mxu0 0
  %3427 = vmatpush2.bf16.msra.mxu0 0
  %3428 = vmatprep.subr.bf16.mxu0 0
  %3429 = vmatpush2.bf16.msra.mxu0 0
  %3430 = vmatprep.subr.bf16.mxu0 0
  %3431 = vmatpush2.bf16.msra.mxu0 0
  %3432 = vmatprep.subr.bf16.mxu0 0
  %3433 = vmatpush2.bf16.msra.mxu0 0
  %3434 = vmatprep.subr.bf16.mxu0 0
  %3435 = vmatpush2.bf16.msra.mxu0 0
  %3436 = vmatprep.mubr.bf16.mxu0 0
  %3437 = vmatmul.mubr.bf16.gmra.mxu0 %v3325
  %v3438 = vpop.f32.mrf.mxu0
  %v3439 = vadd.f32 %v3354, %v3438
  %v3440 = vpop.f32.mrf.mxu0
  %v3441 = vpop.f32.mrf.mxu0
  %v3442 = vadd.f32 %v3354, %v3441
  %v3443 = vpop.f32.mrf.mxu0
  %3444 = vmatprep.mubr.bf16.mxu0 0
  %3445 = vmatmul.mubr.bf16.gmra.mxu0 %v3326
  %v3446 = vpop.f32.mrf.mxu0
  %v3447 = vadd.f32 %v3354, %v3446
  %v3448 = vpop.f32.mrf.mxu0
  %v3449 = vpop.f32.mrf.mxu0
  %v3450 = vadd.f32 %v3354, %v3449
  %v3451 = vpop.f32.mrf.mxu0
  %3452 = vmatprep.mubr.bf16.mxu0 0
  %3453 = vmatmul.mubr.bf16.gmra.mxu0 %v3327
  %v3454 = vpop.f32.mrf.mxu0
  %v3455 = vadd.f32 %v3354, %v3454
  %v3456 = vpop.f32.mrf.mxu0
  %v3457 = vpop.f32.mrf.mxu0
  %v3458 = vadd.f32 %v3354, %v3457
  %v3459 = vpop.f32.mrf.mxu0
  %3460 = vmatprep.mubr.bf16.mxu0 0
  %3461 = vmatmul.mubr.bf16.gmra.mxu0 %v3328
  %v3462 = vpop.f32.mrf.mxu0
  %v3463 = vadd.f32 %v3354, %v3462
  %v3464 = vpop.f32.mrf.mxu0
  %v3465 = vpop.f32.mrf.mxu0
  %v3466 = vadd.f32 %v3354, %v3465
  %v3467 = vpop.f32.mrf.mxu0
  %3468 = vmatprep.mubr.bf16.mxu0 0
  %3469 = vmatmul.mubr.bf16.gmra.mxu0 %v3329
  %v3470 = vpop.f32.mrf.mxu0
  %v3471 = vadd.f32 %v3354, %v3470
  %v3472 = vpop.f32.mrf.mxu0
  %v3473 = vpop.f32.mrf.mxu0
  %v3474 = vadd.f32 %v3354, %v3473
  %v3475 = vpop.f32.mrf.mxu0
  %3476 = vmatprep.mubr.bf16.mxu0 0
  %3477 = vmatmul.mubr.bf16.gmra.mxu0 %v3330
  %v3478 = vpop.f32.mrf.mxu0
  %v3479 = vadd.f32 %v3354, %v3478
  %v3480 = vpop.f32.mrf.mxu0
  %v3481 = vpop.f32.mrf.mxu0
  %v3482 = vadd.f32 %v3354, %v3481
  %v3483 = vpop.f32.mrf.mxu0
  %3484 = vmatprep.mubr.bf16.mxu0 0
  %3485 = vmatmul.mubr.bf16.gmra.mxu0 %v3331
  %v3486 = vpop.f32.mrf.mxu0
  %v3487 = vadd.f32 %v3354, %v3486
  %v3488 = vpop.f32.mrf.mxu0
  %v3489 = vpop.f32.mrf.mxu0
  %v3490 = vadd.f32 %v3354, %v3489
  %v3491 = vpop.f32.mrf.mxu0
  %3492 = vmatprep.mubr.bf16.mxu0 0
  %3493 = vmatmul.mubr.bf16.gmra.mxu0 %v3332
  %v3494 = vpop.f32.mrf.mxu0
  %v3495 = vadd.f32 %v3354, %v3494
  %v3496 = vpop.f32.mrf.mxu0
  %v3497 = vpop.f32.mrf.mxu0
  %v3498 = vadd.f32 %v3354, %v3497
  %v3499 = vpop.f32.mrf.mxu0
  %3500 = vdwg.mxu0
  %v3501 = vmax.f32 %v3439, 0.0
  %v3502 = vmax.f32 %v3442, 0.0
  %v3503 = vmax.f32 %v3447, 0.0
  %v3504 = vmax.f32 %v3450, 0.0
  %v3505 = vmax.f32 %v3455, 0.0
  %v3506 = vmax.f32 %v3458, 0.0
  %v3507 = vmax.f32 %v3463, 0.0
  %v3508 = vmax.f32 %v3466, 0.0
  %v3509 = vmax.f32 %v3471, 0.0
  %v3510 = vmax.f32 %v3474, 0.0
  %v3511 = vmax.f32 %v3479, 0.0
  %v3512 = vmax.f32 %v3482, 0.0
  %v3513 = vmax.f32 %v3487, 0.0
  %v3514 = vmax.f32 %v3490, 0.0
  %v3515 = vmax.f32 %v3495, 0.0
  %v3516 = vmax.f32 %v3498, 0.0
  %v3517 = vpack.c.bf16 %v3502, %v3501
  %v3518 = vpack.c.bf16 %v3504, %v3503
  %v3519 = vpack.c.bf16 %v3506, %v3505
  %v3520 = vpack.c.bf16 %v3508, %v3507
  %v3521 = vpack.c.bf16 %v3510, %v3509
  %v3522 = vpack.c.bf16 %v3512, %v3511
  %v3523 = vpack.c.bf16 %v3514, %v3513
  %v3524 = vpack.c.bf16 %v3516, %v3515
  %v3525 = vld [vmem:[%s39] sm:$0xf]
  %v3526 = vld [vmem:[%s39 + $0x4] sm:$0xf]
  %v3527 = vld [vmem:[%s39 + $0x8] sm:$0xf]
  %v3528 = vld [vmem:[%s39 + $0xc] sm:$0xf]
  %v3529 = vld [vmem:[%s39 + $0x10] sm:$0xf]
  %v3530 = vld [vmem:[%s39 + $0x14] sm:$0xf]
  %v3531 = vld [vmem:[%s39 + $0x18] sm:$0xf]
  %v3532 = vld [vmem:[%s39 + $0x1c] sm:$0xf]
  %v3533 = vld [vmem:[%s39 + $0x20] sm:$0xf]
  %v3534 = vld [vmem:[%s39 + $0x24] sm:$0xf]
  %v3535 = vld [vmem:[%s39 + $0x28] sm:$0xf]
  %v3536 = vld [vmem:[%s39 + $0x2c] sm:$0xf]
  %v3537 = vld [vmem:[%s39 + $0x30] sm:$0xf]
  %v3538 = vld [vmem:[%s39 + $0x34] sm:$0xf]
  %v3539 = vld [vmem:[%s39 + $0x38] sm:$0xf]
  %v3540 = vld [vmem:[%s39 + $0x3c] sm:$0xf]
  %v3557 = vunpack.c.l.b16 %v3525
  %v3558 = vunpack.c.l.b16 %v3526
  %v3559 = vunpack.c.l.b16 %v3527
  %v3560 = vunpack.c.l.b16 %v3528
  %v3561 = vunpack.c.l.b16 %v3529
  %v3562 = vunpack.c.l.b16 %v3530
  %v3563 = vunpack.c.l.b16 %v3531
  %v3564 = vunpack.c.l.b16 %v3532
  %v3565 = vunpack.c.l.b16 %v3533
  %v3566 = vunpack.c.l.b16 %v3534
  %v3567 = vunpack.c.l.b16 %v3535
  %v3568 = vunpack.c.l.b16 %v3536
  %v3569 = vunpack.c.l.b16 %v3537
  %v3570 = vunpack.c.l.b16 %v3538
  %v3571 = vunpack.c.l.b16 %v3539
  %v3572 = vunpack.c.l.b16 %v3540
  %v3573 = vpack.c.b16 %v3558, %v3557
  %v3574 = vpack.c.b16 %v3560, %v3559
  %v3575 = vpack.c.b16 %v3562, %v3561
  %v3576 = vpack.c.b16 %v3564, %v3563
  %v3577 = vpack.c.b16 %v3566, %v3565
  %v3578 = vpack.c.b16 %v3568, %v3567
  %v3579 = vpack.c.b16 %v3570, %v3569
  %v3580 = vpack.c.b16 %v3572, %v3571
  %3589 = vmatprep.subr.bf16.mxu0 0
  %3590 = vmatpush1.bf16.msra.mxu0 %v3580
  %3591 = vmatprep.subr.bf16.mxu0 0
  %3592 = vmatpush1.bf16.msra.mxu0 %v3579
  %3593 = vmatprep.subr.bf16.mxu0 0
  %3594 = vmatpush1.bf16.msra.mxu0 %v3578
  %3595 = vmatprep.subr.bf16.mxu0 0
  %3596 = vmatpush1.bf16.msra.mxu0 %v3577
  %3597 = vmatprep.subr.bf16.mxu0 0
  %3598 = vmatpush1.bf16.msra.mxu0 %v3576
  %3599 = vmatprep.subr.bf16.mxu0 0
  %3600 = vmatpush1.bf16.msra.mxu0 %v3575
  %3601 = vmatprep.subr.bf16.mxu0 0
  %3602 = vmatpush1.bf16.msra.mxu0 %v3574
  %3603 = vmatprep.subr.bf16.mxu0 0
  %3604 = vmatpush1.bf16.msra.mxu0 %v3573
  %3605 = vmatprep.subr.bf16.mxu0 0
  %3606 = vmatpush2.bf16.msra.mxu0 0
  %3607 = vmatprep.subr.bf16.mxu0 0
  %3608 = vmatpush2.bf16.msra.mxu0 0
  %3609 = vmatprep.subr.bf16.mxu0 0
  %3610 = vmatpush2.bf16.msra.mxu0 0
  %3611 = vmatprep.subr.bf16.mxu0 0
  %3612 = vmatpush2.bf16.msra.mxu0 0
  %3613 = vmatprep.subr.bf16.mxu0 0
  %3614 = vmatpush2.bf16.msra.mxu0 0
  %3615 = vmatprep.subr.bf16.mxu0 0
  %3616 = vmatpush2.bf16.msra.mxu0 0
  %3617 = vmatprep.subr.bf16.mxu0 0
  %3618 = vmatpush2.bf16.msra.mxu0 0
  %3619 = vmatprep.subr.bf16.mxu0 0
  %3620 = vmatpush2.bf16.msra.mxu0 0
  %3621 = vmatprep.mubr.bf16.mxu0 0
  %3622 = vmatmul.mubr.bf16.gmra.mxu0 %v3159
  %v3623 = vpop.f32.mrf.mxu0
  %v3624 = vadd.f32 0.0, %v3623
  %v3625 = vpop.f32.mrf.mxu0
  %v3626 = vpop.f32.mrf.mxu0
  %v3627 = vadd.f32 0.0, %v3626
  %v3628 = vpop.f32.mrf.mxu0
  %3629 = vmatprep.mubr.bf16.mxu0 0
  %3630 = vmatmul.mubr.bf16.gmra.mxu0 %v3160
  %v3631 = vpop.f32.mrf.mxu0
  %v3632 = vadd.f32 0.0, %v3631
  %v3633 = vpop.f32.mrf.mxu0
  %v3634 = vpop.f32.mrf.mxu0
  %v3635 = vadd.f32 0.0, %v3634
  %v3636 = vpop.f32.mrf.mxu0
  %3637 = vmatprep.mubr.bf16.mxu0 0
  %3638 = vmatmul.mubr.bf16.gmra.mxu0 %v3161
  %v3639 = vpop.f32.mrf.mxu0
  %v3640 = vadd.f32 0.0, %v3639
  %v3641 = vpop.f32.mrf.mxu0
  %v3642 = vpop.f32.mrf.mxu0
  %v3643 = vadd.f32 0.0, %v3642
  %v3644 = vpop.f32.mrf.mxu0
  %3645 = vmatprep.mubr.bf16.mxu0 0
  %3646 = vmatmul.mubr.bf16.gmra.mxu0 %v3162
  %v3647 = vpop.f32.mrf.mxu0
  %v3648 = vadd.f32 0.0, %v3647
  %v3649 = vpop.f32.mrf.mxu0
  %v3650 = vpop.f32.mrf.mxu0
  %v3651 = vadd.f32 0.0, %v3650
  %v3652 = vpop.f32.mrf.mxu0
  %3653 = vmatprep.mubr.bf16.mxu0 0
  %3654 = vmatmul.mubr.bf16.gmra.mxu0 %v3163
  %v3655 = vpop.f32.mrf.mxu0
  %v3656 = vadd.f32 0.0, %v3655
  %v3657 = vpop.f32.mrf.mxu0
  %v3658 = vpop.f32.mrf.mxu0
  %v3659 = vadd.f32 0.0, %v3658
  %v3660 = vpop.f32.mrf.mxu0
  %3661 = vmatprep.mubr.bf16.mxu0 0
  %3662 = vmatmul.mubr.bf16.gmra.mxu0 %v3164
  %v3663 = vpop.f32.mrf.mxu0
  %v3664 = vadd.f32 0.0, %v3663
  %v3665 = vpop.f32.mrf.mxu0
  %v3666 = vpop.f32.mrf.mxu0
  %v3667 = vadd.f32 0.0, %v3666
  %v3668 = vpop.f32.mrf.mxu0
  %3669 = vmatprep.mubr.bf16.mxu0 0
  %3670 = vmatmul.mubr.bf16.gmra.mxu0 %v3165
  %v3671 = vpop.f32.mrf.mxu0
  %v3672 = vadd.f32 0.0, %v3671
  %v3673 = vpop.f32.mrf.mxu0
  %v3674 = vpop.f32.mrf.mxu0
  %v3675 = vadd.f32 0.0, %v3674
  %v3676 = vpop.f32.mrf.mxu0
  %3677 = vmatprep.mubr.bf16.mxu0 0
  %3678 = vmatmul.mubr.bf16.gmra.mxu0 %v3166
  %v3679 = vpop.f32.mrf.mxu0
  %v3680 = vadd.f32 0.0, %v3679
  %v3681 = vpop.f32.mrf.mxu0
  %v3682 = vpop.f32.mrf.mxu0
  %v3683 = vadd.f32 0.0, %v3682
  %v3684 = vpop.f32.mrf.mxu0
  %3685 = vdwg.mxu0
  %v3686 = vmul.f32 %v3624, %v1394
  %v3687 = vmul.f32 %v3627, %v1399
  %v3688 = vmul.f32 %v3632, %v1404
  %v3689 = vmul.f32 %v3635, %v1409
  %v3690 = vmul.f32 %v3640, %v1414
  %v3691 = vmul.f32 %v3643, %v1419
  %v3692 = vmul.f32 %v3648, %v1424
  %v3693 = vmul.f32 %v3651, %v1429
  %v3694 = vmul.f32 %v3656, %v1434
  %v3695 = vmul.f32 %v3659, %v1439
  %v3696 = vmul.f32 %v3664, %v1444
  %v3697 = vmul.f32 %v3667, %v1449
  %v3698 = vmul.f32 %v3672, %v1454
  %v3699 = vmul.f32 %v3675, %v1459
  %v3700 = vmul.f32 %v3680, %v1464
  %v3701 = vmul.f32 %v3683, %v1469
  %v3702 = vld [vmem:[%s45] sm:$0xf]
  %v3703 = vld [vmem:[%s45 + $0x4] sm:$0xf]
  %v3704 = vld [vmem:[%s45 + $0x8] sm:$0xf]
  %v3705 = vld [vmem:[%s45 + $0xc] sm:$0xf]
  %v3706 = vld [vmem:[%s45 + $0x10] sm:$0xf]
  %v3707 = vld [vmem:[%s45 + $0x14] sm:$0xf]
  %v3708 = vld [vmem:[%s45 + $0x18] sm:$0xf]
  %v3709 = vld [vmem:[%s45 + $0x1c] sm:$0xf]
  %v3710 = vld [vmem:[%s45 + $0x20] sm:$0xf]
  %v3711 = vld [vmem:[%s45 + $0x24] sm:$0xf]
  %v3712 = vld [vmem:[%s45 + $0x28] sm:$0xf]
  %v3713 = vld [vmem:[%s45 + $0x2c] sm:$0xf]
  %v3714 = vld [vmem:[%s45 + $0x30] sm:$0xf]
  %v3715 = vld [vmem:[%s45 + $0x34] sm:$0xf]
  %v3716 = vld [vmem:[%s45 + $0x38] sm:$0xf]
  %v3717 = vld [vmem:[%s45 + $0x3c] sm:$0xf]
  %v3734 = vunpack.c.l.b16 %v3702
  %v3735 = vunpack.c.l.b16 %v3703
  %v3736 = vunpack.c.l.b16 %v3704
  %v3737 = vunpack.c.l.b16 %v3705
  %v3738 = vunpack.c.l.b16 %v3706
  %v3739 = vunpack.c.l.b16 %v3707
  %v3740 = vunpack.c.l.b16 %v3708
  %v3741 = vunpack.c.l.b16 %v3709
  %v3742 = vunpack.c.l.b16 %v3710
  %v3743 = vunpack.c.l.b16 %v3711
  %v3744 = vunpack.c.l.b16 %v3712
  %v3745 = vunpack.c.l.b16 %v3713
  %v3746 = vunpack.c.l.b16 %v3714
  %v3747 = vunpack.c.l.b16 %v3715
  %v3748 = vunpack.c.l.b16 %v3716
  %v3749 = vunpack.c.l.b16 %v3717
  %v3750 = vpack.c.b16 %v3735, %v3734
  %v3751 = vpack.c.b16 %v3737, %v3736
  %v3752 = vpack.c.b16 %v3739, %v3738
  %v3753 = vpack.c.b16 %v3741, %v3740
  %v3754 = vpack.c.b16 %v3743, %v3742
  %v3755 = vpack.c.b16 %v3745, %v3744
  %v3756 = vpack.c.b16 %v3747, %v3746
  %v3757 = vpack.c.b16 %v3749, %v3748
  %3766 = vmatprep.subr.bf16.mxu0 0
  %3767 = vmatpush1.bf16.msra.mxu0 %v3757
  %3768 = vmatprep.subr.bf16.mxu0 0
  %3769 = vmatpush1.bf16.msra.mxu0 %v3756
  %3770 = vmatprep.subr.bf16.mxu0 0
  %3771 = vmatpush1.bf16.msra.mxu0 %v3755
  %3772 = vmatprep.subr.bf16.mxu0 0
  %3773 = vmatpush1.bf16.msra.mxu0 %v3754
  %3774 = vmatprep.subr.bf16.mxu0 0
  %3775 = vmatpush1.bf16.msra.mxu0 %v3753
  %3776 = vmatprep.subr.bf16.mxu0 0
  %3777 = vmatpush1.bf16.msra.mxu0 %v3752
  %3778 = vmatprep.subr.bf16.mxu0 0
  %3779 = vmatpush1.bf16.msra.mxu0 %v3751
  %3780 = vmatprep.subr.bf16.mxu0 0
  %3781 = vmatpush1.bf16.msra.mxu0 %v3750
  %3782 = vmatprep.subr.bf16.mxu0 0
  %3783 = vmatpush2.bf16.msra.mxu0 0
  %3784 = vmatprep.subr.bf16.mxu0 0
  %3785 = vmatpush2.bf16.msra.mxu0 0
  %3786 = vmatprep.subr.bf16.mxu0 0
  %3787 = vmatpush2.bf16.msra.mxu0 0
  %3788 = vmatprep.subr.bf16.mxu0 0
  %3789 = vmatpush2.bf16.msra.mxu0 0
  %3790 = vmatprep.subr.bf16.mxu0 0
  %3791 = vmatpush2.bf16.msra.mxu0 0
  %3792 = vmatprep.subr.bf16.mxu0 0
  %3793 = vmatpush2.bf16.msra.mxu0 0
  %3794 = vmatprep.subr.bf16.mxu0 0
  %3795 = vmatpush2.bf16.msra.mxu0 0
  %3796 = vmatprep.subr.bf16.mxu0 0
  %3797 = vmatpush2.bf16.msra.mxu0 0
  %3798 = vmatprep.mubr.bf16.mxu0 0
  %3799 = vmatmul.mubr.bf16.gmra.mxu0 %v3517
  %v3800 = vpop.f32.mrf.mxu0
  %v3801 = vadd.f32 0.0, %v3800
  %v3802 = vpop.f32.mrf.mxu0
  %v3803 = vpop.f32.mrf.mxu0
  %v3804 = vadd.f32 0.0, %v3803
  %v3805 = vpop.f32.mrf.mxu0
  %3806 = vmatprep.mubr.bf16.mxu0 0
  %3807 = vmatmul.mubr.bf16.gmra.mxu0 %v3518
  %v3808 = vpop.f32.mrf.mxu0
  %v3809 = vadd.f32 0.0, %v3808
  %v3810 = vpop.f32.mrf.mxu0
  %v3811 = vpop.f32.mrf.mxu0
  %v3812 = vadd.f32 0.0, %v3811
  %v3813 = vpop.f32.mrf.mxu0
  %3814 = vmatprep.mubr.bf16.mxu0 0
  %3815 = vmatmul.mubr.bf16.gmra.mxu0 %v3519
  %v3816 = vpop.f32.mrf.mxu0
  %v3817 = vadd.f32 0.0, %v3816
  %v3818 = vpop.f32.mrf.mxu0
  %v3819 = vpop.f32.mrf.mxu0
  %v3820 = vadd.f32 0.0, %v3819
  %v3821 = vpop.f32.mrf.mxu0
  %3822 = vmatprep.mubr.bf16.mxu0 0
  %3823 = vmatmul.mubr.bf16.gmra.mxu0 %v3520
  %v3824 = vpop.f32.mrf.mxu0
  %v3825 = vadd.f32 0.0, %v3824
  %v3826 = vpop.f32.mrf.mxu0
  %v3827 = vpop.f32.mrf.mxu0
  %v3828 = vadd.f32 0.0, %v3827
  %v3829 = vpop.f32.mrf.mxu0
  %3830 = vmatprep.mubr.bf16.mxu0 0
  %3831 = vmatmul.mubr.bf16.gmra.mxu0 %v3521
  %v3832 = vpop.f32.mrf.mxu0
  %v3833 = vadd.f32 0.0, %v3832
  %v3834 = vpop.f32.mrf.mxu0
  %v3835 = vpop.f32.mrf.mxu0
  %v3836 = vadd.f32 0.0, %v3835
  %v3837 = vpop.f32.mrf.mxu0
  %3838 = vmatprep.mubr.bf16.mxu0 0
  %3839 = vmatmul.mubr.bf16.gmra.mxu0 %v3522
  %v3840 = vpop.f32.mrf.mxu0
  %v3841 = vadd.f32 0.0, %v3840
  %v3842 = vpop.f32.mrf.mxu0
  %v3843 = vpop.f32.mrf.mxu0
  %v3844 = vadd.f32 0.0, %v3843
  %v3845 = vpop.f32.mrf.mxu0
  %3846 = vmatprep.mubr.bf16.mxu0 0
  %3847 = vmatmul.mubr.bf16.gmra.mxu0 %v3523
  %v3848 = vpop.f32.mrf.mxu0
  %v3849 = vadd.f32 0.0, %v3848
  %v3850 = vpop.f32.mrf.mxu0
  %v3851 = vpop.f32.mrf.mxu0
  %v3852 = vadd.f32 0.0, %v3851
  %v3853 = vpop.f32.mrf.mxu0
  %3854 = vmatprep.mubr.bf16.mxu0 0
  %3855 = vmatmul.mubr.bf16.gmra.mxu0 %v3524
  %v3856 = vpop.f32.mrf.mxu0
  %v3857 = vadd.f32 0.0, %v3856
  %v3858 = vpop.f32.mrf.mxu0
  %v3859 = vpop.f32.mrf.mxu0
  %v3860 = vadd.f32 0.0, %v3859
  %v3861 = vpop.f32.mrf.mxu0
  %3862 = vdwg.mxu0
  %v3863 = vpack.c.bf16 %v3687, %v3686
  %v3864 = vpack.c.bf16 %v3804, %v3801
  %v3865 = vpack.c.bf16 %v3689, %v3688
  %v3866 = vpack.c.bf16 %v3812, %v3809
  %v3867 = vpack.c.bf16 %v3691, %v3690
  %v3868 = vpack.c.bf16 %v3820, %v3817
  %v3869 = vpack.c.bf16 %v3693, %v3692
  %v3870 = vpack.c.bf16 %v3828, %v3825
  %v3871 = vpack.c.bf16 %v3695, %v3694
  %v3872 = vpack.c.bf16 %v3836, %v3833
  %v3873 = vpack.c.bf16 %v3697, %v3696
  %v3874 = vpack.c.bf16 %v3844, %v3841
  %v3875 = vpack.c.bf16 %v3699, %v3698
  %v3876 = vpack.c.bf16 %v3852, %v3849
  %v3877 = vpack.c.bf16 %v3701, %v3700
  %v3878 = vpack.c.bf16 %v3860, %v3857
  %3879 = vmatprep.subr.bf16.mxu0 %v3878
  %3880 = vmatpush1.bf16.msra.mxu0 %v3877
  %3881 = vmatprep.subr.bf16.mxu0 %v3876
  %3882 = vmatpush1.bf16.msra.mxu0 %v3875
  %3883 = vmatprep.subr.bf16.mxu0 %v3874
  %3884 = vmatpush1.bf16.msra.mxu0 %v3873
  %3885 = vmatprep.subr.bf16.mxu0 %v3872
  %3886 = vmatpush1.bf16.msra.mxu0 %v3871
  %3887 = vmatprep.subr.bf16.mxu0 %v3870
  %3888 = vmatpush1.bf16.msra.mxu0 %v3869
  %3889 = vmatprep.subr.bf16.mxu0 %v3868
  %3890 = vmatpush1.bf16.msra.mxu0 %v3867
  %3891 = vmatprep.subr.bf16.mxu0 %v3866
  %3892 = vmatpush1.bf16.msra.mxu0 %v3865
  %3893 = vmatprep.subr.bf16.mxu0 %v3864
  %3894 = vmatpush1.bf16.msra.mxu0 %v3863
  %3895 = vmatprep.subr.bf16.mxu0 0
  %3896 = vmatpush2.bf16.msra.mxu0 0
  %3897 = vmatprep.subr.bf16.mxu0 0
  %3898 = vmatpush2.bf16.msra.mxu0 0
  %3899 = vmatprep.subr.bf16.mxu0 0
  %3900 = vmatpush2.bf16.msra.mxu0 0
  %3901 = vmatprep.subr.bf16.mxu0 0
  %3902 = vmatpush2.bf16.msra.mxu0 0
  %3903 = vmatprep.subr.bf16.mxu0 0
  %3904 = vmatpush2.bf16.msra.mxu0 0
  %3905 = vmatprep.subr.bf16.mxu0 0
  %3906 = vmatpush2.bf16.msra.mxu0 0
  %3907 = vmatprep.subr.bf16.mxu0 0
  %3908 = vmatpush2.bf16.msra.mxu0 0
  %3909 = vmatprep.subr.bf16.mxu0 0
  %3910 = vmatpush2.bf16.msra.mxu0 0
  %3911 = vmatprep.mubr.bf16.mxu0 0
  %3912 = vmatmul.mubr.bf16.gmra.mxu0 %v1567
  %v3913 = vpop.f32.mrf.mxu0
  %v3914 = vadd.f32 0.0, %v3913
  %v3915 = vpop.f32.mrf.mxu0
  %v3916 = vadd.f32 0.0, %v3915
  %v3917 = vpop.f32.mrf.mxu0
  %v3918 = vadd.f32 0.0, %v3917
  %v3919 = vpop.f32.mrf.mxu0
  %v3920 = vadd.f32 0.0, %v3919
  %3921 = vmatprep.mubr.bf16.mxu0 0
  %3922 = vmatmul.mubr.bf16.gmra.mxu0 %v1568
  %v3923 = vpop.f32.mrf.mxu0
  %v3924 = vadd.f32 0.0, %v3923
  %v3925 = vpop.f32.mrf.mxu0
  %v3926 = vadd.f32 0.0, %v3925
  %v3927 = vpop.f32.mrf.mxu0
  %v3928 = vadd.f32 0.0, %v3927
  %v3929 = vpop.f32.mrf.mxu0
  %v3930 = vadd.f32 0.0, %v3929
  %3931 = vmatprep.mubr.bf16.mxu0 0
  %3932 = vmatmul.mubr.bf16.gmra.mxu0 %v1569
  %v3933 = vpop.f32.mrf.mxu0
  %v3934 = vadd.f32 0.0, %v3933
  %v3935 = vpop.f32.mrf.mxu0
  %v3936 = vadd.f32 0.0, %v3935
  %v3937 = vpop.f32.mrf.mxu0
  %v3938 = vadd.f32 0.0, %v3937
  %v3939 = vpop.f32.mrf.mxu0
  %v3940 = vadd.f32 0.0, %v3939
  %3941 = vmatprep.mubr.bf16.mxu0 0
  %3942 = vmatmul.mubr.bf16.gmra.mxu0 %v1570
  %v3943 = vpop.f32.mrf.mxu0
  %v3944 = vadd.f32 0.0, %v3943
  %v3945 = vpop.f32.mrf.mxu0
  %v3946 = vadd.f32 0.0, %v3945
  %v3947 = vpop.f32.mrf.mxu0
  %v3948 = vadd.f32 0.0, %v3947
  %v3949 = vpop.f32.mrf.mxu0
  %v3950 = vadd.f32 0.0, %v3949
  %3951 = vmatprep.mubr.bf16.mxu0 0
  %3952 = vmatmul.mubr.bf16.gmra.mxu0 %v1571
  %v3953 = vpop.f32.mrf.mxu0
  %v3954 = vadd.f32 0.0, %v3953
  %v3955 = vpop.f32.mrf.mxu0
  %v3956 = vadd.f32 0.0, %v3955
  %v3957 = vpop.f32.mrf.mxu0
  %v3958 = vadd.f32 0.0, %v3957
  %v3959 = vpop.f32.mrf.mxu0
  %v3960 = vadd.f32 0.0, %v3959
  %3961 = vmatprep.mubr.bf16.mxu0 0
  %3962 = vmatmul.mubr.bf16.gmra.mxu0 %v1572
  %v3963 = vpop.f32.mrf.mxu0
  %v3964 = vadd.f32 0.0, %v3963
  %v3965 = vpop.f32.mrf.mxu0
  %v3966 = vadd.f32 0.0, %v3965
  %v3967 = vpop.f32.mrf.mxu0
  %v3968 = vadd.f32 0.0, %v3967
  %v3969 = vpop.f32.mrf.mxu0
  %v3970 = vadd.f32 0.0, %v3969
  %3971 = vmatprep.mubr.bf16.mxu0 0
  %3972 = vmatmul.mubr.bf16.gmra.mxu0 %v1573
  %v3973 = vpop.f32.mrf.mxu0
  %v3974 = vadd.f32 0.0, %v3973
  %v3975 = vpop.f32.mrf.mxu0
  %v3976 = vadd.f32 0.0, %v3975
  %v3977 = vpop.f32.mrf.mxu0
  %v3978 = vadd.f32 0.0, %v3977
  %v3979 = vpop.f32.mrf.mxu0
  %v3980 = vadd.f32 0.0, %v3979
  %3981 = vmatprep.mubr.bf16.mxu0 0
  %3982 = vmatmul.mubr.bf16.gmra.mxu0 %v1574
  %v3983 = vpop.f32.mrf.mxu0
  %v3984 = vadd.f32 0.0, %v3983
  %v3985 = vpop.f32.mrf.mxu0
  %v3986 = vadd.f32 0.0, %v3985
  %v3987 = vpop.f32.mrf.mxu0
  %v3988 = vadd.f32 0.0, %v3987
  %v3989 = vpop.f32.mrf.mxu0
  %v3990 = vadd.f32 0.0, %v3989
  %3991 = vdwg.mxu0
  %v3992 = vmul.f32 %v3914, %v1394
  %v3993 = vmul.f32 %v3918, %v1399
  %v3994 = vmul.f32 %v3924, %v1404
  %v3995 = vmul.f32 %v3928, %v1409
  %v3996 = vmul.f32 %v3934, %v1414
  %v3997 = vmul.f32 %v3938, %v1419
  %v3998 = vmul.f32 %v3944, %v1424
  %v3999 = vmul.f32 %v3948, %v1429
  %v4000 = vmul.f32 %v3954, %v1434
  %v4001 = vmul.f32 %v3958, %v1439
  %v4002 = vmul.f32 %v3964, %v1444
  %v4003 = vmul.f32 %v3968, %v1449
  %v4004 = vmul.f32 %v3974, %v1454
  %v4005 = vmul.f32 %v3978, %v1459
  %v4006 = vmul.f32 %v3984, %v1464
  %v4007 = vmul.f32 %v3988, %v1469
  %v4008 = vld [vmem:[%s41] sm:$0x1]
  %v4010 = vlaneseq
  %v4011 = vshrl.u32 %v4010, 7
  %v4012 = vsub.s32 0, %v4011
  %v4013 = vrot.slane %v4008, %v4012
  %v4015 = vmul.f32 %v3005, %v4013
  %v4016 = vmul.f32 %v3010, %v4013
  %v4017 = vmul.f32 %v3015, %v4013
  %v4018 = vmul.f32 %v3020, %v4013
  %v4019 = vmul.f32 %v3025, %v4013
  %v4020 = vmul.f32 %v3030, %v4013
  %v4021 = vmul.f32 %v3035, %v4013
  %v4022 = vmul.f32 %v3040, %v4013
  %v4023 = vmul.f32 %v3045, %v4013
  %v4024 = vmul.f32 %v3050, %v4013
  %v4025 = vmul.f32 %v3055, %v4013
  %v4026 = vmul.f32 %v3060, %v4013
  %v4027 = vmul.f32 %v3065, %v4013
  %v4028 = vmul.f32 %v3070, %v4013
  %v4029 = vmul.f32 %v3075, %v4013
  %v4030 = vmul.f32 %v3080, %v4013
  %v4031 = vadd.f32 %v3992, %v4015
  %v4032 = vadd.f32 %v3993, %v4016
  %v4033 = vadd.f32 %v3994, %v4017
  %v4034 = vadd.f32 %v3995, %v4018
  %v4035 = vadd.f32 %v3996, %v4019
  %v4036 = vadd.f32 %v3997, %v4020
  %v4037 = vadd.f32 %v3998, %v4021
  %v4038 = vadd.f32 %v3999, %v4022
  %v4039 = vadd.f32 %v4000, %v4023
  %v4040 = vadd.f32 %v4001, %v4024
  %v4041 = vadd.f32 %v4002, %v4025
  %v4042 = vadd.f32 %v4003, %v4026
  %v4043 = vadd.f32 %v4004, %v4027
  %v4044 = vadd.f32 %v4005, %v4028
  %v4045 = vadd.f32 %v4006, %v4029
  %v4046 = vadd.f32 %v4007, %v4030
  %v4047 = vld [vmem:[%s43] sm:$0x1]
  %v4049 = vlaneseq
  %v4050 = vshrl.u32 %v4049, 7
  %v4051 = vsub.s32 0, %v4050
  %v4052 = vrot.slane %v4047, %v4051
  %v4054 = vadd.f32 %v4031, %v4052
  %v4055 = vadd.f32 %v4032, %v4052
  %v4056 = vadd.f32 %v4033, %v4052
  %v4057 = vadd.f32 %v4034, %v4052
  %v4058 = vadd.f32 %v4035, %v4052
  %v4059 = vadd.f32 %v4036, %v4052
  %v4060 = vadd.f32 %v4037, %v4052
  %v4061 = vadd.f32 %v4038, %v4052
  %v4062 = vadd.f32 %v4039, %v4052
  %v4063 = vadd.f32 %v4040, %v4052
  %v4064 = vadd.f32 %v4041, %v4052
  %v4065 = vadd.f32 %v4042, %v4052
  %v4066 = vadd.f32 %v4043, %v4052
  %v4067 = vadd.f32 %v4044, %v4052
  %v4068 = vadd.f32 %v4045, %v4052
  %v4069 = vadd.f32 %v4046, %v4052
  %v4070 = vmax.f32 %v4054, 0.0
  %v4071 = vmax.f32 %v4055, 0.0
  %v4072 = vmax.f32 %v4056, 0.0
  %v4073 = vmax.f32 %v4057, 0.0
  %v4074 = vmax.f32 %v4058, 0.0
  %v4075 = vmax.f32 %v4059, 0.0
  %v4076 = vmax.f32 %v4060, 0.0
  %v4077 = vmax.f32 %v4061, 0.0
  %v4078 = vmax.f32 %v4062, 0.0
  %v4079 = vmax.f32 %v4063, 0.0
  %v4080 = vmax.f32 %v4064, 0.0
  %v4081 = vmax.f32 %v4065, 0.0
  %v4082 = vmax.f32 %v4066, 0.0
  %v4083 = vmax.f32 %v4067, 0.0
  %v4084 = vmax.f32 %v4068, 0.0
  %v4085 = vmax.f32 %v4069, 0.0
  %v4086 = vpack.c.bf16 %v4071, %v4070
  %v4087 = vpack.c.bf16 %v4073, %v4072
  %v4088 = vpack.c.bf16 %v4075, %v4074
  %v4089 = vpack.c.bf16 %v4077, %v4076
  %v4090 = vpack.c.bf16 %v4079, %v4078
  %v4091 = vpack.c.bf16 %v4081, %v4080
  %v4092 = vpack.c.bf16 %v4083, %v4082
  %v4093 = vpack.c.bf16 %v4085, %v4084
  %v4094 = vld [vmem:[%s47] sm:$0x1]
  %v4096 = vlaneseq
  %v4097 = vshrl.u32 %v4096, 7
  %v4098 = vsub.s32 0, %v4097
  %v4099 = vrot.slane %v4094, %v4098
  %v4101 = vmul.f32 %v3171, %v4099
  %v4102 = vmul.f32 %v3176, %v4099
  %v4103 = vmul.f32 %v3181, %v4099
  %v4104 = vmul.f32 %v3186, %v4099
  %v4105 = vmul.f32 %v3191, %v4099
  %v4106 = vmul.f32 %v3196, %v4099
  %v4107 = vmul.f32 %v3201, %v4099
  %v4108 = vmul.f32 %v3206, %v4099
  %v4109 = vmul.f32 %v3211, %v4099
  %v4110 = vmul.f32 %v3216, %v4099
  %v4111 = vmul.f32 %v3221, %v4099
  %v4112 = vmul.f32 %v3226, %v4099
  %v4113 = vmul.f32 %v3231, %v4099
  %v4114 = vmul.f32 %v3236, %v4099
  %v4115 = vmul.f32 %v3241, %v4099
  %v4116 = vmul.f32 %v3246, %v4099
  %v4117 = vadd.f32 %v3916, %v4101
  %v4118 = vadd.f32 %v3920, %v4102
  %v4119 = vadd.f32 %v3926, %v4103
  %v4120 = vadd.f32 %v3930, %v4104
  %v4121 = vadd.f32 %v3936, %v4105
  %v4122 = vadd.f32 %v3940, %v4106
  %v4123 = vadd.f32 %v3946, %v4107
  %v4124 = vadd.f32 %v3950, %v4108
  %v4125 = vadd.f32 %v3956, %v4109
  %v4126 = vadd.f32 %v3960, %v4110
  %v4127 = vadd.f32 %v3966, %v4111
  %v4128 = vadd.f32 %v3970, %v4112
  %v4129 = vadd.f32 %v3976, %v4113
  %v4130 = vadd.f32 %v3980, %v4114
  %v4131 = vadd.f32 %v3986, %v4115
  %v4132 = vadd.f32 %v3990, %v4116
  %v4133 = vld [vmem:[%s49] sm:$0x1]
  %v4135 = vlaneseq
  %v4136 = vshrl.u32 %v4135, 7
  %v4137 = vsub.s32 0, %v4136
  %v4138 = vrot.slane %v4133, %v4137
  %v4140 = vadd.f32 %v4117, %v4138
  %v4141 = vadd.f32 %v4118, %v4138
  %v4142 = vadd.f32 %v4119, %v4138
  %v4143 = vadd.f32 %v4120, %v4138
  %v4144 = vadd.f32 %v4121, %v4138
  %v4145 = vadd.f32 %v4122, %v4138
  %v4146 = vadd.f32 %v4123, %v4138
  %v4147 = vadd.f32 %v4124, %v4138
  %v4148 = vadd.f32 %v4125, %v4138
  %v4149 = vadd.f32 %v4126, %v4138
  %v4150 = vadd.f32 %v4127, %v4138
  %v4151 = vadd.f32 %v4128, %v4138
  %v4152 = vadd.f32 %v4129, %v4138
  %v4153 = vadd.f32 %v4130, %v4138
  %v4154 = vadd.f32 %v4131, %v4138
  %v4155 = vadd.f32 %v4132, %v4138
  %v4156 = vmax.f32 %v4140, 0.0
  %v4157 = vmax.f32 %v4141, 0.0
  %v4158 = vmax.f32 %v4142, 0.0
  %v4159 = vmax.f32 %v4143, 0.0
  %v4160 = vmax.f32 %v4144, 0.0
  %v4161 = vmax.f32 %v4145, 0.0
  %v4162 = vmax.f32 %v4146, 0.0
  %v4163 = vmax.f32 %v4147, 0.0
  %v4164 = vmax.f32 %v4148, 0.0
  %v4165 = vmax.f32 %v4149, 0.0
  %v4166 = vmax.f32 %v4150, 0.0
  %v4167 = vmax.f32 %v4151, 0.0
  %v4168 = vmax.f32 %v4152, 0.0
  %v4169 = vmax.f32 %v4153, 0.0
  %v4170 = vmax.f32 %v4154, 0.0
  %v4171 = vmax.f32 %v4155, 0.0
  %v4172 = vpack.c.bf16 %v4157, %v4156
  %v4173 = vpack.c.bf16 %v4159, %v4158
  %v4174 = vpack.c.bf16 %v4161, %v4160
  %v4175 = vpack.c.bf16 %v4163, %v4162
  %v4176 = vpack.c.bf16 %v4165, %v4164
  %v4177 = vpack.c.bf16 %v4167, %v4166
  %v4178 = vpack.c.bf16 %v4169, %v4168
  %v4179 = vpack.c.bf16 %v4171, %v4170
  %v4180 = vld [vmem:[%s51] sm:$0xf]
  %v4181 = vld [vmem:[%s51 + $0x4] sm:$0xf]
  %v4182 = vld [vmem:[%s51 + $0x8] sm:$0xf]
  %v4183 = vld [vmem:[%s51 + $0xc] sm:$0xf]
  %v4184 = vld [vmem:[%s51 + $0x10] sm:$0xf]
  %v4185 = vld [vmem:[%s51 + $0x14] sm:$0xf]
  %v4186 = vld [vmem:[%s51 + $0x18] sm:$0xf]
  %v4187 = vld [vmem:[%s51 + $0x1c] sm:$0xf]
  %v4188 = vld [vmem:[%s51 + $0x20] sm:$0xf]
  %v4189 = vld [vmem:[%s51 + $0x24] sm:$0xf]
  %v4190 = vld [vmem:[%s51 + $0x28] sm:$0xf]
  %v4191 = vld [vmem:[%s51 + $0x2c] sm:$0xf]
  %v4192 = vld [vmem:[%s51 + $0x30] sm:$0xf]
  %v4193 = vld [vmem:[%s51 + $0x34] sm:$0xf]
  %v4194 = vld [vmem:[%s51 + $0x38] sm:$0xf]
  %v4195 = vld [vmem:[%s51 + $0x3c] sm:$0xf]
  %v4196 = vld [vmem:[%s53] sm:$0x1]
  %v4198 = vlaneseq
  %v4199 = vshrl.u32 %v4198, 7
  %v4200 = vsub.s32 0, %v4199
  %v4201 = vrot.slane %v4196, %v4200
  %v4219 = vunpack.c.l.b16 %v4180
  %v4220 = vunpack.c.l.b16 %v4181
  %v4221 = vunpack.c.l.b16 %v4182
  %v4222 = vunpack.c.l.b16 %v4183
  %v4223 = vunpack.c.l.b16 %v4184
  %v4224 = vunpack.c.l.b16 %v4185
  %v4225 = vunpack.c.l.b16 %v4186
  %v4226 = vunpack.c.l.b16 %v4187
  %v4227 = vunpack.c.l.b16 %v4188
  %v4228 = vunpack.c.l.b16 %v4189
  %v4229 = vunpack.c.l.b16 %v4190
  %v4230 = vunpack.c.l.b16 %v4191
  %v4231 = vunpack.c.l.b16 %v4192
  %v4232 = vunpack.c.l.b16 %v4193
  %v4233 = vunpack.c.l.b16 %v4194
  %v4234 = vunpack.c.l.b16 %v4195
  %v4235 = vpack.c.b16 %v4220, %v4219
  %v4236 = vpack.c.b16 %v4222, %v4221
  %v4237 = vpack.c.b16 %v4224, %v4223
  %v4238 = vpack.c.b16 %v4226, %v4225
  %v4239 = vpack.c.b16 %v4228, %v4227
  %v4240 = vpack.c.b16 %v4230, %v4229
  %v4241 = vpack.c.b16 %v4232, %v4231
  %v4242 = vpack.c.b16 %v4234, %v4233
  %4251 = vmatprep.subr.bf16.mxu0 0
  %4252 = vmatpush1.bf16.msra.mxu0 %v4242
  %4253 = vmatprep.subr.bf16.mxu0 0
  %4254 = vmatpush1.bf16.msra.mxu0 %v4241
  %4255 = vmatprep.subr.bf16.mxu0 0
  %4256 = vmatpush1.bf16.msra.mxu0 %v4240
  %4257 = vmatprep.subr.bf16.mxu0 0
  %4258 = vmatpush1.bf16.msra.mxu0 %v4239
  %4259 = vmatprep.subr.bf16.mxu0 0
  %4260 = vmatpush1.bf16.msra.mxu0 %v4238
  %4261 = vmatprep.subr.bf16.mxu0 0
  %4262 = vmatpush1.bf16.msra.mxu0 %v4237
  %4263 = vmatprep.subr.bf16.mxu0 0
  %4264 = vmatpush1.bf16.msra.mxu0 %v4236
  %4265 = vmatprep.subr.bf16.mxu0 0
  %4266 = vmatpush1.bf16.msra.mxu0 %v4235
  %4267 = vmatprep.subr.bf16.mxu0 0
  %4268 = vmatpush2.bf16.msra.mxu0 0
  %4269 = vmatprep.subr.bf16.mxu0 0
  %4270 = vmatpush2.bf16.msra.mxu0 0
  %4271 = vmatprep.subr.bf16.mxu0 0
  %4272 = vmatpush2.bf16.msra.mxu0 0
  %4273 = vmatprep.subr.bf16.mxu0 0
  %4274 = vmatpush2.bf16.msra.mxu0 0
  %4275 = vmatprep.subr.bf16.mxu0 0
  %4276 = vmatpush2.bf16.msra.mxu0 0
  %4277 = vmatprep.subr.bf16.mxu0 0
  %4278 = vmatpush2.bf16.msra.mxu0 0
  %4279 = vmatprep.subr.bf16.mxu0 0
  %4280 = vmatpush2.bf16.msra.mxu0 0
  %4281 = vmatprep.subr.bf16.mxu0 0
  %4282 = vmatpush2.bf16.msra.mxu0 0
  %4283 = vmatprep.mubr.bf16.mxu0 0
  %4284 = vmatmul.mubr.bf16.gmra.mxu0 %v4172
  %v4285 = vpop.f32.mrf.mxu0
  %v4286 = vadd.f32 %v4201, %v4285
  %v4287 = vpop.f32.mrf.mxu0
  %v4288 = vpop.f32.mrf.mxu0
  %v4289 = vadd.f32 %v4201, %v4288
  %v4290 = vpop.f32.mrf.mxu0
  %4291 = vmatprep.mubr.bf16.mxu0 0
  %4292 = vmatmul.mubr.bf16.gmra.mxu0 %v4173
  %v4293 = vpop.f32.mrf.mxu0
  %v4294 = vadd.f32 %v4201, %v4293
  %v4295 = vpop.f32.mrf.mxu0
  %v4296 = vpop.f32.mrf.mxu0
  %v4297 = vadd.f32 %v4201, %v4296
  %v4298 = vpop.f32.mrf.mxu0
  %4299 = vmatprep.mubr.bf16.mxu0 0
  %4300 = vmatmul.mubr.bf16.gmra.mxu0 %v4174
  %v4301 = vpop.f32.mrf.mxu0
  %v4302 = vadd.f32 %v4201, %v4301
  %v4303 = vpop.f32.mrf.mxu0
  %v4304 = vpop.f32.mrf.mxu0
  %v4305 = vadd.f32 %v4201, %v4304
  %v4306 = vpop.f32.mrf.mxu0
  %4307 = vmatprep.mubr.bf16.mxu0 0
  %4308 = vmatmul.mubr.bf16.gmra.mxu0 %v4175
  %v4309 = vpop.f32.mrf.mxu0
  %v4310 = vadd.f32 %v4201, %v4309
  %v4311 = vpop.f32.mrf.mxu0
  %v4312 = vpop.f32.mrf.mxu0
  %v4313 = vadd.f32 %v4201, %v4312
  %v4314 = vpop.f32.mrf.mxu0
  %4315 = vmatprep.mubr.bf16.mxu0 0
  %4316 = vmatmul.mubr.bf16.gmra.mxu0 %v4176
  %v4317 = vpop.f32.mrf.mxu0
  %v4318 = vadd.f32 %v4201, %v4317
  %v4319 = vpop.f32.mrf.mxu0
  %v4320 = vpop.f32.mrf.mxu0
  %v4321 = vadd.f32 %v4201, %v4320
  %v4322 = vpop.f32.mrf.mxu0
  %4323 = vmatprep.mubr.bf16.mxu0 0
  %4324 = vmatmul.mubr.bf16.gmra.mxu0 %v4177
  %v4325 = vpop.f32.mrf.mxu0
  %v4326 = vadd.f32 %v4201, %v4325
  %v4327 = vpop.f32.mrf.mxu0
  %v4328 = vpop.f32.mrf.mxu0
  %v4329 = vadd.f32 %v4201, %v4328
  %v4330 = vpop.f32.mrf.mxu0
  %4331 = vmatprep.mubr.bf16.mxu0 0
  %4332 = vmatmul.mubr.bf16.gmra.mxu0 %v4178
  %v4333 = vpop.f32.mrf.mxu0
  %v4334 = vadd.f32 %v4201, %v4333
  %v4335 = vpop.f32.mrf.mxu0
  %v4336 = vpop.f32.mrf.mxu0
  %v4337 = vadd.f32 %v4201, %v4336
  %v4338 = vpop.f32.mrf.mxu0
  %4339 = vmatprep.mubr.bf16.mxu0 0
  %4340 = vmatmul.mubr.bf16.gmra.mxu0 %v4179
  %v4341 = vpop.f32.mrf.mxu0
  %v4342 = vadd.f32 %v4201, %v4341
  %v4343 = vpop.f32.mrf.mxu0
  %v4344 = vpop.f32.mrf.mxu0
  %v4345 = vadd.f32 %v4201, %v4344
  %v4346 = vpop.f32.mrf.mxu0
  %4347 = vdwg.mxu0
  %v4348 = vmax.f32 %v4286, 0.0
  %v4349 = vmax.f32 %v4289, 0.0
  %v4350 = vmax.f32 %v4294, 0.0
  %v4351 = vmax.f32 %v4297, 0.0
  %v4352 = vmax.f32 %v4302, 0.0
  %v4353 = vmax.f32 %v4305, 0.0
  %v4354 = vmax.f32 %v4310, 0.0
  %v4355 = vmax.f32 %v4313, 0.0
  %v4356 = vmax.f32 %v4318, 0.0
  %v4357 = vmax.f32 %v4321, 0.0
  %v4358 = vmax.f32 %v4326, 0.0
  %v4359 = vmax.f32 %v4329, 0.0
  %v4360 = vmax.f32 %v4334, 0.0
  %v4361 = vmax.f32 %v4337, 0.0
  %v4362 = vmax.f32 %v4342, 0.0
  %v4363 = vmax.f32 %v4345, 0.0
  %v4364 = vpack.c.bf16 %v4349, %v4348
  %v4365 = vpack.c.bf16 %v4351, %v4350
  %v4366 = vpack.c.bf16 %v4353, %v4352
  %v4367 = vpack.c.bf16 %v4355, %v4354
  %v4368 = vpack.c.bf16 %v4357, %v4356
  %v4369 = vpack.c.bf16 %v4359, %v4358
  %v4370 = vpack.c.bf16 %v4361, %v4360
  %v4371 = vpack.c.bf16 %v4363, %v4362
  %v4372 = vld [vmem:[%s3] sm:$0xf]
  %4373 = vmatprep.subr.bf16.mxu0 %v4371
  %4374 = vmatpush1.bf16.msra.mxu0 %v4093
  %4375 = vmatprep.subr.bf16.mxu0 %v4370
  %4376 = vmatpush1.bf16.msra.mxu0 %v4092
  %4377 = vmatprep.subr.bf16.mxu0 %v4369
  %4378 = vmatpush1.bf16.msra.mxu0 %v4091
  %4379 = vmatprep.subr.bf16.mxu0 %v4368
  %4380 = vmatpush1.bf16.msra.mxu0 %v4090
  %4381 = vmatprep.subr.bf16.mxu0 %v4367
  %4382 = vmatpush1.bf16.msra.mxu0 %v4089
  %4383 = vmatprep.subr.bf16.mxu0 %v4366
  %4384 = vmatpush1.bf16.msra.mxu0 %v4088
  %4385 = vmatprep.subr.bf16.mxu0 %v4365
  %4386 = vmatpush1.bf16.msra.mxu0 %v4087
  %4387 = vmatprep.subr.bf16.mxu0 %v4364
  %4388 = vmatpush1.bf16.msra.mxu0 %v4086
  %4389 = vmatprep.subr.bf16.mxu0 0
  %4390 = vmatpush2.bf16.msra.mxu0 0
  %4391 = vmatprep.subr.bf16.mxu0 0
  %4392 = vmatpush2.bf16.msra.mxu0 0
  %4393 = vmatprep.subr.bf16.mxu0 0
  %4394 = vmatpush2.bf16.msra.mxu0 0
  %4395 = vmatprep.subr.bf16.mxu0 0
  %4396 = vmatpush2.bf16.msra.mxu0 0
  %4397 = vmatprep.subr.bf16.mxu0 0
  %4398 = vmatpush2.bf16.msra.mxu0 0
  %4399 = vmatprep.subr.bf16.mxu0 0
  %4400 = vmatpush2.bf16.msra.mxu0 0
  %4401 = vmatprep.subr.bf16.mxu0 0
  %4402 = vmatpush2.bf16.msra.mxu0 0
  %4403 = vmatprep.subr.bf16.mxu0 0
  %4404 = vmatpush2.bf16.msra.mxu0 0
  %4405 = vmatprep.mubr.bf16.mxu0 0
  %4406 = vmatmul.mubr.bf16.gmra.mxu0 %v4372
  %v4407 = vpop.f32.mrf.mxu0
  %v4408 = vadd.f32 0.0, %v4407
  %v4409 = vpop.f32.mrf.mxu0
  %v4410 = vadd.f32 0.0, %v4409
  %v4411 = vpop.f32.mrf.mxu0
  %v4412 = vpop.f32.mrf.mxu0
  %4413 = vdwg.mxu0
  %v4414 = vld [vmem:[%s55] sm:$0xf]
  %v4415 = vld [vmem:[%s55 + $0x4] sm:$0xf]
  %v4416 = vld [vmem:[%s55 + $0x8] sm:$0xf]
  %v4417 = vld [vmem:[%s55 + $0xc] sm:$0xf]
  %v4418 = vld [vmem:[%s55 + $0x10] sm:$0xf]
  %v4419 = vld [vmem:[%s55 + $0x14] sm:$0xf]
  %v4420 = vld [vmem:[%s55 + $0x18] sm:$0xf]
  %v4421 = vld [vmem:[%s55 + $0x1c] sm:$0xf]
  %v4422 = vld [vmem:[%s55 + $0x20] sm:$0xf]
  %v4423 = vld [vmem:[%s55 + $0x24] sm:$0xf]
  %v4424 = vld [vmem:[%s55 + $0x28] sm:$0xf]
  %v4425 = vld [vmem:[%s55 + $0x2c] sm:$0xf]
  %v4426 = vld [vmem:[%s55 + $0x30] sm:$0xf]
  %v4427 = vld [vmem:[%s55 + $0x34] sm:$0xf]
  %v4428 = vld [vmem:[%s55 + $0x38] sm:$0xf]
  %v4429 = vld [vmem:[%s55 + $0x3c] sm:$0xf]
  %v4430 = vld [vmem:[%s55 + $0x40] sm:$0xf]
  %v4431 = vld [vmem:[%s55 + $0x44] sm:$0xf]
  %v4432 = vld [vmem:[%s55 + $0x48] sm:$0xf]
  %v4433 = vld [vmem:[%s55 + $0x4c] sm:$0xf]
  %v4434 = vld [vmem:[%s55 + $0x50] sm:$0xf]
  %v4435 = vld [vmem:[%s55 + $0x54] sm:$0xf]
  %v4436 = vld [vmem:[%s55 + $0x58] sm:$0xf]
  %v4437 = vld [vmem:[%s55 + $0x5c] sm:$0xf]
  %v4438 = vld [vmem:[%s55 + $0x60] sm:$0xf]
  %v4439 = vld [vmem:[%s55 + $0x64] sm:$0xf]
  %v4440 = vld [vmem:[%s55 + $0x68] sm:$0xf]
  %v4441 = vld [vmem:[%s55 + $0x6c] sm:$0xf]
  %v4442 = vld [vmem:[%s55 + $0x70] sm:$0xf]
  %v4443 = vld [vmem:[%s55 + $0x74] sm:$0xf]
  %v4444 = vld [vmem:[%s55 + $0x78] sm:$0xf]
  %v4445 = vld [vmem:[%s55 + $0x7c] sm:$0xf]
  %v4446 = vpack.c.bf16 %v4408, %v4408
  %v4447 = vpack.c.bf16 %v4410, %v4410
  %v4448 = vld [vmem:[%s57] sm:$0xff]
  %v4481 = vunpack.c.l.b16 %v4414
  %v4482 = vunpack.c.l.b16 %v4415
  %v4483 = vunpack.c.l.b16 %v4416
  %v4484 = vunpack.c.l.b16 %v4417
  %v4485 = vunpack.c.l.b16 %v4418
  %v4486 = vunpack.c.l.b16 %v4419
  %v4487 = vunpack.c.l.b16 %v4420
  %v4488 = vunpack.c.l.b16 %v4421
  %v4489 = vunpack.c.l.b16 %v4422
  %v4490 = vunpack.c.l.b16 %v4423
  %v4491 = vunpack.c.l.b16 %v4424
  %v4492 = vunpack.c.l.b16 %v4425
  %v4493 = vunpack.c.l.b16 %v4426
  %v4494 = vunpack.c.l.b16 %v4427
  %v4495 = vunpack.c.l.b16 %v4428
  %v4496 = vunpack.c.l.b16 %v4429
  %v4497 = vunpack.c.l.b16 %v4430
  %v4498 = vunpack.c.l.b16 %v4431
  %v4499 = vunpack.c.l.b16 %v4432
  %v4500 = vunpack.c.l.b16 %v4433
  %v4501 = vunpack.c.l.b16 %v4434
  %v4502 = vunpack.c.l.b16 %v4435
  %v4503 = vunpack.c.l.b16 %v4436
  %v4504 = vunpack.c.l.b16 %v4437
  %v4505 = vunpack.c.l.b16 %v4438
  %v4506 = vunpack.c.l.b16 %v4439
  %v4507 = vunpack.c.l.b16 %v4440
  %v4508 = vunpack.c.l.b16 %v4441
  %v4509 = vunpack.c.l.b16 %v4442
  %v4510 = vunpack.c.l.b16 %v4443
  %v4511 = vunpack.c.l.b16 %v4444
  %v4512 = vunpack.c.l.b16 %v4445
  %v4513 = vpack.c.b16 %v4482, %v4481
  %v4514 = vpack.c.b16 %v4484, %v4483
  %v4515 = vpack.c.b16 %v4486, %v4485
  %v4516 = vpack.c.b16 %v4488, %v4487
  %v4517 = vpack.c.b16 %v4490, %v4489
  %v4518 = vpack.c.b16 %v4492, %v4491
  %v4519 = vpack.c.b16 %v4494, %v4493
  %v4520 = vpack.c.b16 %v4496, %v4495
  %v4521 = vpack.c.b16 %v4498, %v4497
  %v4522 = vpack.c.b16 %v4500, %v4499
  %v4523 = vpack.c.b16 %v4502, %v4501
  %v4524 = vpack.c.b16 %v4504, %v4503
  %v4525 = vpack.c.b16 %v4506, %v4505
  %v4526 = vpack.c.b16 %v4508, %v4507
  %v4527 = vpack.c.b16 %v4510, %v4509
  %v4528 = vpack.c.b16 %v4512, %v4511
  %4545 = vmatprep.subr.bf16.mxu0 0
  %4546 = vmatpush1.bf16.msra.mxu0 %v4520
  %4547 = vmatprep.subr.bf16.mxu0 0
  %4548 = vmatpush1.bf16.msra.mxu0 %v4519
  %4549 = vmatprep.subr.bf16.mxu0 0
  %4550 = vmatpush1.bf16.msra.mxu0 %v4518
  %4551 = vmatprep.subr.bf16.mxu0 0
  %4552 = vmatpush1.bf16.msra.mxu0 %v4517
  %4553 = vmatprep.subr.bf16.mxu0 0
  %4554 = vmatpush1.bf16.msra.mxu0 %v4516
  %4555 = vmatprep.subr.bf16.mxu0 0
  %4556 = vmatpush1.bf16.msra.mxu0 %v4515
  %4557 = vmatprep.subr.bf16.mxu0 0
  %4558 = vmatpush1.bf16.msra.mxu0 %v4514
  %4559 = vmatprep.subr.bf16.mxu0 0
  %4560 = vmatpush1.bf16.msra.mxu0 %v4513
  %4561 = vmatprep.subr.bf16.mxu0 0
  %4562 = vmatpush2.bf16.msra.mxu0 %v4528
  %4563 = vmatprep.subr.bf16.mxu0 0
  %4564 = vmatpush2.bf16.msra.mxu0 %v4527
  %4565 = vmatprep.subr.bf16.mxu0 0
  %4566 = vmatpush2.bf16.msra.mxu0 %v4526
  %4567 = vmatprep.subr.bf16.mxu0 0
  %4568 = vmatpush2.bf16.msra.mxu0 %v4525
  %4569 = vmatprep.subr.bf16.mxu0 0
  %4570 = vmatpush2.bf16.msra.mxu0 %v4524
  %4571 = vmatprep.subr.bf16.mxu0 0
  %4572 = vmatpush2.bf16.msra.mxu0 %v4523
  %4573 = vmatprep.subr.bf16.mxu0 0
  %4574 = vmatpush2.bf16.msra.mxu0 %v4522
  %4575 = vmatprep.subr.bf16.mxu0 0
  %4576 = vmatpush2.bf16.msra.mxu0 %v4521
  %4577 = vmatprep.mubr.bf16.mxu0 %v4447
  %4578 = vmatmul.mubr.bf16.gmra.mxu0 %v4446
  %v4579 = vpop.f32.mrf.mxu0
  %v4580 = vadd.f32 %v4448, %v4579
  %v4581 = vpop.f32.mrf.mxu0
  %v4582 = vpop.f32.mrf.mxu0
  %v4583 = vpop.f32.mrf.mxu0
  %4584 = vdwg.mxu0
  %v4585 = vmax.f32 %v4580, 0.0
  %v4586 = vld [vmem:[%s59] sm:$0xf]
  %v4587 = vld [vmem:[%s59 + $0x4] sm:$0xf]
  %v4588 = vld [vmem:[%s59 + $0x8] sm:$0xf]
  %v4589 = vld [vmem:[%s59 + $0xc] sm:$0xf]
  %v4590 = vld [vmem:[%s59 + $0x10] sm:$0xf]
  %v4591 = vld [vmem:[%s59 + $0x14] sm:$0xf]
  %v4592 = vld [vmem:[%s59 + $0x18] sm:$0xf]
  %v4593 = vld [vmem:[%s59 + $0x1c] sm:$0xf]
  %v4594 = vld [vmem:[%s59 + $0x20] sm:$0xf]
  %v4595 = vld [vmem:[%s59 + $0x24] sm:$0xf]
  %v4596 = vld [vmem:[%s59 + $0x28] sm:$0xf]
  %v4597 = vld [vmem:[%s59 + $0x2c] sm:$0xf]
  %v4598 = vld [vmem:[%s59 + $0x30] sm:$0xf]
  %v4599 = vld [vmem:[%s59 + $0x34] sm:$0xf]
  %v4600 = vld [vmem:[%s59 + $0x38] sm:$0xf]
  %v4601 = vld [vmem:[%s59 + $0x3c] sm:$0xf]
  %v4602 = vpack.c.bf16 %v4585, %v4585
  %v4603 = vld [vmem:[%s61] sm:$0x1]
  %v4605 = vlaneseq
  %v4606 = vshrl.u32 %v4605, 7
  %v4607 = vsub.s32 0, %v4606
  %v4608 = vrot.slane %v4603, %v4607
  %v4626 = vunpack.c.l.b16 %v4586
  %v4627 = vunpack.c.l.b16 %v4587
  %v4628 = vunpack.c.l.b16 %v4588
  %v4629 = vunpack.c.l.b16 %v4589
  %v4630 = vunpack.c.l.b16 %v4590
  %v4631 = vunpack.c.l.b16 %v4591
  %v4632 = vunpack.c.l.b16 %v4592
  %v4633 = vunpack.c.l.b16 %v4593
  %v4634 = vunpack.c.l.b16 %v4594
  %v4635 = vunpack.c.l.b16 %v4595
  %v4636 = vunpack.c.l.b16 %v4596
  %v4637 = vunpack.c.l.b16 %v4597
  %v4638 = vunpack.c.l.b16 %v4598
  %v4639 = vunpack.c.l.b16 %v4599
  %v4640 = vunpack.c.l.b16 %v4600
  %v4641 = vunpack.c.l.b16 %v4601
  %v4642 = vpack.c.b16 %v4627, %v4626
  %v4643 = vpack.c.b16 %v4629, %v4628
  %v4644 = vpack.c.b16 %v4631, %v4630
  %v4645 = vpack.c.b16 %v4633, %v4632
  %v4646 = vpack.c.b16 %v4635, %v4634
  %v4647 = vpack.c.b16 %v4637, %v4636
  %v4648 = vpack.c.b16 %v4639, %v4638
  %v4649 = vpack.c.b16 %v4641, %v4640
  %4658 = vmatprep.subr.bf16.mxu0 0
  %4659 = vmatpush1.bf16.msra.mxu0 %v4649
  %4660 = vmatprep.subr.bf16.mxu0 0
  %4661 = vmatpush1.bf16.msra.mxu0 %v4648
  %4662 = vmatprep.subr.bf16.mxu0 0
  %4663 = vmatpush1.bf16.msra.mxu0 %v4647
  %4664 = vmatprep.subr.bf16.mxu0 0
  %4665 = vmatpush1.bf16.msra.mxu0 %v4646
  %4666 = vmatprep.subr.bf16.mxu0 0
  %4667 = vmatpush1.bf16.msra.mxu0 %v4645
  %4668 = vmatprep.subr.bf16.mxu0 0
  %4669 = vmatpush1.bf16.msra.mxu0 %v4644
  %4670 = vmatprep.subr.bf16.mxu0 0
  %4671 = vmatpush1.bf16.msra.mxu0 %v4643
  %4672 = vmatprep.subr.bf16.mxu0 0
  %4673 = vmatpush1.bf16.msra.mxu0 %v4642
  %4674 = vmatprep.subr.bf16.mxu0 0
  %4675 = vmatpush2.bf16.msra.mxu0 0
  %4676 = vmatprep.subr.bf16.mxu0 0
  %4677 = vmatpush2.bf16.msra.mxu0 0
  %4678 = vmatprep.subr.bf16.mxu0 0
  %4679 = vmatpush2.bf16.msra.mxu0 0
  %4680 = vmatprep.subr.bf16.mxu0 0
  %4681 = vmatpush2.bf16.msra.mxu0 0
  %4682 = vmatprep.subr.bf16.mxu0 0
  %4683 = vmatpush2.bf16.msra.mxu0 0
  %4684 = vmatprep.subr.bf16.mxu0 0
  %4685 = vmatpush2.bf16.msra.mxu0 0
  %4686 = vmatprep.subr.bf16.mxu0 0
  %4687 = vmatpush2.bf16.msra.mxu0 0
  %4688 = vmatprep.subr.bf16.mxu0 0
  %4689 = vmatpush2.bf16.msra.mxu0 0
  %4690 = vmatprep.mubr.bf16.mxu0 0
  %4691 = vmatmul.mubr.bf16.gmra.mxu0 %v4602
  %v4692 = vpop.f32.mrf.mxu0
  %v4693 = vadd.f32 %v4608, %v4692
  %v4694 = vpop.f32.mrf.mxu0
  %v4695 = vpop.f32.mrf.mxu0
  %v4696 = vpop.f32.mrf.mxu0
  %4697 = vdwg.mxu0
  %v4698 = vmax.f32 %v4693, 0.0
  %v4699 = vld [vmem:[%s63] sm:$0xf]
  %v4700 = vld [vmem:[%s63 + $0x4] sm:$0xf]
  %v4701 = vld [vmem:[%s63 + $0x8] sm:$0xf]
  %v4702 = vld [vmem:[%s63 + $0xc] sm:$0xf]
  %v4703 = vld [vmem:[%s63 + $0x10] sm:$0xf]
  %v4704 = vld [vmem:[%s63 + $0x14] sm:$0xf]
  %v4705 = vld [vmem:[%s63 + $0x18] sm:$0xf]
  %v4706 = vld [vmem:[%s63 + $0x1c] sm:$0xf]
  %v4707 = vld [vmem:[%s63 + $0x20] sm:$0xf]
  %v4708 = vld [vmem:[%s63 + $0x24] sm:$0xf]
  %v4709 = vld [vmem:[%s63 + $0x28] sm:$0xf]
  %v4710 = vld [vmem:[%s63 + $0x2c] sm:$0xf]
  %v4711 = vld [vmem:[%s63 + $0x30] sm:$0xf]
  %v4712 = vld [vmem:[%s63 + $0x34] sm:$0xf]
  %v4713 = vld [vmem:[%s63 + $0x38] sm:$0xf]
  %v4714 = vld [vmem:[%s63 + $0x3c] sm:$0xf]
  %v4715 = vpack.c.bf16 %v4698, %v4698
  %v4716 = vld [vmem:[%s65] sm:$0x1]
  %v4718 = vlaneseq
  %v4719 = vshrl.u32 %v4718, 7
  %v4720 = vsub.s32 0, %v4719
  %v4721 = vrot.slane %v4716, %v4720
  %v4739 = vunpack.c.l.b16 %v4699
  %v4740 = vunpack.c.l.b16 %v4700
  %v4741 = vunpack.c.l.b16 %v4701
  %v4742 = vunpack.c.l.b16 %v4702
  %v4743 = vunpack.c.l.b16 %v4703
  %v4744 = vunpack.c.l.b16 %v4704
  %v4745 = vunpack.c.l.b16 %v4705
  %v4746 = vunpack.c.l.b16 %v4706
  %v4747 = vunpack.c.l.b16 %v4707
  %v4748 = vunpack.c.l.b16 %v4708
  %v4749 = vunpack.c.l.b16 %v4709
  %v4750 = vunpack.c.l.b16 %v4710
  %v4751 = vunpack.c.l.b16 %v4711
  %v4752 = vunpack.c.l.b16 %v4712
  %v4753 = vunpack.c.l.b16 %v4713
  %v4754 = vunpack.c.l.b16 %v4714
  %v4755 = vpack.c.b16 %v4740, %v4739
  %v4756 = vpack.c.b16 %v4742, %v4741
  %v4757 = vpack.c.b16 %v4744, %v4743
  %v4758 = vpack.c.b16 %v4746, %v4745
  %v4759 = vpack.c.b16 %v4748, %v4747
  %v4760 = vpack.c.b16 %v4750, %v4749
  %v4761 = vpack.c.b16 %v4752, %v4751
  %v4762 = vpack.c.b16 %v4754, %v4753
  %4771 = vmatprep.subr.bf16.mxu0 0
  %4772 = vmatpush1.bf16.msra.mxu0 %v4762
  %4773 = vmatprep.subr.bf16.mxu0 0
  %4774 = vmatpush1.bf16.msra.mxu0 %v4761
  %4775 = vmatprep.subr.bf16.mxu0 0
  %4776 = vmatpush1.bf16.msra.mxu0 %v4760
  %4777 = vmatprep.subr.bf16.mxu0 0
  %4778 = vmatpush1.bf16.msra.mxu0 %v4759
  %4779 = vmatprep.subr.bf16.mxu0 0
  %4780 = vmatpush1.bf16.msra.mxu0 %v4758
  %4781 = vmatprep.subr.bf16.mxu0 0
  %4782 = vmatpush1.bf16.msra.mxu0 %v4757
  %4783 = vmatprep.subr.bf16.mxu0 0
  %4784 = vmatpush1.bf16.msra.mxu0 %v4756
  %4785 = vmatprep.subr.bf16.mxu0 0
  %4786 = vmatpush1.bf16.msra.mxu0 %v4755
  %4787 = vmatprep.subr.bf16.mxu0 0
  %4788 = vmatpush2.bf16.msra.mxu0 0
  %4789 = vmatprep.subr.bf16.mxu0 0
  %4790 = vmatpush2.bf16.msra.mxu0 0
  %4791 = vmatprep.subr.bf16.mxu0 0
  %4792 = vmatpush2.bf16.msra.mxu0 0
  %4793 = vmatprep.subr.bf16.mxu0 0
  %4794 = vmatpush2.bf16.msra.mxu0 0
  %4795 = vmatprep.subr.bf16.mxu0 0
  %4796 = vmatpush2.bf16.msra.mxu0 0
  %4797 = vmatprep.subr.bf16.mxu0 0
  %4798 = vmatpush2.bf16.msra.mxu0 0
  %4799 = vmatprep.subr.bf16.mxu0 0
  %4800 = vmatpush2.bf16.msra.mxu0 0
  %4801 = vmatprep.subr.bf16.mxu0 0
  %4802 = vmatpush2.bf16.msra.mxu0 0
  %4803 = vmatprep.mubr.bf16.mxu0 0
  %4804 = vmatmul.mubr.bf16.gmra.mxu0 %v4715
  %v4805 = vpop.f32.mrf.mxu0
  %v4806 = vadd.f32 %v4721, %v4805
  %v4807 = vpop.f32.mrf.mxu0
  %v4808 = vpop.f32.mrf.mxu0
  %v4809 = vpop.f32.mrf.mxu0
  %4810 = vdwg.mxu0
  %v4811 = vmax.f32 %v4806, 0.0
  %4812 = vst [vmem:[%s67] sm:$0xff] %v4811
  // Predicated region
  $region134: #{gcn_gin_forward.1} parent=0 // pred_check
    _
  $region135: #{gcn_gin_forward.1} parent=0 // pred_check_branch
    %4814 = sbr.rel (0) target = $region137
  $region136: #{gcn_gin_forward.1} parent=0 // pred_region
    _
  $region137: #{gcn_gin_forward.1} parent=0 // pred_fallthru
    _
  // Predicated region
  $region138: #{gcn_gin_forward.1} parent=0 // pred_check
    _
  $region139: #{gcn_gin_forward.1} parent=0 // pred_check_branch
    %4816 = sbr.rel (0) target = $region141
  $region140: #{gcn_gin_forward.1} parent=0 // pred_region
    _
  $region141: #{gcn_gin_forward.1} parent=0 // pred_fallthru
    _

</llo_original>
